<compile_context>
chip_gen: v6e
topology: v6e:2x2x1
jax: 0.10.0
libtpu: 0.0.40
codegen_flags: <defaults>
</compile_context>

<pallas_src>
import functools

import jax
import jax.numpy as jnp
from jax.experimental import pallas as pl
from jax.experimental.pallas import tpu as pltpu

STATE_DIM = 16
ACTION_DIM = 4
HIDDEN = 512
HEAD_PAD = 128          # lane-dense padded width of the fused actor+critic head
DEFAULT_TILE_B = 256    # MXU row tile on v6e/v7x; use 128 on v5e
BATCH = 512             # demo batch (amortizes the weight DMA; grid of 2 tiles)


def _round_up(x, m):
    return (x + m - 1) // m * m


def _ppo_forward_kernel(x_ref, w1_ref, w2a_ref, w2c_ref, w3_ref, bias_ref, out_ref):
    """One (TB, STATE_DIM) batch tile of the fused actor+critic MLP forward.

    x_ref   : (TB, STATE_DIM)        f32   batch tile (pipelined per grid step)
    w1_ref  : (STATE_DIM, 2*HIDDEN)  bf16  [actor_w1 | critic_w1]      (VMEM-resident)
    w2a_ref : (HIDDEN, HIDDEN)       bf16  actor layer-2               (VMEM-resident)
    w2c_ref : (HIDDEN, HIDDEN)       bf16  critic layer-2              (VMEM-resident)
    w3_ref  : (2*HIDDEN, HEAD_PAD)   bf16  block-diag [actor_w3 ; critic_w3], lane-padded
    bias_ref: (8, 2*HIDDEN)          f32   row0=[a_b1|c_b1] row1=[a_b2|c_b2] row2=head bias
    out_ref : (TB, HEAD_PAD)         f32   lanes [0:A) = sigmoid(actor logits), lane A = value
    """
    x = x_ref[...].astype(jnp.bfloat16)                     # (TB, S) bf16 MXU path

    b1 = bias_ref[0:1, :]                                   # (1, 1024)
    b2a = bias_ref[1:2, 0:HIDDEN]                           # (1, 512)
    b2c = bias_ref[1:2, HIDDEN:2 * HIDDEN]                  # (1, 512)
    b3 = bias_ref[2:3, 0:HEAD_PAD]                          # (1, 128)

    # ---- layer 1: both heads in a single MXU pass on the shared LHS, f32 accumulate ----
    h1 = jnp.tanh(jnp.dot(x, w1_ref[...], preferred_element_type=jnp.float32) + b1)
    h1a = h1[:, 0:HIDDEN].astype(jnp.bfloat16)
    h1c = h1[:, HIDDEN:2 * HIDDEN].astype(jnp.bfloat16)

    # ---- layer 2: bf16 weights/activations, f32 accumulate, tanh in f32 ----
    h2a = jnp.tanh(
        jnp.dot(h1a, w2a_ref[...], preferred_element_type=jnp.float32) + b2a)
    h2c = jnp.tanh(
        jnp.dot(h1c, w2c_ref[...], preferred_element_type=jnp.float32) + b2c)

    # ---- fused output head: two sliced (TB,512)x(512,128) matmuls summed (no concat
    #      copy), still a single lane-dense (TB, 128) result -> one unmasked store ----
    z = (jnp.dot(h2a.astype(jnp.bfloat16), w3_ref[0:HIDDEN, :],
                 preferred_element_type=jnp.float32)
         + jnp.dot(h2c.astype(jnp.bfloat16), w3_ref[HIDDEN:2 * HIDDEN, :],
                   preferred_element_type=jnp.float32)
         + b3)

    # sigmoid only on the actor lanes [0, ACTION_DIM); critic lane stays linear.
    lane = jax.lax.broadcasted_iota(jnp.int32, z.shape, 1)
    out_ref[...] = jnp.where(lane < ACTION_DIM, jax.nn.sigmoid(z), z).astype(out_ref.dtype)


@functools.partial(jax.jit, static_argnames=("tile_batch",))
def ppo_rocket_agent_forward(state, kp, *, tile_batch=DEFAULT_TILE_B):
    """state: (B, STATE_DIM) f32.  kp: packed kernel params (see pack_kernel_params).

    Returns (actor (B, ACTION_DIM), critic (B, 1)).
    """
    B = state.shape[0]
    # batch tile: multiple of 16 (bf16 sublane packing), capped at tile_batch (MXU rows)
    TB = min(tile_batch, _round_up(max(B, 1), 16))
    B_pad = _round_up(B, TB)
    x = state if B_pad == B else jnp.pad(state, ((0, B_pad - B), (0, 0)))

    const2d = lambda i: (0, 0)   # weights/biases: DMA'd once, VMEM-resident across tiles

    flops = 2 * B_pad * (STATE_DIM * 2 * HIDDEN + 2 * HIDDEN * HIDDEN
                         + 2 * HIDDEN * HEAD_PAD)
    transcendentals = B_pad * (4 * HIDDEN + HEAD_PAD)
    bytes_accessed = (
        x.size * 4
        + kp["w1"].size * 2 + kp["w2a"].size * 2 + kp["w2c"].size * 2 + kp["w3"].size * 2
        + kp["bias"].size * 4
        + B_pad * HEAD_PAD * 4)

    out = pl.pallas_call(
        _ppo_forward_kernel,
        out_shape=jax.ShapeDtypeStruct((B_pad, HEAD_PAD), jnp.float32),
        grid=(B_pad // TB,),
        in_specs=[
            pl.BlockSpec((TB, STATE_DIM), lambda i: (i, 0)),        # pipelined batch tile
            pl.BlockSpec((STATE_DIM, 2 * HIDDEN), const2d),         # w1   (resident)
            pl.BlockSpec((HIDDEN, HIDDEN), const2d),                # w2a  (resident)
            pl.BlockSpec((HIDDEN, HIDDEN), const2d),                # w2c  (resident)
            pl.BlockSpec((2 * HIDDEN, HEAD_PAD), const2d),          # w3   (resident)
            pl.BlockSpec((8, 2 * HIDDEN), const2d),                 # bias (resident)
        ],
        out_specs=pl.BlockSpec((TB, HEAD_PAD), lambda i: (i, 0)),
        compiler_params=pltpu.CompilerParams(
            dimension_semantics=("parallel",)),                     # 2 TCs on v7x
        cost_estimate=pl.CostEstimate(
            flops=flops, transcendentals=transcendentals, bytes_accessed=bytes_accessed),
    )(x, kp["w1"], kp["w2a"], kp["w2c"], kp["w3"], kp["bias"])

    actor = out[:B, :ACTION_DIM]
    critic = out[:B, ACTION_DIM:ACTION_DIM + 1]
    return actor, critic


def init_params(key, state_dim, action_dim, hidden=HIDDEN):
    """Deterministic init mimicking nn.Linear default (uniform +/- 1/sqrt(fan_in)).

    Module-level (f32) parameters: weights as (in_features, out_features),
    biases as (1, out_features).
    """
    def linear(key, fan_in, fan_out):
        kw, kb = jax.random.split(key)
        bound = 1.0 / jnp.sqrt(fan_in)
        w = jax.random.uniform(kw, (fan_in, fan_out), jnp.float32, -bound, bound)
        b = jax.random.uniform(kb, (1, fan_out), jnp.float32, -bound, bound)
        return w, b

    keys = jax.random.split(key, 6)
    a_w1, a_b1 = linear(keys[0], state_dim, hidden)
    a_w2, a_b2 = linear(keys[1], hidden, hidden)
    a_w3, a_b3 = linear(keys[2], hidden, action_dim)
    c_w1, c_b1 = linear(keys[3], state_dim, hidden)
    c_w2, c_b2 = linear(keys[4], hidden, hidden)
    c_w3, c_b3 = linear(keys[5], hidden, 1)

    return {
        "a_w1": a_w1, "a_b1": a_b1,
        "a_w2": a_w2, "a_b2": a_b2,
        "a_w3": a_w3, "a_b3": a_b3,
        "c_w1": c_w1, "c_b1": c_b1,
        "c_w2": c_w2, "c_b2": c_b2,
        "c_w3": c_w3, "c_b3": c_b3,
        # parameter exists for module parity; unused in forward()
        "log_std": jnp.ones((action_dim,), jnp.float32) * 0.1,
    }


def pack_kernel_params(p):
    """One-time fusion / quantization of module params into the kernel operand layout."""
    # fused layer-1 weight: [actor | critic] along the output axis, bf16 MXU path
    w1 = jnp.concatenate([p["a_w1"], p["c_w1"]], axis=1).astype(jnp.bfloat16)  # (S, 1024)

    # layer-2 weights: the HBM-dominant 512x512 blocks, stored bf16
    w2a = p["a_w2"].astype(jnp.bfloat16)
    w2c = p["c_w2"].astype(jnp.bfloat16)

    # block-diagonal, lane-padded fused head: rows [0,512) carry actor_w3 into lanes
    # [0, A); rows [512,1024) carry critic_w3 into lane A; everything else zero.
    # Output lanes > ACTION_DIM are sliced away in the wrapper, so padding must stay zero.
    w3 = jnp.zeros((2 * HIDDEN, HEAD_PAD), jnp.float32)
    w3 = w3.at[:HIDDEN, :ACTION_DIM].set(p["a_w3"])
    w3 = w3.at[HIDDEN:, ACTION_DIM:ACTION_DIM + 1].set(p["c_w3"])
    w3 = w3.astype(jnp.bfloat16)

    # all biases packed into a single sublane-aligned (8, 1024) f32 buffer
    bias = jnp.zeros((8, 2 * HIDDEN), jnp.float32)
    bias = bias.at[0, :HIDDEN].set(p["a_b1"][0])
    bias = bias.at[0, HIDDEN:].set(p["c_b1"][0])
    bias = bias.at[1, :HIDDEN].set(p["a_b2"][0])
    bias = bias.at[1, HIDDEN:].set(p["c_b2"][0])
    bias = bias.at[2, :ACTION_DIM].set(p["a_b3"][0])
    bias = bias.at[2, ACTION_DIM].set(p["c_b3"][0, 0])

    return {"w1": w1, "w2a": w2a, "w2c": w2c, "w3": w3, "bias": bias}


def _reference_forward(state, p):
    """Plain-JAX f32 reference with the original module semantics."""
    h = jnp.tanh(state @ p["a_w1"] + p["a_b1"])
    h = jnp.tanh(h @ p["a_w2"] + p["a_b2"])
    actor = jax.nn.sigmoid(h @ p["a_w3"] + p["a_b3"])
    c = jnp.tanh(state @ p["c_w1"] + p["c_b1"])
    c = jnp.tanh(c @ p["c_w2"] + p["c_b2"])
    critic = c @ p["c_w3"] + p["c_b3"]
    return actor, critic


if __name__ == "__main__":
    key = jax.random.PRNGKey(0)
    k_params, k_state = jax.random.split(key)

    params = init_params(k_params, STATE_DIM, ACTION_DIM)
    kparams = pack_kernel_params(params)
    state = jax.random.normal(k_state, (BATCH, STATE_DIM), jnp.float32)

    actor, critic = ppo_rocket_agent_forward(state, kparams)
    actor = jax.block_until_ready(actor)
    critic = jax.block_until_ready(critic)

    # correctness check against plain-JAX f32 reference (bf16 weights -> relaxed tol;
    # observed deviation is O(1e-3), well inside 3e-2).
    actor_ref, critic_ref = _reference_forward(state, params)
    assert actor.shape == (BATCH, ACTION_DIM)
    assert critic.shape == (BATCH, 1)
    assert jnp.allclose(actor, actor_ref, atol=3e-2, rtol=3e-2)
    assert jnp.allclose(critic, critic_ref, atol=3e-2, rtol=3e-2)

    # also exercise a non-tile-aligned batch (padding path inside the wrapper)
    small = state[:40]
    a2, c2 = ppo_rocket_agent_forward(small, kparams)
    a2 = jax.block_until_ready(a2)
    a2_ref, c2_ref = _reference_forward(small, params)
    assert a2.shape == (40, ACTION_DIM) and c2.shape == (40, 1)
    assert jnp.allclose(a2, a2_ref, atol=3e-2, rtol=3e-2)
    assert jnp.allclose(c2, c2_ref, atol=3e-2, rtol=3e-2)

    print("KERNEL_OK")
</pallas_src>

<mosaic_0001>
module attributes {stable_mosaic.version = 11 : i64} {
  func.func @_ppo_forward_kernel(%arg0: i32, %arg1: memref<256x16xf32, #tpu.memory_space<vmem>>, %arg2: memref<16x1024xbf16, #tpu.memory_space<vmem>>, %arg3: memref<512x512xbf16, #tpu.memory_space<vmem>>, %arg4: memref<512x512xbf16, #tpu.memory_space<vmem>>, %arg5: memref<1024x128xbf16, #tpu.memory_space<vmem>>, %arg6: memref<8x1024xf32, #tpu.memory_space<vmem>>, %arg7: memref<256x128xf32, #tpu.memory_space<vmem>>) attributes {dimension_semantics = [#tpu.dimension_semantics<parallel>], iteration_bounds = array<i64: 2>, scalar_prefetch = 0 : i64, scratch_operands = 0 : i64, tpu.core_type = #tpu.core_type<tc>, window_params = [{transform_indices = @transform_0, window_bounds = array<i64: 256, 16>}, {pipeline_mode = #tpu.pipeline_mode<synchronous>, transform_indices = @transform_1, window_bounds = array<i64: 16, 1024>}, {pipeline_mode = #tpu.pipeline_mode<synchronous>, transform_indices = @transform_2, window_bounds = array<i64: 512, 512>}, {pipeline_mode = #tpu.pipeline_mode<synchronous>, transform_indices = @transform_3, window_bounds = array<i64: 512, 512>}, {pipeline_mode = #tpu.pipeline_mode<synchronous>, transform_indices = @transform_4, window_bounds = array<i64: 1024, 128>}, {pipeline_mode = #tpu.pipeline_mode<synchronous>, transform_indices = @transform_5, window_bounds = array<i64: 8, 1024>}, {transform_indices = @transform_6, window_bounds = array<i64: 256, 128>}]} {
    %c0 = arith.constant 0 : index
    %c0_0 = arith.constant 0 : index
    %0 = vector.load %arg1[%c0, %c0_0] : memref<256x16xf32, #tpu.memory_space<vmem>>, vector<256x16xf32>
    %1 = arith.truncf %0 : vector<256x16xf32> to vector<256x16xbf16>
    %c0_1 = arith.constant 0 : index
    %c0_2 = arith.constant 0 : index
    %2 = vector.load %arg6[%c0_1, %c0_2] : memref<8x1024xf32, #tpu.memory_space<vmem>>, vector<1x1024xf32>
    %c1 = arith.constant 1 : index
    %c0_3 = arith.constant 0 : index
    %3 = vector.load %arg6[%c1, %c0_3] : memref<8x1024xf32, #tpu.memory_space<vmem>>, vector<1x512xf32>
    %c1_4 = arith.constant 1 : index
    %c512 = arith.constant 512 : index
    %4 = vector.load %arg6[%c1_4, %c512] : memref<8x1024xf32, #tpu.memory_space<vmem>>, vector<1x512xf32>
    %c2 = arith.constant 2 : index
    %c0_5 = arith.constant 0 : index
    %5 = vector.load %arg6[%c2, %c0_5] : memref<8x1024xf32, #tpu.memory_space<vmem>>, vector<1x128xf32>
    %c0_6 = arith.constant 0 : index
    %c0_7 = arith.constant 0 : index
    %6 = vector.load %arg2[%c0_6, %c0_7] : memref<16x1024xbf16, #tpu.memory_space<vmem>>, vector<16x1024xbf16>
    %cst = arith.constant dense<0.000000e+00> : vector<256x1024xf32>
    %7 = tpu.matmul %1, %6, %cst {dimension_numbers = #tpu.dot_dimension_numbers<[1], [0], [0], [1], [0, 0, 1, 1], [], []>} : vector<256x16xbf16>, vector<16x1024xbf16>, vector<256x1024xf32> -> vector<256x1024xf32>
    %8 = vector.broadcast %2 : vector<1x1024xf32> to vector<256x1024xf32>
    %9 = arith.addf %7, %8 : vector<256x1024xf32>
    %10 = math.tanh %9 : vector<256x1024xf32>
    %11 = vector.extract_strided_slice %10 {offsets = [0, 0], sizes = [256, 512], strides = [1, 1]} : vector<256x1024xf32> to vector<256x512xf32>
    %12 = arith.truncf %11 : vector<256x512xf32> to vector<256x512xbf16>
    %13 = vector.extract_strided_slice %10 {offsets = [0, 512], sizes = [256, 512], strides = [1, 1]} : vector<256x1024xf32> to vector<256x512xf32>
    %14 = arith.truncf %13 : vector<256x512xf32> to vector<256x512xbf16>
    %c0_8 = arith.constant 0 : index
    %c0_9 = arith.constant 0 : index
    %15 = vector.load %arg3[%c0_8, %c0_9] : memref<512x512xbf16, #tpu.memory_space<vmem>>, vector<512x512xbf16>
    %cst_10 = arith.constant dense<0.000000e+00> : vector<256x512xf32>
    %16 = tpu.matmul %12, %15, %cst_10 {dimension_numbers = #tpu.dot_dimension_numbers<[1], [0], [0], [1], [0, 0, 1, 1], [], []>} : vector<256x512xbf16>, vector<512x512xbf16>, vector<256x512xf32> -> vector<256x512xf32>
    %17 = vector.broadcast %3 : vector<1x512xf32> to vector<256x512xf32>
    %18 = arith.addf %16, %17 : vector<256x512xf32>
    %19 = math.tanh %18 : vector<256x512xf32>
    %c0_11 = arith.constant 0 : index
    %c0_12 = arith.constant 0 : index
    %20 = vector.load %arg4[%c0_11, %c0_12] : memref<512x512xbf16, #tpu.memory_space<vmem>>, vector<512x512xbf16>
    %cst_13 = arith.constant dense<0.000000e+00> : vector<256x512xf32>
    %21 = tpu.matmul %14, %20, %cst_13 {dimension_numbers = #tpu.dot_dimension_numbers<[1], [0], [0], [1], [0, 0, 1, 1], [], []>} : vector<256x512xbf16>, vector<512x512xbf16>, vector<256x512xf32> -> vector<256x512xf32>
    %22 = vector.broadcast %4 : vector<1x512xf32> to vector<256x512xf32>
    %23 = arith.addf %21, %22 : vector<256x512xf32>
    %24 = math.tanh %23 : vector<256x512xf32>
    %25 = arith.truncf %19 : vector<256x512xf32> to vector<256x512xbf16>
    %c0_14 = arith.constant 0 : index
    %c0_15 = arith.constant 0 : index
    %26 = vector.load %arg5[%c0_14, %c0_15] : memref<1024x128xbf16, #tpu.memory_space<vmem>>, vector<512x128xbf16>
    %cst_16 = arith.constant dense<0.000000e+00> : vector<256x128xf32>
    %27 = tpu.matmul %25, %26, %cst_16 {dimension_numbers = #tpu.dot_dimension_numbers<[1], [0], [0], [1], [0, 0, 1, 1], [], []>} : vector<256x512xbf16>, vector<512x128xbf16>, vector<256x128xf32> -> vector<256x128xf32>
    %28 = arith.truncf %24 : vector<256x512xf32> to vector<256x512xbf16>
    %c512_17 = arith.constant 512 : index
    %c0_18 = arith.constant 0 : index
    %29 = vector.load %arg5[%c512_17, %c0_18] : memref<1024x128xbf16, #tpu.memory_space<vmem>>, vector<512x128xbf16>
    %cst_19 = arith.constant dense<0.000000e+00> : vector<256x128xf32>
    %30 = tpu.matmul %28, %29, %cst_19 {dimension_numbers = #tpu.dot_dimension_numbers<[1], [0], [0], [1], [0, 0, 1, 1], [], []>} : vector<256x512xbf16>, vector<512x128xbf16>, vector<256x128xf32> -> vector<256x128xf32>
    %31 = arith.addf %27, %30 : vector<256x128xf32>
    %32 = vector.broadcast %5 : vector<1x128xf32> to vector<256x128xf32>
    %33 = arith.addf %31, %32 : vector<256x128xf32>
    %34 = tpu.iota {dimensions = array<i32: 1>} : vector<256x128xi32>
    %c4_i32 = arith.constant 4 : i32
    %35 = vector.broadcast %c4_i32 : i32 to vector<256x128xi32>
    %36 = arith.cmpi slt, %34, %35 : vector<256x128xi32>
    %37 = arith.negf %33 : vector<256x128xf32>
    %38 = math.exp %37 : vector<256x128xf32>
    %cst_20 = arith.constant 1.000000e+00 : f32
    %39 = vector.broadcast %cst_20 : f32 to vector<256x128xf32>
    %40 = arith.addf %39, %38 : vector<256x128xf32>
    %41 = arith.divf %39, %40 : vector<256x128xf32>
    %42 = arith.select %36, %41, %33 : vector<256x128xi1>, vector<256x128xf32>
    %c0_21 = arith.constant 0 : index
    %c0_22 = arith.constant 0 : index
    %43 = vector.load %arg7[%c0_21, %c0_22] : memref<256x128xf32, #tpu.memory_space<vmem>>, vector<256x128xf32>
    tpu.vector_store %arg7[%c0_21, %c0_22], %42 {strides = array<i32>} : memref<256x128xf32, #tpu.memory_space<vmem>>, vector<256x128xf32>,
    return
  }
  func.func @transform_0(%arg0: i32) -> (i32, i32) {
    %c0_i32 = arith.constant 0 : i32
    %c0_i32_0 = arith.constant 0 : i32
    return %arg0, %c0_i32 : i32, i32
  }
  func.func @transform_1(%arg0: i32) -> (i32, i32) {
    %c0_i32 = arith.constant 0 : i32
    %c0_i32_0 = arith.constant 0 : i32
    %c0_i32_1 = arith.constant 0 : i32
    return %c0_i32, %c0_i32_0 : i32, i32
  }
  func.func @transform_2(%arg0: i32) -> (i32, i32) {
    %c0_i32 = arith.constant 0 : i32
    %c0_i32_0 = arith.constant 0 : i32
    %c0_i32_1 = arith.constant 0 : i32
    return %c0_i32, %c0_i32_0 : i32, i32
  }
  func.func @transform_3(%arg0: i32) -> (i32, i32) {
    %c0_i32 = arith.constant 0 : i32
    %c0_i32_0 = arith.constant 0 : i32
    %c0_i32_1 = arith.constant 0 : i32
    return %c0_i32, %c0_i32_0 : i32, i32
  }
  func.func @transform_4(%arg0: i32) -> (i32, i32) {
    %c0_i32 = arith.constant 0 : i32
    %c0_i32_0 = arith.constant 0 : i32
    %c0_i32_1 = arith.constant 0 : i32
    return %c0_i32, %c0_i32_0 : i32, i32
  }
  func.func @transform_5(%arg0: i32) -> (i32, i32) {
    %c0_i32 = arith.constant 0 : i32
    %c0_i32_0 = arith.constant 0 : i32
    %c0_i32_1 = arith.constant 0 : i32
    return %c0_i32, %c0_i32_0 : i32, i32
  }
  func.func @transform_6(%arg0: i32) -> (i32, i32) {
    %c0_i32 = arith.constant 0 : i32
    %c0_i32_0 = arith.constant 0 : i32
    return %arg0, %c0_i32 : i32, i32
  }
}

</mosaic_0001>

<llo_original>
// kernel: ppo_rocket_agent_forward.1
$region0: #{ppo_rocket_agent_forward.1}
  #allocation0 [shape = 'u32[]', space=smem, size = 0x4, offset = 0x4, fixed_abs, tag = 'smem constant byte address 0x4 - core index']
  #allocation1 [shape = 'u32[144,128]{1,0:T(1,128)}', space=vmem, size = 0x12000, scoped, tag = 'internal scratch']
  %s0 = inlined_call_operand.vmem [shape: f32[512,16], index: 0, kind: input, shape index: {}]
  %s1 = inlined_call_operand.vmem [shape: bf16[16,1024], index: 1, kind: input, shape index: {}]
  %s2 = inlined_call_operand.hbm [shape: bf16[512,512], index: 2, kind: input, shape index: {}]
  %s3 = inlined_call_operand.hbm [shape: bf16[512,512], index: 3, kind: input, shape index: {}]
  %s4 = inlined_call_operand.vmem [shape: bf16[1024,128], index: 4, kind: input, shape index: {}]
  %s5 = inlined_call_operand.hbm [shape: f32[8,1024], index: 5, kind: input, shape index: {}]
  %s6 = inlined_call_operand.vmem [shape: f32[512,128], index: 6, kind: output, shape index: {}]
  %s7 = sld [smem:[#allocation0]]
  $region69: #{ppo_rocket_agent_forward.1} parent=0
    _
  %s9 = ssub.s32 1, %s7
  %s10 = scalar_select 0, %s9, %s7
  $region1: #{ppo_rocket_agent_forward.1} parent=0
    #allocation2 [shape = 'u8[524288]{0}', space=vmem, size = 0x80000, scoped, tag = 'input window, operand 2, single buffered']
    #allocation3 [shape = 's32[2]{0}', space=sflag, size = 0x8, scoped, tag = 'scoped memory for ppo_rocket_agent_forward.1']
    #allocation4 [shape = 'u8[524288]{0}', space=vmem, size = 0x80000, scoped, tag = 'input window, operand 3, single buffered']
    #allocation5 [shape = 's32[1]{0}', space=sflag, size = 0x4, scoped, tag = 'scoped memory for ppo_rocket_agent_forward.1']
    #allocation6 [shape = 'u8[32768]{0}', space=vmem, size = 0x8000, scoped, tag = 'input window, operand 5, single buffered']
    %11 = vsyncpa [#allocation3], 0
    %12 = vsyncpa [#allocation5], 0
    loop: start=0, step=1, limit=4
    $region2: #{ppo_rocket_agent_forward.1} parent=1 // loop_pre_header
      _
    $region3: #{ppo_rocket_agent_forward.1} parent=1 // loop_header
      %s14 = sphi 0, %s18
      %p15 = scmp.ge.s32.totalorder %s14, 4
      %s24 = sphi 0, %s26
      %s27 = sphi 0, %s24
      %s28 = sphi 0, %s27
      %s44 = sphi 0, %s28
      %s48 = sphi 0, %s48
      %s50 = sphi 0, %s48
      %s51 = sphi 0, %s50
      %s65 = sphi 0, %s51
      %s69 = sphi 0, %s69
      %s71 = sphi 0, %s69
      %s72 = sphi 0, %s71
      %s86 = sphi 0, %s72
      %s90 = sphi 0, %s90
      %s92 = sphi 0, %s90
      %s93 = sphi 0, %s92
      %s107 = sphi 0, %s93
      %s111 = sphi 0, %s111
      %s113 = sphi 0, %s111
      %s114 = sphi 0, %s113
      %s128 = sphi 0, %s114
      %s132 = sphi 0, %s132
      %s134 = sphi 0, %s132
      %s135 = sphi 0, %s134
      %s149 = sphi 0, %s135
      %s155 = sphi 0, %s157
      %s158 = sphi 0, %s155
      %s159 = sphi 0, %s158
      %s175 = sphi 0, %s159
    $region4: #{ppo_rocket_agent_forward.1} parent=1 // loop_header_branch
      %17 = sbr.rel (%p15) target = $region8
    $region5: #{ppo_rocket_agent_forward.1} parent=1 // loop_body
      %s19 = ssub.s32 %s14, 1
      %s20 = ssub.s32 %s14, 2
      %s21 = sadd.s32 %s14, 1
      %s22 = ssub.s32 %s14, %s21
      %p23 = scmp.eq.s32.totalorder %s22, 0
      %s25 = sadd.s32 %s24, 1
      %s26 = scalar_select %p23, %s24, %s25
      %p29 = pneg %p23
      %p30 = scmp.eq.s32.totalorder %s14, 1
      %p31 = por %p29, %p30
      %p32 = scmp.ne.s32.totalorder %s24, %s27
      %p33 = scmp.eq.s32.totalorder %s14, 0
      %p34 = por %p32, %p33
      %p35 = scmp.ne.s32.totalorder %s24, %s27
      %p36 = scmp.eq.s32.totalorder %s19, 1
      %p37 = por %p35, %p36
      %p38 = scmp.ne.s32.totalorder %s27, %s28
      %p39 = scmp.eq.s32.totalorder %s19, 0
      %p40 = por %p38, %p39
      %p41 = scmp.ne.s32.totalorder %s27, %s28
      %p42 = scmp.eq.s32.totalorder %s20, 1
      %p43 = por %p41, %p42
      %p45 = scmp.ne.s32.totalorder %s28, %s44
      %p46 = scmp.eq.s32.totalorder %s20, 0
      %p47 = por %p45, %p46
      %s49 = sadd.s32 %s48, 1
      %p52 = scmp.eq.s32.totalorder %s14, 1
      %p53 = scmp.ne.s32.totalorder %s48, %s50
      %p54 = scmp.eq.s32.totalorder %s14, 0
      %p55 = por %p53, %p54
      %p56 = scmp.ne.s32.totalorder %s48, %s50
      %p57 = scmp.eq.s32.totalorder %s19, 1
      %p58 = por %p56, %p57
      %p59 = scmp.ne.s32.totalorder %s50, %s51
      %p60 = scmp.eq.s32.totalorder %s19, 0
      %p61 = por %p59, %p60
      %p62 = scmp.ne.s32.totalorder %s50, %s51
      %p63 = scmp.eq.s32.totalorder %s20, 1
      %p64 = por %p62, %p63
      %p66 = scmp.ne.s32.totalorder %s51, %s65
      %p67 = scmp.eq.s32.totalorder %s20, 0
      %p68 = por %p66, %p67
      %s70 = sadd.s32 %s69, 1
      %p73 = scmp.eq.s32.totalorder %s14, 1
      %p74 = scmp.ne.s32.totalorder %s69, %s71
      %p75 = scmp.eq.s32.totalorder %s14, 0
      %p76 = por %p74, %p75
      %p77 = scmp.ne.s32.totalorder %s69, %s71
      %p78 = scmp.eq.s32.totalorder %s19, 1
      %p79 = por %p77, %p78
      %p80 = scmp.ne.s32.totalorder %s71, %s72
      %p81 = scmp.eq.s32.totalorder %s19, 0
      %p82 = por %p80, %p81
      %p83 = scmp.ne.s32.totalorder %s71, %s72
      %p84 = scmp.eq.s32.totalorder %s20, 1
      %p85 = por %p83, %p84
      %p87 = scmp.ne.s32.totalorder %s72, %s86
      %p88 = scmp.eq.s32.totalorder %s20, 0
      %p89 = por %p87, %p88
      %s91 = sadd.s32 %s90, 1
      %p94 = scmp.eq.s32.totalorder %s14, 1
      %p95 = scmp.ne.s32.totalorder %s90, %s92
      %p96 = scmp.eq.s32.totalorder %s14, 0
      %p97 = por %p95, %p96
      %p98 = scmp.ne.s32.totalorder %s90, %s92
      %p99 = scmp.eq.s32.totalorder %s19, 1
      %p100 = por %p98, %p99
      %p101 = scmp.ne.s32.totalorder %s92, %s93
      %p102 = scmp.eq.s32.totalorder %s19, 0
      %p103 = por %p101, %p102
      %p104 = scmp.ne.s32.totalorder %s92, %s93
      %p105 = scmp.eq.s32.totalorder %s20, 1
      %p106 = por %p104, %p105
      %p108 = scmp.ne.s32.totalorder %s93, %s107
      %p109 = scmp.eq.s32.totalorder %s20, 0
      %p110 = por %p108, %p109
      %s112 = sadd.s32 %s111, 1
      %p115 = scmp.eq.s32.totalorder %s14, 1
      %p116 = scmp.ne.s32.totalorder %s111, %s113
      %p117 = scmp.eq.s32.totalorder %s14, 0
      %p118 = por %p116, %p117
      %p119 = scmp.ne.s32.totalorder %s111, %s113
      %p120 = scmp.eq.s32.totalorder %s19, 1
      %p121 = por %p119, %p120
      %p122 = scmp.ne.s32.totalorder %s113, %s114
      %p123 = scmp.eq.s32.totalorder %s19, 0
      %p124 = por %p122, %p123
      %p125 = scmp.ne.s32.totalorder %s113, %s114
      %p126 = scmp.eq.s32.totalorder %s20, 1
      %p127 = por %p125, %p126
      %p129 = scmp.ne.s32.totalorder %s114, %s128
      %p130 = scmp.eq.s32.totalorder %s20, 0
      %p131 = por %p129, %p130
      %s133 = sadd.s32 %s132, 1
      %p136 = scmp.eq.s32.totalorder %s14, 1
      %p137 = scmp.ne.s32.totalorder %s132, %s134
      %p138 = scmp.eq.s32.totalorder %s14, 0
      %p139 = por %p137, %p138
      %p140 = scmp.ne.s32.totalorder %s132, %s134
      %p141 = scmp.eq.s32.totalorder %s19, 1
      %p142 = por %p140, %p141
      %p143 = scmp.ne.s32.totalorder %s134, %s135
      %p144 = scmp.eq.s32.totalorder %s19, 0
      %p145 = por %p143, %p144
      %p146 = scmp.ne.s32.totalorder %s134, %s135
      %p147 = scmp.eq.s32.totalorder %s20, 1
      %p148 = por %p146, %p147
      %p150 = scmp.ne.s32.totalorder %s135, %s149
      %p151 = scmp.eq.s32.totalorder %s20, 0
      %p152 = por %p150, %p151
      %s153 = ssub.s32 %s14, %s21
      %p154 = scmp.eq.s32.totalorder %s153, 0
      %s156 = sadd.s32 %s155, 1
      %s157 = scalar_select %p154, %s155, %s156
      %p160 = pneg %p154
      %p161 = scmp.eq.s32.totalorder %s14, 1
      %p162 = por %p160, %p161
      %p163 = scmp.ne.s32.totalorder %s155, %s158
      %p164 = scmp.eq.s32.totalorder %s14, 0
      %p165 = por %p163, %p164
      %p166 = scmp.ne.s32.totalorder %s155, %s158
      %p167 = scmp.eq.s32.totalorder %s19, 1
      %p168 = por %p166, %p167
      %p169 = scmp.ne.s32.totalorder %s158, %s159
      %p170 = scmp.eq.s32.totalorder %s19, 0
      %p171 = por %p169, %p170
      %p172 = scmp.ne.s32.totalorder %s158, %s159
      %p173 = scmp.eq.s32.totalorder %s20, 1
      %p174 = por %p172, %p173
      %p176 = scmp.ne.s32.totalorder %s159, %s175
      %p177 = scmp.eq.s32.totalorder %s20, 0
      %p178 = por %p176, %p177
      %p179 = scmp.le.s32.totalorder 1, %s14
      %p180 = scmp.lt.s32.totalorder %s14, 3
      %p181 = pnand %p179, %p180
      %p182 = pneg %p181
      // Predicated region
      $region9: #{ppo_rocket_agent_forward.1} parent=5 // pred_check
        _
      $region10: #{ppo_rocket_agent_forward.1} parent=5 // pred_check_branch
        %184 = sbr.rel (%p181) target = $region12
      $region11: #{ppo_rocket_agent_forward.1} parent=5 // pred_region
        %s185 = ssub.s32 %s14, 1
        // Predicated region
        $region13: #{ppo_rocket_agent_forward.1} parent=11 // pred_check
          %p186 = pneg %p61
        $region14: #{ppo_rocket_agent_forward.1} parent=11 // pred_check_branch
          %188 = sbr.rel (%p186) target = $region16
        $region15: #{ppo_rocket_agent_forward.1} parent=11 // pred_region
          _
        $region16: #{ppo_rocket_agent_forward.1} parent=11 // pred_fallthru
          _
        // Predicated region
        $region17: #{ppo_rocket_agent_forward.1} parent=11 // pred_check
          %p189 = pneg %p82
        $region18: #{ppo_rocket_agent_forward.1} parent=11 // pred_check_branch
          %191 = sbr.rel (%p189) target = $region20
        $region19: #{ppo_rocket_agent_forward.1} parent=11 // pred_region
          %s193 = ssub.s32 16384, 16384
          %194 = vsyncadd [#allocation3], %s193
          %s195 = sshll.u32 [#allocation2], 4
          %s196 = int_to_ptr.vmem [resolvable:$true] %s195
          %201 = dma.hbm_to_vmem [thread:$0]  %s2, 16384, %s196, [#allocation3], 256, 256, 16
        $region20: #{ppo_rocket_agent_forward.1} parent=11 // pred_fallthru
          _
        // Predicated region
        $region21: #{ppo_rocket_agent_forward.1} parent=11 // pred_check
          %p202 = pneg %p103
        $region22: #{ppo_rocket_agent_forward.1} parent=11 // pred_check_branch
          %204 = sbr.rel (%p202) target = $region24
        $region23: #{ppo_rocket_agent_forward.1} parent=11 // pred_region
          %s206 = ssub.s32 16384, 16384
          %207 = vsyncadd [#allocation5], %s206
          %s208 = sshll.u32 [#allocation4], 4
          %s209 = int_to_ptr.vmem [resolvable:$true] %s208
          %214 = dma.hbm_to_vmem [thread:$0]  %s3, 16384, %s209, [#allocation5], 256, 256, 16
        $region24: #{ppo_rocket_agent_forward.1} parent=11 // pred_fallthru
          _
        // Predicated region
        $region25: #{ppo_rocket_agent_forward.1} parent=11 // pred_check
          %p215 = pneg %p124
        $region26: #{ppo_rocket_agent_forward.1} parent=11 // pred_check_branch
          %217 = sbr.rel (%p215) target = $region28
        $region27: #{ppo_rocket_agent_forward.1} parent=11 // pred_region
          _
        $region28: #{ppo_rocket_agent_forward.1} parent=11 // pred_fallthru
          _
        // Predicated region
        $region29: #{ppo_rocket_agent_forward.1} parent=11 // pred_check
          %p218 = pneg %p145
        $region30: #{ppo_rocket_agent_forward.1} parent=11 // pred_check_branch
          %220 = sbr.rel (%p218) target = $region32
        $region31: #{ppo_rocket_agent_forward.1} parent=11 // pred_region
          %s222 = ssub.s32 1024, 1024
          %223 = vsyncadd [#allocation5], %s222
          %s225 = sshll.u32 [#allocation6], 4
          %s226 = int_to_ptr.vmem [resolvable:$true] %s225
          %228 = dma.hbm_to_vmem [thread:$0]  %s5, 1024, %s226, [#allocation5]
        $region32: #{ppo_rocket_agent_forward.1} parent=11 // pred_fallthru
          _
      $region12: #{ppo_rocket_agent_forward.1} parent=5 // pred_fallthru
        _
      %p229 = scmp.lt.s32.totalorder %s14, 2
      // Predicated region
      $region33: #{ppo_rocket_agent_forward.1} parent=5 // pred_check
        %p230 = pneg %p229
      $region34: #{ppo_rocket_agent_forward.1} parent=5 // pred_check_branch
        %232 = sbr.rel (%p230) target = $region36
      $region35: #{ppo_rocket_agent_forward.1} parent=5 // pred_region
        // Predicated region
        $region37: #{ppo_rocket_agent_forward.1} parent=35 // pred_check
          %p233 = pneg %p34
        $region38: #{ppo_rocket_agent_forward.1} parent=35 // pred_check_branch
          %235 = sbr.rel (%p233) target = $region40
        $region39: #{ppo_rocket_agent_forward.1} parent=35 // pred_region
          %s236 = smul.u32 32, %s14
          %p237 = scmp.lt.s32.totalorder %s236, 63
          %s238 = scalar_select %p237, %s236, 63
          %s239 = smul.addr %s238, 8
          %s240 = scalar_lea.vmem %s0, %s239
          %s241 = smul.u32 32, %s14
        $region40: #{ppo_rocket_agent_forward.1} parent=35 // pred_fallthru
          _
      $region36: #{ppo_rocket_agent_forward.1} parent=5 // pred_fallthru
        _
      %p242 = scmp.le.s32.totalorder 1, %s14
      %p243 = scmp.lt.s32.totalorder %s14, 3
      %p244 = pnand %p242, %p243
      %p245 = pneg %p244
      // Predicated region
      $region41: #{ppo_rocket_agent_forward.1} parent=5 // pred_check
        _
      $region42: #{ppo_rocket_agent_forward.1} parent=5 // pred_check_branch
        %247 = sbr.rel (%p244) target = $region44
      $region43: #{ppo_rocket_agent_forward.1} parent=5 // pred_region
        %s248 = ssub.s32 %s14, 1
        // Predicated region
        $region45: #{ppo_rocket_agent_forward.1} parent=43 // pred_check
          %p249 = pneg %p82
        $region46: #{ppo_rocket_agent_forward.1} parent=43 // pred_check_branch
          %251 = sbr.rel (%p249) target = $region48
        $region47: #{ppo_rocket_agent_forward.1} parent=43 // pred_region
          %252 = dma.done [#allocation3], 16384
        $region48: #{ppo_rocket_agent_forward.1} parent=43 // pred_fallthru
          _
        // Predicated region
        $region49: #{ppo_rocket_agent_forward.1} parent=43 // pred_check
          %p253 = pneg %p103
        $region50: #{ppo_rocket_agent_forward.1} parent=43 // pred_check_branch
          %255 = sbr.rel (%p253) target = $region52
        $region51: #{ppo_rocket_agent_forward.1} parent=43 // pred_region
          %256 = dma.done [#allocation5], 16384
        $region52: #{ppo_rocket_agent_forward.1} parent=43 // pred_fallthru
          _
        // Predicated region
        $region53: #{ppo_rocket_agent_forward.1} parent=43 // pred_check
          %p257 = pneg %p145
        $region54: #{ppo_rocket_agent_forward.1} parent=43 // pred_check_branch
          %259 = sbr.rel (%p257) target = $region56
        $region55: #{ppo_rocket_agent_forward.1} parent=43 // pred_region
          %260 = dma.done [#allocation5], 1024
        $region56: #{ppo_rocket_agent_forward.1} parent=43 // pred_fallthru
          _
        %s261 = smul.u32 32, %s19
        %p262 = scmp.lt.s32.totalorder %s261, 63
        %s263 = scalar_select %p262, %s261, 63
        %s264 = smul.addr %s263, 8
        %s265 = scalar_lea.vmem %s0, %s264
        %p266 = pneg %p40
        %p267 = pneg %p37
        %p268 = pneg %p61
        %p269 = pneg %p58
        %p270 = pneg %p82
        %p271 = pneg %p79
        %p272 = pneg %p103
        %p273 = pneg %p100
        %p274 = pneg %p124
        %p275 = pneg %p121
        %p276 = pneg %p145
        %p277 = pneg %p142
        %p278 = pneg %p171
        %p279 = pneg %p168
        %s280 = smul.u32 32, %s19
        %p281 = scmp.lt.s32.totalorder %s280, 63
        %s282 = scalar_select %p281, %s280, 63
        %s283 = smul.addr %s282, 8
        %s284 = scalar_lea.vmem %s6, %s283
        %s285 = smul.u32 32, %s19
        %p286 = scmp.lt.s32.totalorder %s285, 63
        %s287 = scalar_select %p286, %s285, 63
        %s288 = smul.addr %s287, 8
        %s289 = scalar_lea.vmem %s0, %s288
        %s290 = smul.u32 32, %s19
        %s291 = smul.u32 32, %s19
        %p292 = scmp.lt.s32.totalorder %s291, 63
        %s293 = scalar_select %p292, %s291, 63
        %s294 = smul.addr %s293, 8
        %s295 = scalar_lea.vmem %s6, %s294
        %s296 = smul.u32 32, %s19
        %v298 = vld [vmem:[%s289] sm:$0xff]
        %v299 = vld [vmem:[%s289 + $0x8] sm:$0xff]
        %v300 = vld [vmem:[%s289 + $0x10] sm:$0xff]
        %v301 = vld [vmem:[%s289 + $0x18] sm:$0xff]
        %v302 = vld [vmem:[%s289 + $0x20] sm:$0xff]
        %v303 = vld [vmem:[%s289 + $0x28] sm:$0xff]
        %v304 = vld [vmem:[%s289 + $0x30] sm:$0xff]
        %v305 = vld [vmem:[%s289 + $0x38] sm:$0xff]
        %v306 = vld [vmem:[%s289 + $0x40] sm:$0xff]
        %v307 = vld [vmem:[%s289 + $0x48] sm:$0xff]
        %v308 = vld [vmem:[%s289 + $0x50] sm:$0xff]
        %v309 = vld [vmem:[%s289 + $0x58] sm:$0xff]
        %v310 = vld [vmem:[%s289 + $0x60] sm:$0xff]
        %v311 = vld [vmem:[%s289 + $0x68] sm:$0xff]
        %v312 = vld [vmem:[%s289 + $0x70] sm:$0xff]
        %v313 = vld [vmem:[%s289 + $0x78] sm:$0xff]
        %v314 = vld [vmem:[%s289 + $0x80] sm:$0xff]
        %v315 = vld [vmem:[%s289 + $0x88] sm:$0xff]
        %v316 = vld [vmem:[%s289 + $0x90] sm:$0xff]
        %v317 = vld [vmem:[%s289 + $0x98] sm:$0xff]
        %v318 = vld [vmem:[%s289 + $0xa0] sm:$0xff]
        %v319 = vld [vmem:[%s289 + $0xa8] sm:$0xff]
        %v320 = vld [vmem:[%s289 + $0xb0] sm:$0xff]
        %v321 = vld [vmem:[%s289 + $0xb8] sm:$0xff]
        %v322 = vld [vmem:[%s289 + $0xc0] sm:$0xff]
        %v323 = vld [vmem:[%s289 + $0xc8] sm:$0xff]
        %v324 = vld [vmem:[%s289 + $0xd0] sm:$0xff]
        %v325 = vld [vmem:[%s289 + $0xd8] sm:$0xff]
        %v326 = vld [vmem:[%s289 + $0xe0] sm:$0xff]
        %v327 = vld [vmem:[%s289 + $0xe8] sm:$0xff]
        %v328 = vld [vmem:[%s289 + $0xf0] sm:$0xff]
        %v329 = vld [vmem:[%s289 + $0xf8] sm:$0xff]
        %v330 = vpack.c.bf16 %v299, %v298
        %v331 = vpack.c.bf16 %v301, %v300
        %v332 = vpack.c.bf16 %v303, %v302
        %v333 = vpack.c.bf16 %v305, %v304
        %v334 = vpack.c.bf16 %v307, %v306
        %v335 = vpack.c.bf16 %v309, %v308
        %v336 = vpack.c.bf16 %v311, %v310
        %v337 = vpack.c.bf16 %v313, %v312
        %v338 = vpack.c.bf16 %v315, %v314
        %v339 = vpack.c.bf16 %v317, %v316
        %v340 = vpack.c.bf16 %v319, %v318
        %v341 = vpack.c.bf16 %v321, %v320
        %v342 = vpack.c.bf16 %v323, %v322
        %v343 = vpack.c.bf16 %v325, %v324
        %v344 = vpack.c.bf16 %v327, %v326
        %v345 = vpack.c.bf16 %v329, %v328
        %v346 = vld [vmem:[#allocation6] ss:$8 sm:$0xf]
        %v347 = vld [vmem:[#allocation6] ss:$8 sm:$0xf0]
        %v348 = vor.u32 %v346, %v347
        %s349 = scalar_lea.vmem [#allocation6], 1
        %v350 = vld [vmem:[%s349] ss:$8 sm:$0xf]
        %s351 = scalar_lea.vmem [#allocation6], 33
        %v352 = vld [vmem:[%s351] ss:$8 sm:$0xf]
        %v353 = vld [vmem:[#allocation6 + $0x2] ss:$0 sm:$0xff]
        %v354 = vld [vmem:[%s1] sm:$0xff]
        %v355 = vld [vmem:[%s1 + $0x8] sm:$0xff]
        %v356 = vld [vmem:[%s1 + $0x10] sm:$0xff]
        %v357 = vld [vmem:[%s1 + $0x18] sm:$0xff]
        %v358 = vld [vmem:[%s1 + $0x20] sm:$0xff]
        %v359 = vld [vmem:[%s1 + $0x28] sm:$0xff]
        %v360 = vld [vmem:[%s1 + $0x30] sm:$0xff]
        %v361 = vld [vmem:[%s1 + $0x38] sm:$0xff]
        %v363 = vlaneseq
        %v364 = vshrl.u32 %v363, 7
        %v365 = vsub.s32 0, %v364
        %v366 = vrot.slane %v348, %v365
        %v367 = vlaneseq
        %v368 = vshrl.u32 %v367, 7
        %v369 = vsub.s32 1, %v368
        %v370 = vrot.slane %v348, %v369
        %v371 = vlaneseq
        %v372 = vshrl.u32 %v371, 7
        %v373 = vsub.s32 2, %v372
        %v374 = vrot.slane %v348, %v373
        %v375 = vlaneseq
        %v376 = vshrl.u32 %v375, 7
        %v377 = vsub.s32 3, %v376
        %v378 = vrot.slane %v348, %v377
        %v379 = vlaneseq
        %v380 = vshrl.u32 %v379, 7
        %v381 = vsub.s32 4, %v380
        %v382 = vrot.slane %v348, %v381
        %v383 = vlaneseq
        %v384 = vshrl.u32 %v383, 7
        %v385 = vsub.s32 5, %v384
        %v386 = vrot.slane %v348, %v385
        %v387 = vlaneseq
        %v388 = vshrl.u32 %v387, 7
        %v389 = vsub.s32 6, %v388
        %v390 = vrot.slane %v348, %v389
        %v391 = vlaneseq
        %v392 = vshrl.u32 %v391, 7
        %v393 = vsub.s32 7, %v392
        %v394 = vrot.slane %v348, %v393
        %v411 = vunpack.c.l.b16 %v354
        %v412 = vunpack.c.h.b16 %v354
        %v413 = vunpack.c.l.b16 %v355
        %v414 = vunpack.c.h.b16 %v355
        %v415 = vunpack.c.l.b16 %v356
        %v416 = vunpack.c.h.b16 %v356
        %v417 = vunpack.c.l.b16 %v357
        %v418 = vunpack.c.h.b16 %v357
        %v419 = vunpack.c.l.b16 %v358
        %v420 = vunpack.c.h.b16 %v358
        %v421 = vunpack.c.l.b16 %v359
        %v422 = vunpack.c.h.b16 %v359
        %v423 = vunpack.c.l.b16 %v360
        %v424 = vunpack.c.h.b16 %v360
        %v425 = vunpack.c.l.b16 %v361
        %v426 = vunpack.c.h.b16 %v361
        %v427 = vpack.c.b16 %v419, %v411
        %v428 = vpack.c.b16 %v420, %v412
        %v429 = vpack.c.b16 %v421, %v413
        %v430 = vpack.c.b16 %v422, %v414
        %v431 = vpack.c.b16 %v423, %v415
        %v432 = vpack.c.b16 %v424, %v416
        %v433 = vpack.c.b16 %v425, %v417
        %v434 = vpack.c.b16 %v426, %v418
        %vm443 = vcmask 130048
        %v445 = vsel %vm443, %v330, 0
        %v448 = vsel %vm443, %v331, 0
        %v451 = vsel %vm443, %v332, 0
        %v454 = vsel %vm443, %v333, 0
        %v457 = vsel %vm443, %v334, 0
        %v460 = vsel %vm443, %v335, 0
        %v463 = vsel %vm443, %v336, 0
        %v466 = vsel %vm443, %v337, 0
        %v469 = vsel %vm443, %v338, 0
        %v472 = vsel %vm443, %v339, 0
        %v475 = vsel %vm443, %v340, 0
        %v478 = vsel %vm443, %v341, 0
        %v481 = vsel %vm443, %v342, 0
        %v484 = vsel %vm443, %v343, 0
        %v487 = vsel %vm443, %v344, 0
        %v490 = vsel %vm443, %v345, 0
        %492 = vmatprep.subr.bf16.mxu0 0
        %493 = vmatpush1.bf16.msra.mxu0 0
        %494 = vmatprep.subr.bf16.mxu0 0
        %495 = vmatpush1.bf16.msra.mxu0 0
        %496 = vmatprep.subr.bf16.mxu0 0
        %497 = vmatpush1.bf16.msra.mxu0 0
        %498 = vmatprep.subr.bf16.mxu0 0
        %499 = vmatpush1.bf16.msra.mxu0 0
        %500 = vmatprep.subr.bf16.mxu0 0
        %501 = vmatpush1.bf16.msra.mxu0 0
        %502 = vmatprep.subr.bf16.mxu0 0
        %503 = vmatpush1.bf16.msra.mxu0 0
        %504 = vmatprep.subr.bf16.mxu0 0
        %505 = vmatpush1.bf16.msra.mxu0 0
        %506 = vmatprep.subr.bf16.mxu0 %v428
        %507 = vmatpush1.bf16.msra.mxu0 %v427
        %508 = vmatprep.subr.bf16.mxu0 0
        %509 = vmatpush2.bf16.msra.mxu0 0
        %510 = vmatprep.subr.bf16.mxu0 0
        %511 = vmatpush2.bf16.msra.mxu0 0
        %512 = vmatprep.subr.bf16.mxu0 0
        %513 = vmatpush2.bf16.msra.mxu0 0
        %514 = vmatprep.subr.bf16.mxu0 0
        %515 = vmatpush2.bf16.msra.mxu0 0
        %516 = vmatprep.subr.bf16.mxu0 0
        %517 = vmatpush2.bf16.msra.mxu0 0
        %518 = vmatprep.subr.bf16.mxu0 0
        %519 = vmatpush2.bf16.msra.mxu0 0
        %520 = vmatprep.subr.bf16.mxu0 0
        %521 = vmatpush2.bf16.msra.mxu0 0
        %522 = vmatprep.subr.bf16.mxu0 0
        %523 = vmatpush2.bf16.msra.mxu0 0
        %524 = vmatprep.mubr.bf16.mxu0 0
        %525 = vmatmul.mubr.bf16.gmra.mxu0 %v445
        %v526 = vpop.f32.mrf.mxu0
        %v527 = vadd.f32 %v366, %v526
        %v528 = vpop.f32.mrf.mxu0
        %v529 = vadd.f32 %v370, %v528
        %v530 = vpop.f32.mrf.mxu0
        %v531 = vadd.f32 %v366, %v530
        %v532 = vpop.f32.mrf.mxu0
        %v533 = vadd.f32 %v370, %v532
        %534 = vmatprep.mubr.bf16.mxu0 0
        %535 = vmatmul.mubr.bf16.gmra.mxu0 %v448
        %v536 = vpop.f32.mrf.mxu0
        %v537 = vadd.f32 %v366, %v536
        %v538 = vpop.f32.mrf.mxu0
        %v539 = vadd.f32 %v370, %v538
        %v540 = vpop.f32.mrf.mxu0
        %v541 = vadd.f32 %v366, %v540
        %v542 = vpop.f32.mrf.mxu0
        %v543 = vadd.f32 %v370, %v542
        %544 = vmatprep.mubr.bf16.mxu0 0
        %545 = vmatmul.mubr.bf16.gmra.mxu0 %v451
        %v546 = vpop.f32.mrf.mxu0
        %v547 = vadd.f32 %v366, %v546
        %v548 = vpop.f32.mrf.mxu0
        %v549 = vadd.f32 %v370, %v548
        %v550 = vpop.f32.mrf.mxu0
        %v551 = vadd.f32 %v366, %v550
        %v552 = vpop.f32.mrf.mxu0
        %v553 = vadd.f32 %v370, %v552
        %554 = vmatprep.mubr.bf16.mxu0 0
        %555 = vmatmul.mubr.bf16.gmra.mxu0 %v454
        %v556 = vpop.f32.mrf.mxu0
        %v557 = vadd.f32 %v366, %v556
        %v558 = vpop.f32.mrf.mxu0
        %v559 = vadd.f32 %v370, %v558
        %v560 = vpop.f32.mrf.mxu0
        %v561 = vadd.f32 %v366, %v560
        %v562 = vpop.f32.mrf.mxu0
        %v563 = vadd.f32 %v370, %v562
        %564 = vmatprep.mubr.bf16.mxu0 0
        %565 = vmatmul.mubr.bf16.gmra.mxu0 %v457
        %v566 = vpop.f32.mrf.mxu0
        %v567 = vadd.f32 %v366, %v566
        %v568 = vpop.f32.mrf.mxu0
        %v569 = vadd.f32 %v370, %v568
        %v570 = vpop.f32.mrf.mxu0
        %v571 = vadd.f32 %v366, %v570
        %v572 = vpop.f32.mrf.mxu0
        %v573 = vadd.f32 %v370, %v572
        %574 = vmatprep.mubr.bf16.mxu0 0
        %575 = vmatmul.mubr.bf16.gmra.mxu0 %v460
        %v576 = vpop.f32.mrf.mxu0
        %v577 = vadd.f32 %v366, %v576
        %v578 = vpop.f32.mrf.mxu0
        %v579 = vadd.f32 %v370, %v578
        %v580 = vpop.f32.mrf.mxu0
        %v581 = vadd.f32 %v366, %v580
        %v582 = vpop.f32.mrf.mxu0
        %v583 = vadd.f32 %v370, %v582
        %584 = vmatprep.mubr.bf16.mxu0 0
        %585 = vmatmul.mubr.bf16.gmra.mxu0 %v463
        %v586 = vpop.f32.mrf.mxu0
        %v587 = vadd.f32 %v366, %v586
        %v588 = vpop.f32.mrf.mxu0
        %v589 = vadd.f32 %v370, %v588
        %v590 = vpop.f32.mrf.mxu0
        %v591 = vadd.f32 %v366, %v590
        %v592 = vpop.f32.mrf.mxu0
        %v593 = vadd.f32 %v370, %v592
        %594 = vmatprep.mubr.bf16.mxu0 0
        %595 = vmatmul.mubr.bf16.gmra.mxu0 %v466
        %v596 = vpop.f32.mrf.mxu0
        %v597 = vadd.f32 %v366, %v596
        %v598 = vpop.f32.mrf.mxu0
        %v599 = vadd.f32 %v370, %v598
        %v600 = vpop.f32.mrf.mxu0
        %v601 = vadd.f32 %v366, %v600
        %v602 = vpop.f32.mrf.mxu0
        %v603 = vadd.f32 %v370, %v602
        %604 = vmatprep.mubr.bf16.mxu0 0
        %605 = vmatmul.mubr.bf16.gmra.mxu0 %v469
        %v606 = vpop.f32.mrf.mxu0
        %v607 = vadd.f32 %v366, %v606
        %v608 = vpop.f32.mrf.mxu0
        %v609 = vadd.f32 %v370, %v608
        %v610 = vpop.f32.mrf.mxu0
        %v611 = vadd.f32 %v366, %v610
        %v612 = vpop.f32.mrf.mxu0
        %v613 = vadd.f32 %v370, %v612
        %614 = vmatprep.mubr.bf16.mxu0 0
        %615 = vmatmul.mubr.bf16.gmra.mxu0 %v472
        %v616 = vpop.f32.mrf.mxu0
        %v617 = vadd.f32 %v366, %v616
        %v618 = vpop.f32.mrf.mxu0
        %v619 = vadd.f32 %v370, %v618
        %v620 = vpop.f32.mrf.mxu0
        %v621 = vadd.f32 %v366, %v620
        %v622 = vpop.f32.mrf.mxu0
        %v623 = vadd.f32 %v370, %v622
        %624 = vmatprep.mubr.bf16.mxu0 0
        %625 = vmatmul.mubr.bf16.gmra.mxu0 %v475
        %v626 = vpop.f32.mrf.mxu0
        %v627 = vadd.f32 %v366, %v626
        %v628 = vpop.f32.mrf.mxu0
        %v629 = vadd.f32 %v370, %v628
        %v630 = vpop.f32.mrf.mxu0
        %v631 = vadd.f32 %v366, %v630
        %v632 = vpop.f32.mrf.mxu0
        %v633 = vadd.f32 %v370, %v632
        %634 = vmatprep.mubr.bf16.mxu0 0
        %635 = vmatmul.mubr.bf16.gmra.mxu0 %v478
        %v636 = vpop.f32.mrf.mxu0
        %v637 = vadd.f32 %v366, %v636
        %v638 = vpop.f32.mrf.mxu0
        %v639 = vadd.f32 %v370, %v638
        %v640 = vpop.f32.mrf.mxu0
        %v641 = vadd.f32 %v366, %v640
        %v642 = vpop.f32.mrf.mxu0
        %v643 = vadd.f32 %v370, %v642
        %644 = vmatprep.mubr.bf16.mxu0 0
        %645 = vmatmul.mubr.bf16.gmra.mxu0 %v481
        %v646 = vpop.f32.mrf.mxu0
        %v647 = vadd.f32 %v366, %v646
        %v648 = vpop.f32.mrf.mxu0
        %v649 = vadd.f32 %v370, %v648
        %v650 = vpop.f32.mrf.mxu0
        %v651 = vadd.f32 %v366, %v650
        %v652 = vpop.f32.mrf.mxu0
        %v653 = vadd.f32 %v370, %v652
        %654 = vmatprep.mubr.bf16.mxu0 0
        %655 = vmatmul.mubr.bf16.gmra.mxu0 %v484
        %v656 = vpop.f32.mrf.mxu0
        %v657 = vadd.f32 %v366, %v656
        %v658 = vpop.f32.mrf.mxu0
        %v659 = vadd.f32 %v370, %v658
        %v660 = vpop.f32.mrf.mxu0
        %v661 = vadd.f32 %v366, %v660
        %v662 = vpop.f32.mrf.mxu0
        %v663 = vadd.f32 %v370, %v662
        %664 = vmatprep.mubr.bf16.mxu0 0
        %665 = vmatmul.mubr.bf16.gmra.mxu0 %v487
        %v666 = vpop.f32.mrf.mxu0
        %v667 = vadd.f32 %v366, %v666
        %v668 = vpop.f32.mrf.mxu0
        %v669 = vadd.f32 %v370, %v668
        %v670 = vpop.f32.mrf.mxu0
        %v671 = vadd.f32 %v366, %v670
        %v672 = vpop.f32.mrf.mxu0
        %v673 = vadd.f32 %v370, %v672
        %674 = vmatprep.mubr.bf16.mxu0 0
        %675 = vmatmul.mubr.bf16.gmra.mxu0 %v490
        %v676 = vpop.f32.mrf.mxu0
        %v677 = vadd.f32 %v366, %v676
        %v678 = vpop.f32.mrf.mxu0
        %v679 = vadd.f32 %v370, %v678
        %v680 = vpop.f32.mrf.mxu0
        %v681 = vadd.f32 %v366, %v680
        %v682 = vpop.f32.mrf.mxu0
        %v683 = vadd.f32 %v370, %v682
        %684 = vdwg.mxu0
        %685 = vmatprep.subr.bf16.mxu0 0
        %686 = vmatpush1.bf16.msra.mxu0 0
        %687 = vmatprep.subr.bf16.mxu0 0
        %688 = vmatpush1.bf16.msra.mxu0 0
        %689 = vmatprep.subr.bf16.mxu0 0
        %690 = vmatpush1.bf16.msra.mxu0 0
        %691 = vmatprep.subr.bf16.mxu0 0
        %692 = vmatpush1.bf16.msra.mxu0 0
        %693 = vmatprep.subr.bf16.mxu0 0
        %694 = vmatpush1.bf16.msra.mxu0 0
        %695 = vmatprep.subr.bf16.mxu0 0
        %696 = vmatpush1.bf16.msra.mxu0 0
        %697 = vmatprep.subr.bf16.mxu0 0
        %698 = vmatpush1.bf16.msra.mxu0 0
        %699 = vmatprep.subr.bf16.mxu0 %v430
        %700 = vmatpush1.bf16.msra.mxu0 %v429
        %701 = vmatprep.subr.bf16.mxu0 0
        %702 = vmatpush2.bf16.msra.mxu0 0
        %703 = vmatprep.subr.bf16.mxu0 0
        %704 = vmatpush2.bf16.msra.mxu0 0
        %705 = vmatprep.subr.bf16.mxu0 0
        %706 = vmatpush2.bf16.msra.mxu0 0
        %707 = vmatprep.subr.bf16.mxu0 0
        %708 = vmatpush2.bf16.msra.mxu0 0
        %709 = vmatprep.subr.bf16.mxu0 0
        %710 = vmatpush2.bf16.msra.mxu0 0
        %711 = vmatprep.subr.bf16.mxu0 0
        %712 = vmatpush2.bf16.msra.mxu0 0
        %713 = vmatprep.subr.bf16.mxu0 0
        %714 = vmatpush2.bf16.msra.mxu0 0
        %715 = vmatprep.subr.bf16.mxu0 0
        %716 = vmatpush2.bf16.msra.mxu0 0
        %717 = vmatprep.mubr.bf16.mxu0 0
        %718 = vmatmul.mubr.bf16.gmra.mxu0 %v445
        %v719 = vpop.f32.mrf.mxu0
        %v720 = vadd.f32 %v374, %v719
        %v721 = vpop.f32.mrf.mxu0
        %v722 = vadd.f32 %v378, %v721
        %v723 = vpop.f32.mrf.mxu0
        %v724 = vadd.f32 %v374, %v723
        %v725 = vpop.f32.mrf.mxu0
        %v726 = vadd.f32 %v378, %v725
        %727 = vmatprep.mubr.bf16.mxu0 0
        %728 = vmatmul.mubr.bf16.gmra.mxu0 %v448
        %v729 = vpop.f32.mrf.mxu0
        %v730 = vadd.f32 %v374, %v729
        %v731 = vpop.f32.mrf.mxu0
        %v732 = vadd.f32 %v378, %v731
        %v733 = vpop.f32.mrf.mxu0
        %v734 = vadd.f32 %v374, %v733
        %v735 = vpop.f32.mrf.mxu0
        %v736 = vadd.f32 %v378, %v735
        %737 = vmatprep.mubr.bf16.mxu0 0
        %738 = vmatmul.mubr.bf16.gmra.mxu0 %v451
        %v739 = vpop.f32.mrf.mxu0
        %v740 = vadd.f32 %v374, %v739
        %v741 = vpop.f32.mrf.mxu0
        %v742 = vadd.f32 %v378, %v741
        %v743 = vpop.f32.mrf.mxu0
        %v744 = vadd.f32 %v374, %v743
        %v745 = vpop.f32.mrf.mxu0
        %v746 = vadd.f32 %v378, %v745
        %747 = vmatprep.mubr.bf16.mxu0 0
        %748 = vmatmul.mubr.bf16.gmra.mxu0 %v454
        %v749 = vpop.f32.mrf.mxu0
        %v750 = vadd.f32 %v374, %v749
        %v751 = vpop.f32.mrf.mxu0
        %v752 = vadd.f32 %v378, %v751
        %v753 = vpop.f32.mrf.mxu0
        %v754 = vadd.f32 %v374, %v753
        %v755 = vpop.f32.mrf.mxu0
        %v756 = vadd.f32 %v378, %v755
        %757 = vmatprep.mubr.bf16.mxu0 0
        %758 = vmatmul.mubr.bf16.gmra.mxu0 %v457
        %v759 = vpop.f32.mrf.mxu0
        %v760 = vadd.f32 %v374, %v759
        %v761 = vpop.f32.mrf.mxu0
        %v762 = vadd.f32 %v378, %v761
        %v763 = vpop.f32.mrf.mxu0
        %v764 = vadd.f32 %v374, %v763
        %v765 = vpop.f32.mrf.mxu0
        %v766 = vadd.f32 %v378, %v765
        %767 = vmatprep.mubr.bf16.mxu0 0
        %768 = vmatmul.mubr.bf16.gmra.mxu0 %v460
        %v769 = vpop.f32.mrf.mxu0
        %v770 = vadd.f32 %v374, %v769
        %v771 = vpop.f32.mrf.mxu0
        %v772 = vadd.f32 %v378, %v771
        %v773 = vpop.f32.mrf.mxu0
        %v774 = vadd.f32 %v374, %v773
        %v775 = vpop.f32.mrf.mxu0
        %v776 = vadd.f32 %v378, %v775
        %777 = vmatprep.mubr.bf16.mxu0 0
        %778 = vmatmul.mubr.bf16.gmra.mxu0 %v463
        %v779 = vpop.f32.mrf.mxu0
        %v780 = vadd.f32 %v374, %v779
        %v781 = vpop.f32.mrf.mxu0
        %v782 = vadd.f32 %v378, %v781
        %v783 = vpop.f32.mrf.mxu0
        %v784 = vadd.f32 %v374, %v783
        %v785 = vpop.f32.mrf.mxu0
        %v786 = vadd.f32 %v378, %v785
        %787 = vmatprep.mubr.bf16.mxu0 0
        %788 = vmatmul.mubr.bf16.gmra.mxu0 %v466
        %v789 = vpop.f32.mrf.mxu0
        %v790 = vadd.f32 %v374, %v789
        %v791 = vpop.f32.mrf.mxu0
        %v792 = vadd.f32 %v378, %v791
        %v793 = vpop.f32.mrf.mxu0
        %v794 = vadd.f32 %v374, %v793
        %v795 = vpop.f32.mrf.mxu0
        %v796 = vadd.f32 %v378, %v795
        %797 = vmatprep.mubr.bf16.mxu0 0
        %798 = vmatmul.mubr.bf16.gmra.mxu0 %v469
        %v799 = vpop.f32.mrf.mxu0
        %v800 = vadd.f32 %v374, %v799
        %v801 = vpop.f32.mrf.mxu0
        %v802 = vadd.f32 %v378, %v801
        %v803 = vpop.f32.mrf.mxu0
        %v804 = vadd.f32 %v374, %v803
        %v805 = vpop.f32.mrf.mxu0
        %v806 = vadd.f32 %v378, %v805
        %807 = vmatprep.mubr.bf16.mxu0 0
        %808 = vmatmul.mubr.bf16.gmra.mxu0 %v472
        %v809 = vpop.f32.mrf.mxu0
        %v810 = vadd.f32 %v374, %v809
        %v811 = vpop.f32.mrf.mxu0
        %v812 = vadd.f32 %v378, %v811
        %v813 = vpop.f32.mrf.mxu0
        %v814 = vadd.f32 %v374, %v813
        %v815 = vpop.f32.mrf.mxu0
        %v816 = vadd.f32 %v378, %v815
        %817 = vmatprep.mubr.bf16.mxu0 0
        %818 = vmatmul.mubr.bf16.gmra.mxu0 %v475
        %v819 = vpop.f32.mrf.mxu0
        %v820 = vadd.f32 %v374, %v819
        %v821 = vpop.f32.mrf.mxu0
        %v822 = vadd.f32 %v378, %v821
        %v823 = vpop.f32.mrf.mxu0
        %v824 = vadd.f32 %v374, %v823
        %v825 = vpop.f32.mrf.mxu0
        %v826 = vadd.f32 %v378, %v825
        %827 = vmatprep.mubr.bf16.mxu0 0
        %828 = vmatmul.mubr.bf16.gmra.mxu0 %v478
        %v829 = vpop.f32.mrf.mxu0
        %v830 = vadd.f32 %v374, %v829
        %v831 = vpop.f32.mrf.mxu0
        %v832 = vadd.f32 %v378, %v831
        %v833 = vpop.f32.mrf.mxu0
        %v834 = vadd.f32 %v374, %v833
        %v835 = vpop.f32.mrf.mxu0
        %v836 = vadd.f32 %v378, %v835
        %837 = vmatprep.mubr.bf16.mxu0 0
        %838 = vmatmul.mubr.bf16.gmra.mxu0 %v481
        %v839 = vpop.f32.mrf.mxu0
        %v840 = vadd.f32 %v374, %v839
        %v841 = vpop.f32.mrf.mxu0
        %v842 = vadd.f32 %v378, %v841
        %v843 = vpop.f32.mrf.mxu0
        %v844 = vadd.f32 %v374, %v843
        %v845 = vpop.f32.mrf.mxu0
        %v846 = vadd.f32 %v378, %v845
        %847 = vmatprep.mubr.bf16.mxu0 0
        %848 = vmatmul.mubr.bf16.gmra.mxu0 %v484
        %v849 = vpop.f32.mrf.mxu0
        %v850 = vadd.f32 %v374, %v849
        %v851 = vpop.f32.mrf.mxu0
        %v852 = vadd.f32 %v378, %v851
        %v853 = vpop.f32.mrf.mxu0
        %v854 = vadd.f32 %v374, %v853
        %v855 = vpop.f32.mrf.mxu0
        %v856 = vadd.f32 %v378, %v855
        %857 = vmatprep.mubr.bf16.mxu0 0
        %858 = vmatmul.mubr.bf16.gmra.mxu0 %v487
        %v859 = vpop.f32.mrf.mxu0
        %v860 = vadd.f32 %v374, %v859
        %v861 = vpop.f32.mrf.mxu0
        %v862 = vadd.f32 %v378, %v861
        %v863 = vpop.f32.mrf.mxu0
        %v864 = vadd.f32 %v374, %v863
        %v865 = vpop.f32.mrf.mxu0
        %v866 = vadd.f32 %v378, %v865
        %867 = vmatprep.mubr.bf16.mxu0 0
        %868 = vmatmul.mubr.bf16.gmra.mxu0 %v490
        %v869 = vpop.f32.mrf.mxu0
        %v870 = vadd.f32 %v374, %v869
        %v871 = vpop.f32.mrf.mxu0
        %v872 = vadd.f32 %v378, %v871
        %v873 = vpop.f32.mrf.mxu0
        %v874 = vadd.f32 %v374, %v873
        %v875 = vpop.f32.mrf.mxu0
        %v876 = vadd.f32 %v378, %v875
        %877 = vdwg.mxu0
        %878 = vmatprep.subr.bf16.mxu0 0
        %879 = vmatpush1.bf16.msra.mxu0 0
        %880 = vmatprep.subr.bf16.mxu0 0
        %881 = vmatpush1.bf16.msra.mxu0 0
        %882 = vmatprep.subr.bf16.mxu0 0
        %883 = vmatpush1.bf16.msra.mxu0 0
        %884 = vmatprep.subr.bf16.mxu0 0
        %885 = vmatpush1.bf16.msra.mxu0 0
        %886 = vmatprep.subr.bf16.mxu0 0
        %887 = vmatpush1.bf16.msra.mxu0 0
        %888 = vmatprep.subr.bf16.mxu0 0
        %889 = vmatpush1.bf16.msra.mxu0 0
        %890 = vmatprep.subr.bf16.mxu0 0
        %891 = vmatpush1.bf16.msra.mxu0 0
        %892 = vmatprep.subr.bf16.mxu0 %v432
        %893 = vmatpush1.bf16.msra.mxu0 %v431
        %894 = vmatprep.subr.bf16.mxu0 0
        %895 = vmatpush2.bf16.msra.mxu0 0
        %896 = vmatprep.subr.bf16.mxu0 0
        %897 = vmatpush2.bf16.msra.mxu0 0
        %898 = vmatprep.subr.bf16.mxu0 0
        %899 = vmatpush2.bf16.msra.mxu0 0
        %900 = vmatprep.subr.bf16.mxu0 0
        %901 = vmatpush2.bf16.msra.mxu0 0
        %902 = vmatprep.subr.bf16.mxu0 0
        %903 = vmatpush2.bf16.msra.mxu0 0
        %904 = vmatprep.subr.bf16.mxu0 0
        %905 = vmatpush2.bf16.msra.mxu0 0
        %906 = vmatprep.subr.bf16.mxu0 0
        %907 = vmatpush2.bf16.msra.mxu0 0
        %908 = vmatprep.subr.bf16.mxu0 0
        %909 = vmatpush2.bf16.msra.mxu0 0
        %910 = vmatprep.mubr.bf16.mxu0 0
        %911 = vmatmul.mubr.bf16.gmra.mxu0 %v445
        %v912 = vpop.f32.mrf.mxu0
        %v913 = vadd.f32 %v382, %v912
        %v914 = vpop.f32.mrf.mxu0
        %v915 = vadd.f32 %v386, %v914
        %v916 = vpop.f32.mrf.mxu0
        %v917 = vadd.f32 %v382, %v916
        %v918 = vpop.f32.mrf.mxu0
        %v919 = vadd.f32 %v386, %v918
        %920 = vmatprep.mubr.bf16.mxu0 0
        %921 = vmatmul.mubr.bf16.gmra.mxu0 %v448
        %v922 = vpop.f32.mrf.mxu0
        %v923 = vadd.f32 %v382, %v922
        %v924 = vpop.f32.mrf.mxu0
        %v925 = vadd.f32 %v386, %v924
        %v926 = vpop.f32.mrf.mxu0
        %v927 = vadd.f32 %v382, %v926
        %v928 = vpop.f32.mrf.mxu0
        %v929 = vadd.f32 %v386, %v928
        %930 = vmatprep.mubr.bf16.mxu0 0
        %931 = vmatmul.mubr.bf16.gmra.mxu0 %v451
        %v932 = vpop.f32.mrf.mxu0
        %v933 = vadd.f32 %v382, %v932
        %v934 = vpop.f32.mrf.mxu0
        %v935 = vadd.f32 %v386, %v934
        %v936 = vpop.f32.mrf.mxu0
        %v937 = vadd.f32 %v382, %v936
        %v938 = vpop.f32.mrf.mxu0
        %v939 = vadd.f32 %v386, %v938
        %940 = vmatprep.mubr.bf16.mxu0 0
        %941 = vmatmul.mubr.bf16.gmra.mxu0 %v454
        %v942 = vpop.f32.mrf.mxu0
        %v943 = vadd.f32 %v382, %v942
        %v944 = vpop.f32.mrf.mxu0
        %v945 = vadd.f32 %v386, %v944
        %v946 = vpop.f32.mrf.mxu0
        %v947 = vadd.f32 %v382, %v946
        %v948 = vpop.f32.mrf.mxu0
        %v949 = vadd.f32 %v386, %v948
        %950 = vmatprep.mubr.bf16.mxu0 0
        %951 = vmatmul.mubr.bf16.gmra.mxu0 %v457
        %v952 = vpop.f32.mrf.mxu0
        %v953 = vadd.f32 %v382, %v952
        %v954 = vpop.f32.mrf.mxu0
        %v955 = vadd.f32 %v386, %v954
        %v956 = vpop.f32.mrf.mxu0
        %v957 = vadd.f32 %v382, %v956
        %v958 = vpop.f32.mrf.mxu0
        %v959 = vadd.f32 %v386, %v958
        %960 = vmatprep.mubr.bf16.mxu0 0
        %961 = vmatmul.mubr.bf16.gmra.mxu0 %v460
        %v962 = vpop.f32.mrf.mxu0
        %v963 = vadd.f32 %v382, %v962
        %v964 = vpop.f32.mrf.mxu0
        %v965 = vadd.f32 %v386, %v964
        %v966 = vpop.f32.mrf.mxu0
        %v967 = vadd.f32 %v382, %v966
        %v968 = vpop.f32.mrf.mxu0
        %v969 = vadd.f32 %v386, %v968
        %970 = vmatprep.mubr.bf16.mxu0 0
        %971 = vmatmul.mubr.bf16.gmra.mxu0 %v463
        %v972 = vpop.f32.mrf.mxu0
        %v973 = vadd.f32 %v382, %v972
        %v974 = vpop.f32.mrf.mxu0
        %v975 = vadd.f32 %v386, %v974
        %v976 = vpop.f32.mrf.mxu0
        %v977 = vadd.f32 %v382, %v976
        %v978 = vpop.f32.mrf.mxu0
        %v979 = vadd.f32 %v386, %v978
        %980 = vmatprep.mubr.bf16.mxu0 0
        %981 = vmatmul.mubr.bf16.gmra.mxu0 %v466
        %v982 = vpop.f32.mrf.mxu0
        %v983 = vadd.f32 %v382, %v982
        %v984 = vpop.f32.mrf.mxu0
        %v985 = vadd.f32 %v386, %v984
        %v986 = vpop.f32.mrf.mxu0
        %v987 = vadd.f32 %v382, %v986
        %v988 = vpop.f32.mrf.mxu0
        %v989 = vadd.f32 %v386, %v988
        %990 = vmatprep.mubr.bf16.mxu0 0
        %991 = vmatmul.mubr.bf16.gmra.mxu0 %v469
        %v992 = vpop.f32.mrf.mxu0
        %v993 = vadd.f32 %v382, %v992
        %v994 = vpop.f32.mrf.mxu0
        %v995 = vadd.f32 %v386, %v994
        %v996 = vpop.f32.mrf.mxu0
        %v997 = vadd.f32 %v382, %v996
        %v998 = vpop.f32.mrf.mxu0
        %v999 = vadd.f32 %v386, %v998
        %1000 = vmatprep.mubr.bf16.mxu0 0
        %1001 = vmatmul.mubr.bf16.gmra.mxu0 %v472
        %v1002 = vpop.f32.mrf.mxu0
        %v1003 = vadd.f32 %v382, %v1002
        %v1004 = vpop.f32.mrf.mxu0
        %v1005 = vadd.f32 %v386, %v1004
        %v1006 = vpop.f32.mrf.mxu0
        %v1007 = vadd.f32 %v382, %v1006
        %v1008 = vpop.f32.mrf.mxu0
        %v1009 = vadd.f32 %v386, %v1008
        %1010 = vmatprep.mubr.bf16.mxu0 0
        %1011 = vmatmul.mubr.bf16.gmra.mxu0 %v475
        %v1012 = vpop.f32.mrf.mxu0
        %v1013 = vadd.f32 %v382, %v1012
        %v1014 = vpop.f32.mrf.mxu0
        %v1015 = vadd.f32 %v386, %v1014
        %v1016 = vpop.f32.mrf.mxu0
        %v1017 = vadd.f32 %v382, %v1016
        %v1018 = vpop.f32.mrf.mxu0
        %v1019 = vadd.f32 %v386, %v1018
        %1020 = vmatprep.mubr.bf16.mxu0 0
        %1021 = vmatmul.mubr.bf16.gmra.mxu0 %v478
        %v1022 = vpop.f32.mrf.mxu0
        %v1023 = vadd.f32 %v382, %v1022
        %v1024 = vpop.f32.mrf.mxu0
        %v1025 = vadd.f32 %v386, %v1024
        %v1026 = vpop.f32.mrf.mxu0
        %v1027 = vadd.f32 %v382, %v1026
        %v1028 = vpop.f32.mrf.mxu0
        %v1029 = vadd.f32 %v386, %v1028
        %1030 = vmatprep.mubr.bf16.mxu0 0
        %1031 = vmatmul.mubr.bf16.gmra.mxu0 %v481
        %v1032 = vpop.f32.mrf.mxu0
        %v1033 = vadd.f32 %v382, %v1032
        %v1034 = vpop.f32.mrf.mxu0
        %v1035 = vadd.f32 %v386, %v1034
        %v1036 = vpop.f32.mrf.mxu0
        %v1037 = vadd.f32 %v382, %v1036
        %v1038 = vpop.f32.mrf.mxu0
        %v1039 = vadd.f32 %v386, %v1038
        %1040 = vmatprep.mubr.bf16.mxu0 0
        %1041 = vmatmul.mubr.bf16.gmra.mxu0 %v484
        %v1042 = vpop.f32.mrf.mxu0
        %v1043 = vadd.f32 %v382, %v1042
        %v1044 = vpop.f32.mrf.mxu0
        %v1045 = vadd.f32 %v386, %v1044
        %v1046 = vpop.f32.mrf.mxu0
        %v1047 = vadd.f32 %v382, %v1046
        %v1048 = vpop.f32.mrf.mxu0
        %v1049 = vadd.f32 %v386, %v1048
        %1050 = vmatprep.mubr.bf16.mxu0 0
        %1051 = vmatmul.mubr.bf16.gmra.mxu0 %v487
        %v1052 = vpop.f32.mrf.mxu0
        %v1053 = vadd.f32 %v382, %v1052
        %v1054 = vpop.f32.mrf.mxu0
        %v1055 = vadd.f32 %v386, %v1054
        %v1056 = vpop.f32.mrf.mxu0
        %v1057 = vadd.f32 %v382, %v1056
        %v1058 = vpop.f32.mrf.mxu0
        %v1059 = vadd.f32 %v386, %v1058
        %1060 = vmatprep.mubr.bf16.mxu0 0
        %1061 = vmatmul.mubr.bf16.gmra.mxu0 %v490
        %v1062 = vpop.f32.mrf.mxu0
        %v1063 = vadd.f32 %v382, %v1062
        %v1064 = vpop.f32.mrf.mxu0
        %v1065 = vadd.f32 %v386, %v1064
        %v1066 = vpop.f32.mrf.mxu0
        %v1067 = vadd.f32 %v382, %v1066
        %v1068 = vpop.f32.mrf.mxu0
        %v1069 = vadd.f32 %v386, %v1068
        %1070 = vdwg.mxu0
        %1071 = vmatprep.subr.bf16.mxu0 0
        %1072 = vmatpush1.bf16.msra.mxu0 0
        %1073 = vmatprep.subr.bf16.mxu0 0
        %1074 = vmatpush1.bf16.msra.mxu0 0
        %1075 = vmatprep.subr.bf16.mxu0 0
        %1076 = vmatpush1.bf16.msra.mxu0 0
        %1077 = vmatprep.subr.bf16.mxu0 0
        %1078 = vmatpush1.bf16.msra.mxu0 0
        %1079 = vmatprep.subr.bf16.mxu0 0
        %1080 = vmatpush1.bf16.msra.mxu0 0
        %1081 = vmatprep.subr.bf16.mxu0 0
        %1082 = vmatpush1.bf16.msra.mxu0 0
        %1083 = vmatprep.subr.bf16.mxu0 0
        %1084 = vmatpush1.bf16.msra.mxu0 0
        %1085 = vmatprep.subr.bf16.mxu0 %v434
        %1086 = vmatpush1.bf16.msra.mxu0 %v433
        %1087 = vmatprep.subr.bf16.mxu0 0
        %1088 = vmatpush2.bf16.msra.mxu0 0
        %1089 = vmatprep.subr.bf16.mxu0 0
        %1090 = vmatpush2.bf16.msra.mxu0 0
        %1091 = vmatprep.subr.bf16.mxu0 0
        %1092 = vmatpush2.bf16.msra.mxu0 0
        %1093 = vmatprep.subr.bf16.mxu0 0
        %1094 = vmatpush2.bf16.msra.mxu0 0
        %1095 = vmatprep.subr.bf16.mxu0 0
        %1096 = vmatpush2.bf16.msra.mxu0 0
        %1097 = vmatprep.subr.bf16.mxu0 0
        %1098 = vmatpush2.bf16.msra.mxu0 0
        %1099 = vmatprep.subr.bf16.mxu0 0
        %1100 = vmatpush2.bf16.msra.mxu0 0
        %1101 = vmatprep.subr.bf16.mxu0 0
        %1102 = vmatpush2.bf16.msra.mxu0 0
        %1103 = vmatprep.mubr.bf16.mxu0 0
        %1104 = vmatmul.mubr.bf16.gmra.mxu0 %v445
        %v1105 = vpop.f32.mrf.mxu0
        %v1106 = vadd.f32 %v390, %v1105
        %v1107 = vpop.f32.mrf.mxu0
        %v1108 = vadd.f32 %v394, %v1107
        %v1109 = vpop.f32.mrf.mxu0
        %v1110 = vadd.f32 %v390, %v1109
        %v1111 = vpop.f32.mrf.mxu0
        %v1112 = vadd.f32 %v394, %v1111
        %1113 = vmatprep.mubr.bf16.mxu0 0
        %1114 = vmatmul.mubr.bf16.gmra.mxu0 %v448
        %v1115 = vpop.f32.mrf.mxu0
        %v1116 = vadd.f32 %v390, %v1115
        %v1117 = vpop.f32.mrf.mxu0
        %v1118 = vadd.f32 %v394, %v1117
        %v1119 = vpop.f32.mrf.mxu0
        %v1120 = vadd.f32 %v390, %v1119
        %v1121 = vpop.f32.mrf.mxu0
        %v1122 = vadd.f32 %v394, %v1121
        %1123 = vmatprep.mubr.bf16.mxu0 0
        %1124 = vmatmul.mubr.bf16.gmra.mxu0 %v451
        %v1125 = vpop.f32.mrf.mxu0
        %v1126 = vadd.f32 %v390, %v1125
        %v1127 = vpop.f32.mrf.mxu0
        %v1128 = vadd.f32 %v394, %v1127
        %v1129 = vpop.f32.mrf.mxu0
        %v1130 = vadd.f32 %v390, %v1129
        %v1131 = vpop.f32.mrf.mxu0
        %v1132 = vadd.f32 %v394, %v1131
        %1133 = vmatprep.mubr.bf16.mxu0 0
        %1134 = vmatmul.mubr.bf16.gmra.mxu0 %v454
        %v1135 = vpop.f32.mrf.mxu0
        %v1136 = vadd.f32 %v390, %v1135
        %v1137 = vpop.f32.mrf.mxu0
        %v1138 = vadd.f32 %v394, %v1137
        %v1139 = vpop.f32.mrf.mxu0
        %v1140 = vadd.f32 %v390, %v1139
        %v1141 = vpop.f32.mrf.mxu0
        %v1142 = vadd.f32 %v394, %v1141
        %1143 = vmatprep.mubr.bf16.mxu0 0
        %1144 = vmatmul.mubr.bf16.gmra.mxu0 %v457
        %v1145 = vpop.f32.mrf.mxu0
        %v1146 = vadd.f32 %v390, %v1145
        %v1147 = vpop.f32.mrf.mxu0
        %v1148 = vadd.f32 %v394, %v1147
        %v1149 = vpop.f32.mrf.mxu0
        %v1150 = vadd.f32 %v390, %v1149
        %v1151 = vpop.f32.mrf.mxu0
        %v1152 = vadd.f32 %v394, %v1151
        %1153 = vmatprep.mubr.bf16.mxu0 0
        %1154 = vmatmul.mubr.bf16.gmra.mxu0 %v460
        %v1155 = vpop.f32.mrf.mxu0
        %v1156 = vadd.f32 %v390, %v1155
        %v1157 = vpop.f32.mrf.mxu0
        %v1158 = vadd.f32 %v394, %v1157
        %v1159 = vpop.f32.mrf.mxu0
        %v1160 = vadd.f32 %v390, %v1159
        %v1161 = vpop.f32.mrf.mxu0
        %v1162 = vadd.f32 %v394, %v1161
        %1163 = vmatprep.mubr.bf16.mxu0 0
        %1164 = vmatmul.mubr.bf16.gmra.mxu0 %v463
        %v1165 = vpop.f32.mrf.mxu0
        %v1166 = vadd.f32 %v390, %v1165
        %v1167 = vpop.f32.mrf.mxu0
        %v1168 = vadd.f32 %v394, %v1167
        %v1169 = vpop.f32.mrf.mxu0
        %v1170 = vadd.f32 %v390, %v1169
        %v1171 = vpop.f32.mrf.mxu0
        %v1172 = vadd.f32 %v394, %v1171
        %1173 = vmatprep.mubr.bf16.mxu0 0
        %1174 = vmatmul.mubr.bf16.gmra.mxu0 %v466
        %v1175 = vpop.f32.mrf.mxu0
        %v1176 = vadd.f32 %v390, %v1175
        %v1177 = vpop.f32.mrf.mxu0
        %v1178 = vadd.f32 %v394, %v1177
        %v1179 = vpop.f32.mrf.mxu0
        %v1180 = vadd.f32 %v390, %v1179
        %v1181 = vpop.f32.mrf.mxu0
        %v1182 = vadd.f32 %v394, %v1181
        %1183 = vmatprep.mubr.bf16.mxu0 0
        %1184 = vmatmul.mubr.bf16.gmra.mxu0 %v469
        %v1185 = vpop.f32.mrf.mxu0
        %v1186 = vadd.f32 %v390, %v1185
        %v1187 = vpop.f32.mrf.mxu0
        %v1188 = vadd.f32 %v394, %v1187
        %v1189 = vpop.f32.mrf.mxu0
        %v1190 = vadd.f32 %v390, %v1189
        %v1191 = vpop.f32.mrf.mxu0
        %v1192 = vadd.f32 %v394, %v1191
        %1193 = vmatprep.mubr.bf16.mxu0 0
        %1194 = vmatmul.mubr.bf16.gmra.mxu0 %v472
        %v1195 = vpop.f32.mrf.mxu0
        %v1196 = vadd.f32 %v390, %v1195
        %v1197 = vpop.f32.mrf.mxu0
        %v1198 = vadd.f32 %v394, %v1197
        %v1199 = vpop.f32.mrf.mxu0
        %v1200 = vadd.f32 %v390, %v1199
        %v1201 = vpop.f32.mrf.mxu0
        %v1202 = vadd.f32 %v394, %v1201
        %1203 = vmatprep.mubr.bf16.mxu0 0
        %1204 = vmatmul.mubr.bf16.gmra.mxu0 %v475
        %v1205 = vpop.f32.mrf.mxu0
        %v1206 = vadd.f32 %v390, %v1205
        %v1207 = vpop.f32.mrf.mxu0
        %v1208 = vadd.f32 %v394, %v1207
        %v1209 = vpop.f32.mrf.mxu0
        %v1210 = vadd.f32 %v390, %v1209
        %v1211 = vpop.f32.mrf.mxu0
        %v1212 = vadd.f32 %v394, %v1211
        %1213 = vmatprep.mubr.bf16.mxu0 0
        %1214 = vmatmul.mubr.bf16.gmra.mxu0 %v478
        %v1215 = vpop.f32.mrf.mxu0
        %v1216 = vadd.f32 %v390, %v1215
        %v1217 = vpop.f32.mrf.mxu0
        %v1218 = vadd.f32 %v394, %v1217
        %v1219 = vpop.f32.mrf.mxu0
        %v1220 = vadd.f32 %v390, %v1219
        %v1221 = vpop.f32.mrf.mxu0
        %v1222 = vadd.f32 %v394, %v1221
        %1223 = vmatprep.mubr.bf16.mxu0 0
        %1224 = vmatmul.mubr.bf16.gmra.mxu0 %v481
        %v1225 = vpop.f32.mrf.mxu0
        %v1226 = vadd.f32 %v390, %v1225
        %v1227 = vpop.f32.mrf.mxu0
        %v1228 = vadd.f32 %v394, %v1227
        %v1229 = vpop.f32.mrf.mxu0
        %v1230 = vadd.f32 %v390, %v1229
        %v1231 = vpop.f32.mrf.mxu0
        %v1232 = vadd.f32 %v394, %v1231
        %1233 = vmatprep.mubr.bf16.mxu0 0
        %1234 = vmatmul.mubr.bf16.gmra.mxu0 %v484
        %v1235 = vpop.f32.mrf.mxu0
        %v1236 = vadd.f32 %v390, %v1235
        %v1237 = vpop.f32.mrf.mxu0
        %v1238 = vadd.f32 %v394, %v1237
        %v1239 = vpop.f32.mrf.mxu0
        %v1240 = vadd.f32 %v390, %v1239
        %v1241 = vpop.f32.mrf.mxu0
        %v1242 = vadd.f32 %v394, %v1241
        %1243 = vmatprep.mubr.bf16.mxu0 0
        %1244 = vmatmul.mubr.bf16.gmra.mxu0 %v487
        %v1245 = vpop.f32.mrf.mxu0
        %v1246 = vadd.f32 %v390, %v1245
        %v1247 = vpop.f32.mrf.mxu0
        %v1248 = vadd.f32 %v394, %v1247
        %v1249 = vpop.f32.mrf.mxu0
        %v1250 = vadd.f32 %v390, %v1249
        %v1251 = vpop.f32.mrf.mxu0
        %v1252 = vadd.f32 %v394, %v1251
        %1253 = vmatprep.mubr.bf16.mxu0 0
        %1254 = vmatmul.mubr.bf16.gmra.mxu0 %v490
        %v1255 = vpop.f32.mrf.mxu0
        %v1256 = vadd.f32 %v390, %v1255
        %v1257 = vpop.f32.mrf.mxu0
        %v1258 = vadd.f32 %v394, %v1257
        %v1259 = vpop.f32.mrf.mxu0
        %v1260 = vadd.f32 %v390, %v1259
        %v1261 = vpop.f32.mrf.mxu0
        %v1262 = vadd.f32 %v394, %v1261
        %1263 = vdwg.mxu0
        %v1264 = vtanh.pop %v527
        %v1265 = vtanh.pop %v529
        %v1266 = vtanh.pop %v720
        %v1267 = vtanh.pop %v722
        %v1268 = vtanh.pop %v913
        %v1269 = vtanh.pop %v915
        %v1270 = vtanh.pop %v1106
        %v1271 = vtanh.pop %v1108
        %v1272 = vtanh.pop %v531
        %v1273 = vtanh.pop %v533
        %v1274 = vtanh.pop %v724
        %v1275 = vtanh.pop %v726
        %v1276 = vtanh.pop %v917
        %v1277 = vtanh.pop %v919
        %v1278 = vtanh.pop %v1110
        %v1279 = vtanh.pop %v1112
        %v1280 = vtanh.pop %v537
        %v1281 = vtanh.pop %v539
        %v1282 = vtanh.pop %v730
        %v1283 = vtanh.pop %v732
        %v1284 = vtanh.pop %v923
        %v1285 = vtanh.pop %v925
        %v1286 = vtanh.pop %v1116
        %v1287 = vtanh.pop %v1118
        %v1288 = vtanh.pop %v541
        %v1289 = vtanh.pop %v543
        %v1290 = vtanh.pop %v734
        %v1291 = vtanh.pop %v736
        %v1292 = vtanh.pop %v927
        %v1293 = vtanh.pop %v929
        %v1294 = vtanh.pop %v1120
        %v1295 = vtanh.pop %v1122
        %v1296 = vtanh.pop %v547
        %v1297 = vtanh.pop %v549
        %v1298 = vtanh.pop %v740
        %v1299 = vtanh.pop %v742
        %v1300 = vtanh.pop %v933
        %v1301 = vtanh.pop %v935
        %v1302 = vtanh.pop %v1126
        %v1303 = vtanh.pop %v1128
        %v1304 = vtanh.pop %v551
        %v1305 = vtanh.pop %v553
        %v1306 = vtanh.pop %v744
        %v1307 = vtanh.pop %v746
        %v1308 = vtanh.pop %v937
        %v1309 = vtanh.pop %v939
        %v1310 = vtanh.pop %v1130
        %v1311 = vtanh.pop %v1132
        %v1312 = vtanh.pop %v557
        %v1313 = vtanh.pop %v559
        %v1314 = vtanh.pop %v750
        %v1315 = vtanh.pop %v752
        %v1316 = vtanh.pop %v943
        %v1317 = vtanh.pop %v945
        %v1318 = vtanh.pop %v1136
        %v1319 = vtanh.pop %v1138
        %v1320 = vtanh.pop %v561
        %v1321 = vtanh.pop %v563
        %v1322 = vtanh.pop %v754
        %v1323 = vtanh.pop %v756
        %v1324 = vtanh.pop %v947
        %v1325 = vtanh.pop %v949
        %v1326 = vtanh.pop %v1140
        %v1327 = vtanh.pop %v1142
        %v1328 = vtanh.pop %v567
        %v1329 = vtanh.pop %v569
        %v1330 = vtanh.pop %v760
        %v1331 = vtanh.pop %v762
        %v1332 = vtanh.pop %v953
        %v1333 = vtanh.pop %v955
        %v1334 = vtanh.pop %v1146
        %v1335 = vtanh.pop %v1148
        %v1336 = vtanh.pop %v571
        %v1337 = vtanh.pop %v573
        %v1338 = vtanh.pop %v764
        %v1339 = vtanh.pop %v766
        %v1340 = vtanh.pop %v957
        %v1341 = vtanh.pop %v959
        %v1342 = vtanh.pop %v1150
        %v1343 = vtanh.pop %v1152
        %v1344 = vtanh.pop %v577
        %v1345 = vtanh.pop %v579
        %v1346 = vtanh.pop %v770
        %v1347 = vtanh.pop %v772
        %v1348 = vtanh.pop %v963
        %v1349 = vtanh.pop %v965
        %v1350 = vtanh.pop %v1156
        %v1351 = vtanh.pop %v1158
        %v1352 = vtanh.pop %v581
        %v1353 = vtanh.pop %v583
        %v1354 = vtanh.pop %v774
        %v1355 = vtanh.pop %v776
        %v1356 = vtanh.pop %v967
        %v1357 = vtanh.pop %v969
        %v1358 = vtanh.pop %v1160
        %v1359 = vtanh.pop %v1162
        %v1360 = vtanh.pop %v587
        %v1361 = vtanh.pop %v589
        %v1362 = vtanh.pop %v780
        %v1363 = vtanh.pop %v782
        %v1364 = vtanh.pop %v973
        %v1365 = vtanh.pop %v975
        %v1366 = vtanh.pop %v1166
        %v1367 = vtanh.pop %v1168
        %v1368 = vtanh.pop %v591
        %v1369 = vtanh.pop %v593
        %v1370 = vtanh.pop %v784
        %v1371 = vtanh.pop %v786
        %v1372 = vtanh.pop %v977
        %v1373 = vtanh.pop %v979
        %v1374 = vtanh.pop %v1170
        %v1375 = vtanh.pop %v1172
        %v1376 = vtanh.pop %v597
        %v1377 = vtanh.pop %v599
        %v1378 = vtanh.pop %v790
        %v1379 = vtanh.pop %v792
        %v1380 = vtanh.pop %v983
        %v1381 = vtanh.pop %v985
        %v1382 = vtanh.pop %v1176
        %v1383 = vtanh.pop %v1178
        %v1384 = vtanh.pop %v601
        %v1385 = vtanh.pop %v603
        %v1386 = vtanh.pop %v794
        %v1387 = vtanh.pop %v796
        %v1388 = vtanh.pop %v987
        %v1389 = vtanh.pop %v989
        %v1390 = vtanh.pop %v1180
        %v1391 = vtanh.pop %v1182
        %v1392 = vtanh.pop %v607
        %v1393 = vtanh.pop %v609
        %v1394 = vtanh.pop %v800
        %v1395 = vtanh.pop %v802
        %v1396 = vtanh.pop %v993
        %v1397 = vtanh.pop %v995
        %v1398 = vtanh.pop %v1186
        %v1399 = vtanh.pop %v1188
        %v1400 = vtanh.pop %v611
        %v1401 = vtanh.pop %v613
        %v1402 = vtanh.pop %v804
        %v1403 = vtanh.pop %v806
        %v1404 = vtanh.pop %v997
        %v1405 = vtanh.pop %v999
        %v1406 = vtanh.pop %v1190
        %v1407 = vtanh.pop %v1192
        %v1408 = vtanh.pop %v617
        %v1409 = vtanh.pop %v619
        %v1410 = vtanh.pop %v810
        %v1411 = vtanh.pop %v812
        %v1412 = vtanh.pop %v1003
        %v1413 = vtanh.pop %v1005
        %v1414 = vtanh.pop %v1196
        %v1415 = vtanh.pop %v1198
        %v1416 = vtanh.pop %v621
        %v1417 = vtanh.pop %v623
        %v1418 = vtanh.pop %v814
        %v1419 = vtanh.pop %v816
        %v1420 = vtanh.pop %v1007
        %v1421 = vtanh.pop %v1009
        %v1422 = vtanh.pop %v1200
        %v1423 = vtanh.pop %v1202
        %v1424 = vtanh.pop %v627
        %v1425 = vtanh.pop %v629
        %v1426 = vtanh.pop %v820
        %v1427 = vtanh.pop %v822
        %v1428 = vtanh.pop %v1013
        %v1429 = vtanh.pop %v1015
        %v1430 = vtanh.pop %v1206
        %v1431 = vtanh.pop %v1208
        %v1432 = vtanh.pop %v631
        %v1433 = vtanh.pop %v633
        %v1434 = vtanh.pop %v824
        %v1435 = vtanh.pop %v826
        %v1436 = vtanh.pop %v1017
        %v1437 = vtanh.pop %v1019
        %v1438 = vtanh.pop %v1210
        %v1439 = vtanh.pop %v1212
        %v1440 = vtanh.pop %v637
        %v1441 = vtanh.pop %v639
        %v1442 = vtanh.pop %v830
        %v1443 = vtanh.pop %v832
        %v1444 = vtanh.pop %v1023
        %v1445 = vtanh.pop %v1025
        %v1446 = vtanh.pop %v1216
        %v1447 = vtanh.pop %v1218
        %v1448 = vtanh.pop %v641
        %v1449 = vtanh.pop %v643
        %v1450 = vtanh.pop %v834
        %v1451 = vtanh.pop %v836
        %v1452 = vtanh.pop %v1027
        %v1453 = vtanh.pop %v1029
        %v1454 = vtanh.pop %v1220
        %v1455 = vtanh.pop %v1222
        %v1456 = vtanh.pop %v647
        %v1457 = vtanh.pop %v649
        %v1458 = vtanh.pop %v840
        %v1459 = vtanh.pop %v842
        %v1460 = vtanh.pop %v1033
        %v1461 = vtanh.pop %v1035
        %v1462 = vtanh.pop %v1226
        %v1463 = vtanh.pop %v1228
        %v1464 = vtanh.pop %v651
        %v1465 = vtanh.pop %v653
        %v1466 = vtanh.pop %v844
        %v1467 = vtanh.pop %v846
        %v1468 = vtanh.pop %v1037
        %v1469 = vtanh.pop %v1039
        %v1470 = vtanh.pop %v1230
        %v1471 = vtanh.pop %v1232
        %v1472 = vtanh.pop %v657
        %v1473 = vtanh.pop %v659
        %v1474 = vtanh.pop %v850
        %v1475 = vtanh.pop %v852
        %v1476 = vtanh.pop %v1043
        %v1477 = vtanh.pop %v1045
        %v1478 = vtanh.pop %v1236
        %v1479 = vtanh.pop %v1238
        %v1480 = vtanh.pop %v661
        %v1481 = vtanh.pop %v663
        %v1482 = vtanh.pop %v854
        %v1483 = vtanh.pop %v856
        %v1484 = vtanh.pop %v1047
        %v1485 = vtanh.pop %v1049
        %v1486 = vtanh.pop %v1240
        %v1487 = vtanh.pop %v1242
        %v1488 = vtanh.pop %v667
        %v1489 = vtanh.pop %v669
        %v1490 = vtanh.pop %v860
        %v1491 = vtanh.pop %v862
        %v1492 = vtanh.pop %v1053
        %v1493 = vtanh.pop %v1055
        %v1494 = vtanh.pop %v1246
        %v1495 = vtanh.pop %v1248
        %v1496 = vtanh.pop %v671
        %v1497 = vtanh.pop %v673
        %v1498 = vtanh.pop %v864
        %v1499 = vtanh.pop %v866
        %v1500 = vtanh.pop %v1057
        %v1501 = vtanh.pop %v1059
        %v1502 = vtanh.pop %v1250
        %v1503 = vtanh.pop %v1252
        %v1504 = vtanh.pop %v677
        %v1505 = vtanh.pop %v679
        %v1506 = vtanh.pop %v870
        %v1507 = vtanh.pop %v872
        %v1508 = vtanh.pop %v1063
        %v1509 = vtanh.pop %v1065
        %v1510 = vtanh.pop %v1256
        %v1511 = vtanh.pop %v1258
        %v1512 = vtanh.pop %v681
        %v1513 = vtanh.pop %v683
        %v1514 = vtanh.pop %v874
        %v1515 = vtanh.pop %v876
        %v1516 = vtanh.pop %v1067
        %v1517 = vtanh.pop %v1069
        %v1518 = vtanh.pop %v1260
        %v1519 = vtanh.pop %v1262
        %v1520 = vpack.c.bf16 %v1272, %v1264
        %v1521 = vpack.c.bf16 %v1273, %v1265
        %v1522 = vpack.c.bf16 %v1274, %v1266
        %v1523 = vpack.c.bf16 %v1275, %v1267
        %v1524 = vpack.c.bf16 %v1288, %v1280
        %v1525 = vpack.c.bf16 %v1289, %v1281
        %v1526 = vpack.c.bf16 %v1290, %v1282
        %v1527 = vpack.c.bf16 %v1291, %v1283
        %v1528 = vpack.c.bf16 %v1304, %v1296
        %v1529 = vpack.c.bf16 %v1305, %v1297
        %v1530 = vpack.c.bf16 %v1306, %v1298
        %v1531 = vpack.c.bf16 %v1307, %v1299
        %v1532 = vpack.c.bf16 %v1320, %v1312
        %v1533 = vpack.c.bf16 %v1321, %v1313
        %v1534 = vpack.c.bf16 %v1322, %v1314
        %v1535 = vpack.c.bf16 %v1323, %v1315
        %v1536 = vpack.c.bf16 %v1336, %v1328
        %v1537 = vpack.c.bf16 %v1337, %v1329
        %v1538 = vpack.c.bf16 %v1338, %v1330
        %v1539 = vpack.c.bf16 %v1339, %v1331
        %v1540 = vpack.c.bf16 %v1352, %v1344
        %v1541 = vpack.c.bf16 %v1353, %v1345
        %v1542 = vpack.c.bf16 %v1354, %v1346
        %v1543 = vpack.c.bf16 %v1355, %v1347
        %v1544 = vpack.c.bf16 %v1368, %v1360
        %v1545 = vpack.c.bf16 %v1369, %v1361
        %v1546 = vpack.c.bf16 %v1370, %v1362
        %v1547 = vpack.c.bf16 %v1371, %v1363
        %v1548 = vpack.c.bf16 %v1384, %v1376
        %v1549 = vpack.c.bf16 %v1385, %v1377
        %v1550 = vpack.c.bf16 %v1386, %v1378
        %v1551 = vpack.c.bf16 %v1387, %v1379
        %v1552 = vpack.c.bf16 %v1400, %v1392
        %v1553 = vpack.c.bf16 %v1401, %v1393
        %v1554 = vpack.c.bf16 %v1402, %v1394
        %v1555 = vpack.c.bf16 %v1403, %v1395
        %v1556 = vpack.c.bf16 %v1416, %v1408
        %v1557 = vpack.c.bf16 %v1417, %v1409
        %v1558 = vpack.c.bf16 %v1418, %v1410
        %v1559 = vpack.c.bf16 %v1419, %v1411
        %v1560 = vpack.c.bf16 %v1432, %v1424
        %v1561 = vpack.c.bf16 %v1433, %v1425
        %v1562 = vpack.c.bf16 %v1434, %v1426
        %v1563 = vpack.c.bf16 %v1435, %v1427
        %v1564 = vpack.c.bf16 %v1448, %v1440
        %v1565 = vpack.c.bf16 %v1449, %v1441
        %v1566 = vpack.c.bf16 %v1450, %v1442
        %v1567 = vpack.c.bf16 %v1451, %v1443
        %v1568 = vpack.c.bf16 %v1464, %v1456
        %v1569 = vpack.c.bf16 %v1465, %v1457
        %v1570 = vpack.c.bf16 %v1466, %v1458
        %v1571 = vpack.c.bf16 %v1467, %v1459
        %v1572 = vpack.c.bf16 %v1480, %v1472
        %v1573 = vpack.c.bf16 %v1481, %v1473
        %v1574 = vpack.c.bf16 %v1482, %v1474
        %v1575 = vpack.c.bf16 %v1483, %v1475
        %v1576 = vpack.c.bf16 %v1496, %v1488
        %v1577 = vpack.c.bf16 %v1497, %v1489
        %v1578 = vpack.c.bf16 %v1498, %v1490
        %v1579 = vpack.c.bf16 %v1499, %v1491
        %v1580 = vpack.c.bf16 %v1512, %v1504
        %v1581 = vpack.c.bf16 %v1513, %v1505
        %v1582 = vpack.c.bf16 %v1514, %v1506
        %v1583 = vpack.c.bf16 %v1515, %v1507
        %v1584 = vpack.c.bf16 %v1276, %v1268
        %v1585 = vpack.c.bf16 %v1277, %v1269
        %v1586 = vpack.c.bf16 %v1278, %v1270
        %v1587 = vpack.c.bf16 %v1279, %v1271
        %v1588 = vpack.c.bf16 %v1292, %v1284
        %v1589 = vpack.c.bf16 %v1293, %v1285
        %v1590 = vpack.c.bf16 %v1294, %v1286
        %v1591 = vpack.c.bf16 %v1295, %v1287
        %v1592 = vpack.c.bf16 %v1308, %v1300
        %v1593 = vpack.c.bf16 %v1309, %v1301
        %v1594 = vpack.c.bf16 %v1310, %v1302
        %v1595 = vpack.c.bf16 %v1311, %v1303
        %v1596 = vpack.c.bf16 %v1324, %v1316
        %v1597 = vpack.c.bf16 %v1325, %v1317
        %v1598 = vpack.c.bf16 %v1326, %v1318
        %v1599 = vpack.c.bf16 %v1327, %v1319
        %v1600 = vpack.c.bf16 %v1340, %v1332
        %v1601 = vpack.c.bf16 %v1341, %v1333
        %v1602 = vpack.c.bf16 %v1342, %v1334
        %v1603 = vpack.c.bf16 %v1343, %v1335
        %v1604 = vpack.c.bf16 %v1356, %v1348
        %v1605 = vpack.c.bf16 %v1357, %v1349
        %v1606 = vpack.c.bf16 %v1358, %v1350
        %v1607 = vpack.c.bf16 %v1359, %v1351
        %v1608 = vpack.c.bf16 %v1372, %v1364
        %v1609 = vpack.c.bf16 %v1373, %v1365
        %v1610 = vpack.c.bf16 %v1374, %v1366
        %v1611 = vpack.c.bf16 %v1375, %v1367
        %v1612 = vpack.c.bf16 %v1388, %v1380
        %v1613 = vpack.c.bf16 %v1389, %v1381
        %v1614 = vpack.c.bf16 %v1390, %v1382
        %v1615 = vpack.c.bf16 %v1391, %v1383
        %v1616 = vpack.c.bf16 %v1404, %v1396
        %v1617 = vpack.c.bf16 %v1405, %v1397
        %v1618 = vpack.c.bf16 %v1406, %v1398
        %v1619 = vpack.c.bf16 %v1407, %v1399
        %v1620 = vpack.c.bf16 %v1420, %v1412
        %v1621 = vpack.c.bf16 %v1421, %v1413
        %v1622 = vpack.c.bf16 %v1422, %v1414
        %v1623 = vpack.c.bf16 %v1423, %v1415
        %v1624 = vpack.c.bf16 %v1436, %v1428
        %v1625 = vpack.c.bf16 %v1437, %v1429
        %v1626 = vpack.c.bf16 %v1438, %v1430
        %v1627 = vpack.c.bf16 %v1439, %v1431
        %v1628 = vpack.c.bf16 %v1452, %v1444
        %v1629 = vpack.c.bf16 %v1453, %v1445
        %v1630 = vpack.c.bf16 %v1454, %v1446
        %v1631 = vpack.c.bf16 %v1455, %v1447
        %v1632 = vpack.c.bf16 %v1468, %v1460
        %v1633 = vpack.c.bf16 %v1469, %v1461
        %v1634 = vpack.c.bf16 %v1470, %v1462
        %v1635 = vpack.c.bf16 %v1471, %v1463
        %v1636 = vpack.c.bf16 %v1484, %v1476
        %v1637 = vpack.c.bf16 %v1485, %v1477
        %v1638 = vpack.c.bf16 %v1486, %v1478
        %v1639 = vpack.c.bf16 %v1487, %v1479
        %v1640 = vpack.c.bf16 %v1500, %v1492
        %v1641 = vpack.c.bf16 %v1501, %v1493
        %v1642 = vpack.c.bf16 %v1502, %v1494
        %v1643 = vpack.c.bf16 %v1503, %v1495
        %v1644 = vpack.c.bf16 %v1516, %v1508
        %v1645 = vpack.c.bf16 %v1517, %v1509
        %v1646 = vpack.c.bf16 %v1518, %v1510
        %v1647 = vpack.c.bf16 %v1519, %v1511
        %v1648 = vld [vmem:[#allocation2] sm:$0xff]
        %v1649 = vld [vmem:[#allocation2 + $0x8] sm:$0xff]
        %v1650 = vld [vmem:[#allocation2 + $0x10] sm:$0xff]
        %v1651 = vld [vmem:[#allocation2 + $0x18] sm:$0xff]
        %v1652 = vld [vmem:[#allocation2 + $0x20] sm:$0xff]
        %v1653 = vld [vmem:[#allocation2 + $0x28] sm:$0xff]
        %v1654 = vld [vmem:[#allocation2 + $0x30] sm:$0xff]
        %v1655 = vld [vmem:[#allocation2 + $0x38] sm:$0xff]
        %v1656 = vld [vmem:[#allocation2 + $0x40] sm:$0xff]
        %v1657 = vld [vmem:[#allocation2 + $0x48] sm:$0xff]
        %v1658 = vld [vmem:[#allocation2 + $0x50] sm:$0xff]
        %v1659 = vld [vmem:[#allocation2 + $0x58] sm:$0xff]
        %v1660 = vld [vmem:[#allocation2 + $0x60] sm:$0xff]
        %v1661 = vld [vmem:[#allocation2 + $0x68] sm:$0xff]
        %v1662 = vld [vmem:[#allocation2 + $0x70] sm:$0xff]
        %v1663 = vld [vmem:[#allocation2 + $0x78] sm:$0xff]
        %v1664 = vld [vmem:[#allocation2 + $0x80] sm:$0xff]
        %v1665 = vld [vmem:[#allocation2 + $0x88] sm:$0xff]
        %v1666 = vld [vmem:[#allocation2 + $0x90] sm:$0xff]
        %v1667 = vld [vmem:[#allocation2 + $0x98] sm:$0xff]
        %v1668 = vld [vmem:[#allocation2 + $0xa0] sm:$0xff]
        %v1669 = vld [vmem:[#allocation2 + $0xa8] sm:$0xff]
        %v1670 = vld [vmem:[#allocation2 + $0xb0] sm:$0xff]
        %v1671 = vld [vmem:[#allocation2 + $0xb8] sm:$0xff]
        %v1672 = vld [vmem:[#allocation2 + $0xc0] sm:$0xff]
        %v1673 = vld [vmem:[#allocation2 + $0xc8] sm:$0xff]
        %v1674 = vld [vmem:[#allocation2 + $0xd0] sm:$0xff]
        %v1675 = vld [vmem:[#allocation2 + $0xd8] sm:$0xff]
        %v1676 = vld [vmem:[#allocation2 + $0xe0] sm:$0xff]
        %v1677 = vld [vmem:[#allocation2 + $0xe8] sm:$0xff]
        %v1678 = vld [vmem:[#allocation2 + $0xf0] sm:$0xff]
        %v1679 = vld [vmem:[#allocation2 + $0xf8] sm:$0xff]
        %v1680 = vld [vmem:[#allocation2 + $0x100] sm:$0xff]
        %v1681 = vld [vmem:[#allocation2 + $0x108] sm:$0xff]
        %v1682 = vld [vmem:[#allocation2 + $0x110] sm:$0xff]
        %v1683 = vld [vmem:[#allocation2 + $0x118] sm:$0xff]
        %v1684 = vld [vmem:[#allocation2 + $0x120] sm:$0xff]
        %v1685 = vld [vmem:[#allocation2 + $0x128] sm:$0xff]
        %v1686 = vld [vmem:[#allocation2 + $0x130] sm:$0xff]
        %v1687 = vld [vmem:[#allocation2 + $0x138] sm:$0xff]
        %v1688 = vld [vmem:[#allocation2 + $0x140] sm:$0xff]
        %v1689 = vld [vmem:[#allocation2 + $0x148] sm:$0xff]
        %v1690 = vld [vmem:[#allocation2 + $0x150] sm:$0xff]
        %v1691 = vld [vmem:[#allocation2 + $0x158] sm:$0xff]
        %v1692 = vld [vmem:[#allocation2 + $0x160] sm:$0xff]
        %v1693 = vld [vmem:[#allocation2 + $0x168] sm:$0xff]
        %v1694 = vld [vmem:[#allocation2 + $0x170] sm:$0xff]
        %v1695 = vld [vmem:[#allocation2 + $0x178] sm:$0xff]
        %v1696 = vld [vmem:[#allocation2 + $0x180] sm:$0xff]
        %v1697 = vld [vmem:[#allocation2 + $0x188] sm:$0xff]
        %v1698 = vld [vmem:[#allocation2 + $0x190] sm:$0xff]
        %v1699 = vld [vmem:[#allocation2 + $0x198] sm:$0xff]
        %v1700 = vld [vmem:[#allocation2 + $0x1a0] sm:$0xff]
        %v1701 = vld [vmem:[#allocation2 + $0x1a8] sm:$0xff]
        %v1702 = vld [vmem:[#allocation2 + $0x1b0] sm:$0xff]
        %v1703 = vld [vmem:[#allocation2 + $0x1b8] sm:$0xff]
        %v1704 = vld [vmem:[#allocation2 + $0x1c0] sm:$0xff]
        %v1705 = vld [vmem:[#allocation2 + $0x1c8] sm:$0xff]
        %v1706 = vld [vmem:[#allocation2 + $0x1d0] sm:$0xff]
        %v1707 = vld [vmem:[#allocation2 + $0x1d8] sm:$0xff]
        %v1708 = vld [vmem:[#allocation2 + $0x1e0] sm:$0xff]
        %v1709 = vld [vmem:[#allocation2 + $0x1e8] sm:$0xff]
        %v1710 = vld [vmem:[#allocation2 + $0x1f0] sm:$0xff]
        %v1711 = vld [vmem:[#allocation2 + $0x1f8] sm:$0xff]
        %v1712 = vld [vmem:[#allocation2 + $0x200] sm:$0xff]
        %v1713 = vld [vmem:[#allocation2 + $0x208] sm:$0xff]
        %v1714 = vld [vmem:[#allocation2 + $0x210] sm:$0xff]
        %v1715 = vld [vmem:[#allocation2 + $0x218] sm:$0xff]
        %v1716 = vld [vmem:[#allocation2 + $0x220] sm:$0xff]
        %v1717 = vld [vmem:[#allocation2 + $0x228] sm:$0xff]
        %v1718 = vld [vmem:[#allocation2 + $0x230] sm:$0xff]
        %v1719 = vld [vmem:[#allocation2 + $0x238] sm:$0xff]
        %v1720 = vld [vmem:[#allocation2 + $0x240] sm:$0xff]
        %v1721 = vld [vmem:[#allocation2 + $0x248] sm:$0xff]
        %v1722 = vld [vmem:[#allocation2 + $0x250] sm:$0xff]
        %v1723 = vld [vmem:[#allocation2 + $0x258] sm:$0xff]
        %v1724 = vld [vmem:[#allocation2 + $0x260] sm:$0xff]
        %v1725 = vld [vmem:[#allocation2 + $0x268] sm:$0xff]
        %v1726 = vld [vmem:[#allocation2 + $0x270] sm:$0xff]
        %v1727 = vld [vmem:[#allocation2 + $0x278] sm:$0xff]
        %v1728 = vld [vmem:[#allocation2 + $0x280] sm:$0xff]
        %v1729 = vld [vmem:[#allocation2 + $0x288] sm:$0xff]
        %v1730 = vld [vmem:[#allocation2 + $0x290] sm:$0xff]
        %v1731 = vld [vmem:[#allocation2 + $0x298] sm:$0xff]
        %v1732 = vld [vmem:[#allocation2 + $0x2a0] sm:$0xff]
        %v1733 = vld [vmem:[#allocation2 + $0x2a8] sm:$0xff]
        %v1734 = vld [vmem:[#allocation2 + $0x2b0] sm:$0xff]
        %v1735 = vld [vmem:[#allocation2 + $0x2b8] sm:$0xff]
        %v1736 = vld [vmem:[#allocation2 + $0x2c0] sm:$0xff]
        %v1737 = vld [vmem:[#allocation2 + $0x2c8] sm:$0xff]
        %v1738 = vld [vmem:[#allocation2 + $0x2d0] sm:$0xff]
        %v1739 = vld [vmem:[#allocation2 + $0x2d8] sm:$0xff]
        %v1740 = vld [vmem:[#allocation2 + $0x2e0] sm:$0xff]
        %v1741 = vld [vmem:[#allocation2 + $0x2e8] sm:$0xff]
        %v1742 = vld [vmem:[#allocation2 + $0x2f0] sm:$0xff]
        %v1743 = vld [vmem:[#allocation2 + $0x2f8] sm:$0xff]
        %v1744 = vld [vmem:[#allocation2 + $0x300] sm:$0xff]
        %v1745 = vld [vmem:[#allocation2 + $0x308] sm:$0xff]
        %v1746 = vld [vmem:[#allocation2 + $0x310] sm:$0xff]
        %v1747 = vld [vmem:[#allocation2 + $0x318] sm:$0xff]
        %v1748 = vld [vmem:[#allocation2 + $0x320] sm:$0xff]
        %v1749 = vld [vmem:[#allocation2 + $0x328] sm:$0xff]
        %v1750 = vld [vmem:[#allocation2 + $0x330] sm:$0xff]
        %v1751 = vld [vmem:[#allocation2 + $0x338] sm:$0xff]
        %v1752 = vld [vmem:[#allocation2 + $0x340] sm:$0xff]
        %v1753 = vld [vmem:[#allocation2 + $0x348] sm:$0xff]
        %v1754 = vld [vmem:[#allocation2 + $0x350] sm:$0xff]
        %v1755 = vld [vmem:[#allocation2 + $0x358] sm:$0xff]
        %v1756 = vld [vmem:[#allocation2 + $0x360] sm:$0xff]
        %v1757 = vld [vmem:[#allocation2 + $0x368] sm:$0xff]
        %v1758 = vld [vmem:[#allocation2 + $0x370] sm:$0xff]
        %v1759 = vld [vmem:[#allocation2 + $0x378] sm:$0xff]
        %v1760 = vld [vmem:[#allocation2 + $0x380] sm:$0xff]
        %v1761 = vld [vmem:[#allocation2 + $0x388] sm:$0xff]
        %v1762 = vld [vmem:[#allocation2 + $0x390] sm:$0xff]
        %v1763 = vld [vmem:[#allocation2 + $0x398] sm:$0xff]
        %v1764 = vld [vmem:[#allocation2 + $0x3a0] sm:$0xff]
        %v1765 = vld [vmem:[#allocation2 + $0x3a8] sm:$0xff]
        %v1766 = vld [vmem:[#allocation2 + $0x3b0] sm:$0xff]
        %v1767 = vld [vmem:[#allocation2 + $0x3b8] sm:$0xff]
        %v1768 = vld [vmem:[#allocation2 + $0x3c0] sm:$0xff]
        %v1769 = vld [vmem:[#allocation2 + $0x3c8] sm:$0xff]
        %v1770 = vld [vmem:[#allocation2 + $0x3d0] sm:$0xff]
        %v1771 = vld [vmem:[#allocation2 + $0x3d8] sm:$0xff]
        %v1772 = vld [vmem:[#allocation2 + $0x3e0] sm:$0xff]
        %v1773 = vld [vmem:[#allocation2 + $0x3e8] sm:$0xff]
        %v1774 = vld [vmem:[#allocation2 + $0x3f0] sm:$0xff]
        %v1775 = vld [vmem:[#allocation2 + $0x3f8] sm:$0xff]
        %v1777 = vlaneseq
        %v1778 = vshrl.u32 %v1777, 7
        %v1779 = vsub.s32 0, %v1778
        %v1780 = vrot.slane %v350, %v1779
        %v1781 = vlaneseq
        %v1782 = vshrl.u32 %v1781, 7
        %v1783 = vsub.s32 1, %v1782
        %v1784 = vrot.slane %v350, %v1783
        %v1785 = vlaneseq
        %v1786 = vshrl.u32 %v1785, 7
        %v1787 = vsub.s32 2, %v1786
        %v1788 = vrot.slane %v350, %v1787
        %v1789 = vlaneseq
        %v1790 = vshrl.u32 %v1789, 7
        %v1791 = vsub.s32 3, %v1790
        %v1792 = vrot.slane %v350, %v1791
        %v1925 = vunpack.c.l.b16 %v1648
        %v1926 = vunpack.c.h.b16 %v1648
        %v1927 = vunpack.c.l.b16 %v1649
        %v1928 = vunpack.c.h.b16 %v1649
        %v1929 = vunpack.c.l.b16 %v1650
        %v1930 = vunpack.c.h.b16 %v1650
        %v1931 = vunpack.c.l.b16 %v1651
        %v1932 = vunpack.c.h.b16 %v1651
        %v1933 = vunpack.c.l.b16 %v1652
        %v1934 = vunpack.c.h.b16 %v1652
        %v1935 = vunpack.c.l.b16 %v1653
        %v1936 = vunpack.c.h.b16 %v1653
        %v1937 = vunpack.c.l.b16 %v1654
        %v1938 = vunpack.c.h.b16 %v1654
        %v1939 = vunpack.c.l.b16 %v1655
        %v1940 = vunpack.c.h.b16 %v1655
        %v1941 = vunpack.c.l.b16 %v1656
        %v1942 = vunpack.c.h.b16 %v1656
        %v1943 = vunpack.c.l.b16 %v1657
        %v1944 = vunpack.c.h.b16 %v1657
        %v1945 = vunpack.c.l.b16 %v1658
        %v1946 = vunpack.c.h.b16 %v1658
        %v1947 = vunpack.c.l.b16 %v1659
        %v1948 = vunpack.c.h.b16 %v1659
        %v1949 = vunpack.c.l.b16 %v1660
        %v1950 = vunpack.c.h.b16 %v1660
        %v1951 = vunpack.c.l.b16 %v1661
        %v1952 = vunpack.c.h.b16 %v1661
        %v1953 = vunpack.c.l.b16 %v1662
        %v1954 = vunpack.c.h.b16 %v1662
        %v1955 = vunpack.c.l.b16 %v1663
        %v1956 = vunpack.c.h.b16 %v1663
        %v1957 = vunpack.c.l.b16 %v1664
        %v1958 = vunpack.c.h.b16 %v1664
        %v1959 = vunpack.c.l.b16 %v1665
        %v1960 = vunpack.c.h.b16 %v1665
        %v1961 = vunpack.c.l.b16 %v1666
        %v1962 = vunpack.c.h.b16 %v1666
        %v1963 = vunpack.c.l.b16 %v1667
        %v1964 = vunpack.c.h.b16 %v1667
        %v1965 = vunpack.c.l.b16 %v1668
        %v1966 = vunpack.c.h.b16 %v1668
        %v1967 = vunpack.c.l.b16 %v1669
        %v1968 = vunpack.c.h.b16 %v1669
        %v1969 = vunpack.c.l.b16 %v1670
        %v1970 = vunpack.c.h.b16 %v1670
        %v1971 = vunpack.c.l.b16 %v1671
        %v1972 = vunpack.c.h.b16 %v1671
        %v1973 = vunpack.c.l.b16 %v1672
        %v1974 = vunpack.c.h.b16 %v1672
        %v1975 = vunpack.c.l.b16 %v1673
        %v1976 = vunpack.c.h.b16 %v1673
        %v1977 = vunpack.c.l.b16 %v1674
        %v1978 = vunpack.c.h.b16 %v1674
        %v1979 = vunpack.c.l.b16 %v1675
        %v1980 = vunpack.c.h.b16 %v1675
        %v1981 = vunpack.c.l.b16 %v1676
        %v1982 = vunpack.c.h.b16 %v1676
        %v1983 = vunpack.c.l.b16 %v1677
        %v1984 = vunpack.c.h.b16 %v1677
        %v1985 = vunpack.c.l.b16 %v1678
        %v1986 = vunpack.c.h.b16 %v1678
        %v1987 = vunpack.c.l.b16 %v1679
        %v1988 = vunpack.c.h.b16 %v1679
        %v1989 = vunpack.c.l.b16 %v1680
        %v1990 = vunpack.c.h.b16 %v1680
        %v1991 = vunpack.c.l.b16 %v1681
        %v1992 = vunpack.c.h.b16 %v1681
        %v1993 = vunpack.c.l.b16 %v1682
        %v1994 = vunpack.c.h.b16 %v1682
        %v1995 = vunpack.c.l.b16 %v1683
        %v1996 = vunpack.c.h.b16 %v1683
        %v1997 = vunpack.c.l.b16 %v1684
        %v1998 = vunpack.c.h.b16 %v1684
        %v1999 = vunpack.c.l.b16 %v1685
        %v2000 = vunpack.c.h.b16 %v1685
        %v2001 = vunpack.c.l.b16 %v1686
        %v2002 = vunpack.c.h.b16 %v1686
        %v2003 = vunpack.c.l.b16 %v1687
        %v2004 = vunpack.c.h.b16 %v1687
        %v2005 = vunpack.c.l.b16 %v1688
        %v2006 = vunpack.c.h.b16 %v1688
        %v2007 = vunpack.c.l.b16 %v1689
        %v2008 = vunpack.c.h.b16 %v1689
        %v2009 = vunpack.c.l.b16 %v1690
        %v2010 = vunpack.c.h.b16 %v1690
        %v2011 = vunpack.c.l.b16 %v1691
        %v2012 = vunpack.c.h.b16 %v1691
        %v2013 = vunpack.c.l.b16 %v1692
        %v2014 = vunpack.c.h.b16 %v1692
        %v2015 = vunpack.c.l.b16 %v1693
        %v2016 = vunpack.c.h.b16 %v1693
        %v2017 = vunpack.c.l.b16 %v1694
        %v2018 = vunpack.c.h.b16 %v1694
        %v2019 = vunpack.c.l.b16 %v1695
        %v2020 = vunpack.c.h.b16 %v1695
        %v2021 = vunpack.c.l.b16 %v1696
        %v2022 = vunpack.c.h.b16 %v1696
        %v2023 = vunpack.c.l.b16 %v1697
        %v2024 = vunpack.c.h.b16 %v1697
        %v2025 = vunpack.c.l.b16 %v1698
        %v2026 = vunpack.c.h.b16 %v1698
        %v2027 = vunpack.c.l.b16 %v1699
        %v2028 = vunpack.c.h.b16 %v1699
        %v2029 = vunpack.c.l.b16 %v1700
        %v2030 = vunpack.c.h.b16 %v1700
        %v2031 = vunpack.c.l.b16 %v1701
        %v2032 = vunpack.c.h.b16 %v1701
        %v2033 = vunpack.c.l.b16 %v1702
        %v2034 = vunpack.c.h.b16 %v1702
        %v2035 = vunpack.c.l.b16 %v1703
        %v2036 = vunpack.c.h.b16 %v1703
        %v2037 = vunpack.c.l.b16 %v1704
        %v2038 = vunpack.c.h.b16 %v1704
        %v2039 = vunpack.c.l.b16 %v1705
        %v2040 = vunpack.c.h.b16 %v1705
        %v2041 = vunpack.c.l.b16 %v1706
        %v2042 = vunpack.c.h.b16 %v1706
        %v2043 = vunpack.c.l.b16 %v1707
        %v2044 = vunpack.c.h.b16 %v1707
        %v2045 = vunpack.c.l.b16 %v1708
        %v2046 = vunpack.c.h.b16 %v1708
        %v2047 = vunpack.c.l.b16 %v1709
        %v2048 = vunpack.c.h.b16 %v1709
        %v2049 = vunpack.c.l.b16 %v1710
        %v2050 = vunpack.c.h.b16 %v1710
        %v2051 = vunpack.c.l.b16 %v1711
        %v2052 = vunpack.c.h.b16 %v1711
        %v2053 = vunpack.c.l.b16 %v1712
        %v2054 = vunpack.c.h.b16 %v1712
        %v2055 = vunpack.c.l.b16 %v1713
        %v2056 = vunpack.c.h.b16 %v1713
        %v2057 = vunpack.c.l.b16 %v1714
        %v2058 = vunpack.c.h.b16 %v1714
        %v2059 = vunpack.c.l.b16 %v1715
        %v2060 = vunpack.c.h.b16 %v1715
        %v2061 = vunpack.c.l.b16 %v1716
        %v2062 = vunpack.c.h.b16 %v1716
        %v2063 = vunpack.c.l.b16 %v1717
        %v2064 = vunpack.c.h.b16 %v1717
        %v2065 = vunpack.c.l.b16 %v1718
        %v2066 = vunpack.c.h.b16 %v1718
        %v2067 = vunpack.c.l.b16 %v1719
        %v2068 = vunpack.c.h.b16 %v1719
        %v2069 = vunpack.c.l.b16 %v1720
        %v2070 = vunpack.c.h.b16 %v1720
        %v2071 = vunpack.c.l.b16 %v1721
        %v2072 = vunpack.c.h.b16 %v1721
        %v2073 = vunpack.c.l.b16 %v1722
        %v2074 = vunpack.c.h.b16 %v1722
        %v2075 = vunpack.c.l.b16 %v1723
        %v2076 = vunpack.c.h.b16 %v1723
        %v2077 = vunpack.c.l.b16 %v1724
        %v2078 = vunpack.c.h.b16 %v1724
        %v2079 = vunpack.c.l.b16 %v1725
        %v2080 = vunpack.c.h.b16 %v1725
        %v2081 = vunpack.c.l.b16 %v1726
        %v2082 = vunpack.c.h.b16 %v1726
        %v2083 = vunpack.c.l.b16 %v1727
        %v2084 = vunpack.c.h.b16 %v1727
        %v2085 = vunpack.c.l.b16 %v1728
        %v2086 = vunpack.c.h.b16 %v1728
        %v2087 = vunpack.c.l.b16 %v1729
        %v2088 = vunpack.c.h.b16 %v1729
        %v2089 = vunpack.c.l.b16 %v1730
        %v2090 = vunpack.c.h.b16 %v1730
        %v2091 = vunpack.c.l.b16 %v1731
        %v2092 = vunpack.c.h.b16 %v1731
        %v2093 = vunpack.c.l.b16 %v1732
        %v2094 = vunpack.c.h.b16 %v1732
        %v2095 = vunpack.c.l.b16 %v1733
        %v2096 = vunpack.c.h.b16 %v1733
        %v2097 = vunpack.c.l.b16 %v1734
        %v2098 = vunpack.c.h.b16 %v1734
        %v2099 = vunpack.c.l.b16 %v1735
        %v2100 = vunpack.c.h.b16 %v1735
        %v2101 = vunpack.c.l.b16 %v1736
        %v2102 = vunpack.c.h.b16 %v1736
        %v2103 = vunpack.c.l.b16 %v1737
        %v2104 = vunpack.c.h.b16 %v1737
        %v2105 = vunpack.c.l.b16 %v1738
        %v2106 = vunpack.c.h.b16 %v1738
        %v2107 = vunpack.c.l.b16 %v1739
        %v2108 = vunpack.c.h.b16 %v1739
        %v2109 = vunpack.c.l.b16 %v1740
        %v2110 = vunpack.c.h.b16 %v1740
        %v2111 = vunpack.c.l.b16 %v1741
        %v2112 = vunpack.c.h.b16 %v1741
        %v2113 = vunpack.c.l.b16 %v1742
        %v2114 = vunpack.c.h.b16 %v1742
        %v2115 = vunpack.c.l.b16 %v1743
        %v2116 = vunpack.c.h.b16 %v1743
        %v2117 = vunpack.c.l.b16 %v1744
        %v2118 = vunpack.c.h.b16 %v1744
        %v2119 = vunpack.c.l.b16 %v1745
        %v2120 = vunpack.c.h.b16 %v1745
        %v2121 = vunpack.c.l.b16 %v1746
        %v2122 = vunpack.c.h.b16 %v1746
        %v2123 = vunpack.c.l.b16 %v1747
        %v2124 = vunpack.c.h.b16 %v1747
        %v2125 = vunpack.c.l.b16 %v1748
        %v2126 = vunpack.c.h.b16 %v1748
        %v2127 = vunpack.c.l.b16 %v1749
        %v2128 = vunpack.c.h.b16 %v1749
        %v2129 = vunpack.c.l.b16 %v1750
        %v2130 = vunpack.c.h.b16 %v1750
        %v2131 = vunpack.c.l.b16 %v1751
        %v2132 = vunpack.c.h.b16 %v1751
        %v2133 = vunpack.c.l.b16 %v1752
        %v2134 = vunpack.c.h.b16 %v1752
        %v2135 = vunpack.c.l.b16 %v1753
        %v2136 = vunpack.c.h.b16 %v1753
        %v2137 = vunpack.c.l.b16 %v1754
        %v2138 = vunpack.c.h.b16 %v1754
        %v2139 = vunpack.c.l.b16 %v1755
        %v2140 = vunpack.c.h.b16 %v1755
        %v2141 = vunpack.c.l.b16 %v1756
        %v2142 = vunpack.c.h.b16 %v1756
        %v2143 = vunpack.c.l.b16 %v1757
        %v2144 = vunpack.c.h.b16 %v1757
        %v2145 = vunpack.c.l.b16 %v1758
        %v2146 = vunpack.c.h.b16 %v1758
        %v2147 = vunpack.c.l.b16 %v1759
        %v2148 = vunpack.c.h.b16 %v1759
        %v2149 = vunpack.c.l.b16 %v1760
        %v2150 = vunpack.c.h.b16 %v1760
        %v2151 = vunpack.c.l.b16 %v1761
        %v2152 = vunpack.c.h.b16 %v1761
        %v2153 = vunpack.c.l.b16 %v1762
        %v2154 = vunpack.c.h.b16 %v1762
        %v2155 = vunpack.c.l.b16 %v1763
        %v2156 = vunpack.c.h.b16 %v1763
        %v2157 = vunpack.c.l.b16 %v1764
        %v2158 = vunpack.c.h.b16 %v1764
        %v2159 = vunpack.c.l.b16 %v1765
        %v2160 = vunpack.c.h.b16 %v1765
        %v2161 = vunpack.c.l.b16 %v1766
        %v2162 = vunpack.c.h.b16 %v1766
        %v2163 = vunpack.c.l.b16 %v1767
        %v2164 = vunpack.c.h.b16 %v1767
        %v2165 = vunpack.c.l.b16 %v1768
        %v2166 = vunpack.c.h.b16 %v1768
        %v2167 = vunpack.c.l.b16 %v1769
        %v2168 = vunpack.c.h.b16 %v1769
        %v2169 = vunpack.c.l.b16 %v1770
        %v2170 = vunpack.c.h.b16 %v1770
        %v2171 = vunpack.c.l.b16 %v1771
        %v2172 = vunpack.c.h.b16 %v1771
        %v2173 = vunpack.c.l.b16 %v1772
        %v2174 = vunpack.c.h.b16 %v1772
        %v2175 = vunpack.c.l.b16 %v1773
        %v2176 = vunpack.c.h.b16 %v1773
        %v2177 = vunpack.c.l.b16 %v1774
        %v2178 = vunpack.c.h.b16 %v1774
        %v2179 = vunpack.c.l.b16 %v1775
        %v2180 = vunpack.c.h.b16 %v1775
        %v2181 = vpack.c.b16 %v1929, %v1925
        %v2182 = vpack.c.b16 %v1930, %v1926
        %v2183 = vpack.c.b16 %v1931, %v1927
        %v2184 = vpack.c.b16 %v1932, %v1928
        %v2185 = vpack.c.b16 %v1937, %v1933
        %v2186 = vpack.c.b16 %v1938, %v1934
        %v2187 = vpack.c.b16 %v1939, %v1935
        %v2188 = vpack.c.b16 %v1940, %v1936
        %v2189 = vpack.c.b16 %v1945, %v1941
        %v2190 = vpack.c.b16 %v1946, %v1942
        %v2191 = vpack.c.b16 %v1947, %v1943
        %v2192 = vpack.c.b16 %v1948, %v1944
        %v2193 = vpack.c.b16 %v1953, %v1949
        %v2194 = vpack.c.b16 %v1954, %v1950
        %v2195 = vpack.c.b16 %v1955, %v1951
        %v2196 = vpack.c.b16 %v1956, %v1952
        %v2197 = vpack.c.b16 %v1961, %v1957
        %v2198 = vpack.c.b16 %v1962, %v1958
        %v2199 = vpack.c.b16 %v1963, %v1959
        %v2200 = vpack.c.b16 %v1964, %v1960
        %v2201 = vpack.c.b16 %v1969, %v1965
        %v2202 = vpack.c.b16 %v1970, %v1966
        %v2203 = vpack.c.b16 %v1971, %v1967
        %v2204 = vpack.c.b16 %v1972, %v1968
        %v2205 = vpack.c.b16 %v1977, %v1973
        %v2206 = vpack.c.b16 %v1978, %v1974
        %v2207 = vpack.c.b16 %v1979, %v1975
        %v2208 = vpack.c.b16 %v1980, %v1976
        %v2209 = vpack.c.b16 %v1985, %v1981
        %v2210 = vpack.c.b16 %v1986, %v1982
        %v2211 = vpack.c.b16 %v1987, %v1983
        %v2212 = vpack.c.b16 %v1988, %v1984
        %v2213 = vpack.c.b16 %v1993, %v1989
        %v2214 = vpack.c.b16 %v1994, %v1990
        %v2215 = vpack.c.b16 %v1995, %v1991
        %v2216 = vpack.c.b16 %v1996, %v1992
        %v2217 = vpack.c.b16 %v2001, %v1997
        %v2218 = vpack.c.b16 %v2002, %v1998
        %v2219 = vpack.c.b16 %v2003, %v1999
        %v2220 = vpack.c.b16 %v2004, %v2000
        %v2221 = vpack.c.b16 %v2009, %v2005
        %v2222 = vpack.c.b16 %v2010, %v2006
        %v2223 = vpack.c.b16 %v2011, %v2007
        %v2224 = vpack.c.b16 %v2012, %v2008
        %v2225 = vpack.c.b16 %v2017, %v2013
        %v2226 = vpack.c.b16 %v2018, %v2014
        %v2227 = vpack.c.b16 %v2019, %v2015
        %v2228 = vpack.c.b16 %v2020, %v2016
        %v2229 = vpack.c.b16 %v2025, %v2021
        %v2230 = vpack.c.b16 %v2026, %v2022
        %v2231 = vpack.c.b16 %v2027, %v2023
        %v2232 = vpack.c.b16 %v2028, %v2024
        %v2233 = vpack.c.b16 %v2033, %v2029
        %v2234 = vpack.c.b16 %v2034, %v2030
        %v2235 = vpack.c.b16 %v2035, %v2031
        %v2236 = vpack.c.b16 %v2036, %v2032
        %v2237 = vpack.c.b16 %v2041, %v2037
        %v2238 = vpack.c.b16 %v2042, %v2038
        %v2239 = vpack.c.b16 %v2043, %v2039
        %v2240 = vpack.c.b16 %v2044, %v2040
        %v2241 = vpack.c.b16 %v2049, %v2045
        %v2242 = vpack.c.b16 %v2050, %v2046
        %v2243 = vpack.c.b16 %v2051, %v2047
        %v2244 = vpack.c.b16 %v2052, %v2048
        %v2245 = vpack.c.b16 %v2057, %v2053
        %v2246 = vpack.c.b16 %v2058, %v2054
        %v2247 = vpack.c.b16 %v2059, %v2055
        %v2248 = vpack.c.b16 %v2060, %v2056
        %v2249 = vpack.c.b16 %v2065, %v2061
        %v2250 = vpack.c.b16 %v2066, %v2062
        %v2251 = vpack.c.b16 %v2067, %v2063
        %v2252 = vpack.c.b16 %v2068, %v2064
        %v2253 = vpack.c.b16 %v2073, %v2069
        %v2254 = vpack.c.b16 %v2074, %v2070
        %v2255 = vpack.c.b16 %v2075, %v2071
        %v2256 = vpack.c.b16 %v2076, %v2072
        %v2257 = vpack.c.b16 %v2081, %v2077
        %v2258 = vpack.c.b16 %v2082, %v2078
        %v2259 = vpack.c.b16 %v2083, %v2079
        %v2260 = vpack.c.b16 %v2084, %v2080
        %v2261 = vpack.c.b16 %v2089, %v2085
        %v2262 = vpack.c.b16 %v2090, %v2086
        %v2263 = vpack.c.b16 %v2091, %v2087
        %v2264 = vpack.c.b16 %v2092, %v2088
        %v2265 = vpack.c.b16 %v2097, %v2093
        %v2266 = vpack.c.b16 %v2098, %v2094
        %v2267 = vpack.c.b16 %v2099, %v2095
        %v2268 = vpack.c.b16 %v2100, %v2096
        %v2269 = vpack.c.b16 %v2105, %v2101
        %v2270 = vpack.c.b16 %v2106, %v2102
        %v2271 = vpack.c.b16 %v2107, %v2103
        %v2272 = vpack.c.b16 %v2108, %v2104
        %v2273 = vpack.c.b16 %v2113, %v2109
        %v2274 = vpack.c.b16 %v2114, %v2110
        %v2275 = vpack.c.b16 %v2115, %v2111
        %v2276 = vpack.c.b16 %v2116, %v2112
        %v2277 = vpack.c.b16 %v2121, %v2117
        %v2278 = vpack.c.b16 %v2122, %v2118
        %v2279 = vpack.c.b16 %v2123, %v2119
        %v2280 = vpack.c.b16 %v2124, %v2120
        %v2281 = vpack.c.b16 %v2129, %v2125
        %v2282 = vpack.c.b16 %v2130, %v2126
        %v2283 = vpack.c.b16 %v2131, %v2127
        %v2284 = vpack.c.b16 %v2132, %v2128
        %v2285 = vpack.c.b16 %v2137, %v2133
        %v2286 = vpack.c.b16 %v2138, %v2134
        %v2287 = vpack.c.b16 %v2139, %v2135
        %v2288 = vpack.c.b16 %v2140, %v2136
        %v2289 = vpack.c.b16 %v2145, %v2141
        %v2290 = vpack.c.b16 %v2146, %v2142
        %v2291 = vpack.c.b16 %v2147, %v2143
        %v2292 = vpack.c.b16 %v2148, %v2144
        %v2293 = vpack.c.b16 %v2153, %v2149
        %v2294 = vpack.c.b16 %v2154, %v2150
        %v2295 = vpack.c.b16 %v2155, %v2151
        %v2296 = vpack.c.b16 %v2156, %v2152
        %v2297 = vpack.c.b16 %v2161, %v2157
        %v2298 = vpack.c.b16 %v2162, %v2158
        %v2299 = vpack.c.b16 %v2163, %v2159
        %v2300 = vpack.c.b16 %v2164, %v2160
        %v2301 = vpack.c.b16 %v2169, %v2165
        %v2302 = vpack.c.b16 %v2170, %v2166
        %v2303 = vpack.c.b16 %v2171, %v2167
        %v2304 = vpack.c.b16 %v2172, %v2168
        %v2305 = vpack.c.b16 %v2177, %v2173
        %v2306 = vpack.c.b16 %v2178, %v2174
        %v2307 = vpack.c.b16 %v2179, %v2175
        %v2308 = vpack.c.b16 %v2180, %v2176
        %2437 = vmatprep.subr.bf16.mxu0 %v2210
        %2438 = vmatpush1.bf16.msra.mxu0 %v2209
        %2439 = vmatprep.subr.bf16.mxu0 %v2206
        %2440 = vmatpush1.bf16.msra.mxu0 %v2205
        %2441 = vmatprep.subr.bf16.mxu0 %v2202
        %2442 = vmatpush1.bf16.msra.mxu0 %v2201
        %2443 = vmatprep.subr.bf16.mxu0 %v2198
        %2444 = vmatpush1.bf16.msra.mxu0 %v2197
        %2445 = vmatprep.subr.bf16.mxu0 %v2194
        %2446 = vmatpush1.bf16.msra.mxu0 %v2193
        %2447 = vmatprep.subr.bf16.mxu0 %v2190
        %2448 = vmatpush1.bf16.msra.mxu0 %v2189
        %2449 = vmatprep.subr.bf16.mxu0 %v2186
        %2450 = vmatpush1.bf16.msra.mxu0 %v2185
        %2451 = vmatprep.subr.bf16.mxu0 %v2182
        %2452 = vmatpush1.bf16.msra.mxu0 %v2181
        %2453 = vmatprep.subr.bf16.mxu0 %v2242
        %2454 = vmatpush2.bf16.msra.mxu0 %v2241
        %2455 = vmatprep.subr.bf16.mxu0 %v2238
        %2456 = vmatpush2.bf16.msra.mxu0 %v2237
        %2457 = vmatprep.subr.bf16.mxu0 %v2234
        %2458 = vmatpush2.bf16.msra.mxu0 %v2233
        %2459 = vmatprep.subr.bf16.mxu0 %v2230
        %2460 = vmatpush2.bf16.msra.mxu0 %v2229
        %2461 = vmatprep.subr.bf16.mxu0 %v2226
        %2462 = vmatpush2.bf16.msra.mxu0 %v2225
        %2463 = vmatprep.subr.bf16.mxu0 %v2222
        %2464 = vmatpush2.bf16.msra.mxu0 %v2221
        %2465 = vmatprep.subr.bf16.mxu0 %v2218
        %2466 = vmatpush2.bf16.msra.mxu0 %v2217
        %2467 = vmatprep.subr.bf16.mxu0 %v2214
        %2468 = vmatpush2.bf16.msra.mxu0 %v2213
        %2469 = vmatprep.mubr.bf16.mxu0 %v1521
        %2470 = vmatmul.mubr.bf16.gmra.mxu0 %v1520
        %v2471 = vpop.f32.mrf.mxu0
        %v2472 = vadd.f32 %v1780, %v2471
        %v2473 = vpop.f32.mrf.mxu0
        %v2474 = vadd.f32 %v1784, %v2473
        %v2475 = vpop.f32.mrf.mxu0
        %v2476 = vadd.f32 %v1780, %v2475
        %v2477 = vpop.f32.mrf.mxu0
        %v2478 = vadd.f32 %v1784, %v2477
        %2479 = vmatprep.mubr.bf16.mxu0 %v1525
        %2480 = vmatmul.mubr.bf16.gmra.mxu0 %v1524
        %v2481 = vpop.f32.mrf.mxu0
        %v2482 = vadd.f32 %v1780, %v2481
        %v2483 = vpop.f32.mrf.mxu0
        %v2484 = vadd.f32 %v1784, %v2483
        %v2485 = vpop.f32.mrf.mxu0
        %v2486 = vadd.f32 %v1780, %v2485
        %v2487 = vpop.f32.mrf.mxu0
        %v2488 = vadd.f32 %v1784, %v2487
        %2489 = vmatprep.mubr.bf16.mxu0 %v1529
        %2490 = vmatmul.mubr.bf16.gmra.mxu0 %v1528
        %v2491 = vpop.f32.mrf.mxu0
        %v2492 = vadd.f32 %v1780, %v2491
        %v2493 = vpop.f32.mrf.mxu0
        %v2494 = vadd.f32 %v1784, %v2493
        %v2495 = vpop.f32.mrf.mxu0
        %v2496 = vadd.f32 %v1780, %v2495
        %v2497 = vpop.f32.mrf.mxu0
        %v2498 = vadd.f32 %v1784, %v2497
        %2499 = vmatprep.mubr.bf16.mxu0 %v1533
        %2500 = vmatmul.mubr.bf16.gmra.mxu0 %v1532
        %v2501 = vpop.f32.mrf.mxu0
        %v2502 = vadd.f32 %v1780, %v2501
        %v2503 = vpop.f32.mrf.mxu0
        %v2504 = vadd.f32 %v1784, %v2503
        %v2505 = vpop.f32.mrf.mxu0
        %v2506 = vadd.f32 %v1780, %v2505
        %v2507 = vpop.f32.mrf.mxu0
        %v2508 = vadd.f32 %v1784, %v2507
        %2509 = vmatprep.mubr.bf16.mxu0 %v1537
        %2510 = vmatmul.mubr.bf16.gmra.mxu0 %v1536
        %v2511 = vpop.f32.mrf.mxu0
        %v2512 = vadd.f32 %v1780, %v2511
        %v2513 = vpop.f32.mrf.mxu0
        %v2514 = vadd.f32 %v1784, %v2513
        %v2515 = vpop.f32.mrf.mxu0
        %v2516 = vadd.f32 %v1780, %v2515
        %v2517 = vpop.f32.mrf.mxu0
        %v2518 = vadd.f32 %v1784, %v2517
        %2519 = vmatprep.mubr.bf16.mxu0 %v1541
        %2520 = vmatmul.mubr.bf16.gmra.mxu0 %v1540
        %v2521 = vpop.f32.mrf.mxu0
        %v2522 = vadd.f32 %v1780, %v2521
        %v2523 = vpop.f32.mrf.mxu0
        %v2524 = vadd.f32 %v1784, %v2523
        %v2525 = vpop.f32.mrf.mxu0
        %v2526 = vadd.f32 %v1780, %v2525
        %v2527 = vpop.f32.mrf.mxu0
        %v2528 = vadd.f32 %v1784, %v2527
        %2529 = vmatprep.mubr.bf16.mxu0 %v1545
        %2530 = vmatmul.mubr.bf16.gmra.mxu0 %v1544
        %v2531 = vpop.f32.mrf.mxu0
        %v2532 = vadd.f32 %v1780, %v2531
        %v2533 = vpop.f32.mrf.mxu0
        %v2534 = vadd.f32 %v1784, %v2533
        %v2535 = vpop.f32.mrf.mxu0
        %v2536 = vadd.f32 %v1780, %v2535
        %v2537 = vpop.f32.mrf.mxu0
        %v2538 = vadd.f32 %v1784, %v2537
        %2539 = vmatprep.mubr.bf16.mxu0 %v1549
        %2540 = vmatmul.mubr.bf16.gmra.mxu0 %v1548
        %v2541 = vpop.f32.mrf.mxu0
        %v2542 = vadd.f32 %v1780, %v2541
        %v2543 = vpop.f32.mrf.mxu0
        %v2544 = vadd.f32 %v1784, %v2543
        %v2545 = vpop.f32.mrf.mxu0
        %v2546 = vadd.f32 %v1780, %v2545
        %v2547 = vpop.f32.mrf.mxu0
        %v2548 = vadd.f32 %v1784, %v2547
        %2549 = vmatprep.mubr.bf16.mxu0 %v1553
        %2550 = vmatmul.mubr.bf16.gmra.mxu0 %v1552
        %v2551 = vpop.f32.mrf.mxu0
        %v2552 = vadd.f32 %v1780, %v2551
        %v2553 = vpop.f32.mrf.mxu0
        %v2554 = vadd.f32 %v1784, %v2553
        %v2555 = vpop.f32.mrf.mxu0
        %v2556 = vadd.f32 %v1780, %v2555
        %v2557 = vpop.f32.mrf.mxu0
        %v2558 = vadd.f32 %v1784, %v2557
        %2559 = vmatprep.mubr.bf16.mxu0 %v1557
        %2560 = vmatmul.mubr.bf16.gmra.mxu0 %v1556
        %v2561 = vpop.f32.mrf.mxu0
        %v2562 = vadd.f32 %v1780, %v2561
        %v2563 = vpop.f32.mrf.mxu0
        %v2564 = vadd.f32 %v1784, %v2563
        %v2565 = vpop.f32.mrf.mxu0
        %v2566 = vadd.f32 %v1780, %v2565
        %v2567 = vpop.f32.mrf.mxu0
        %v2568 = vadd.f32 %v1784, %v2567
        %2569 = vmatprep.mubr.bf16.mxu0 %v1561
        %2570 = vmatmul.mubr.bf16.gmra.mxu0 %v1560
        %v2571 = vpop.f32.mrf.mxu0
        %v2572 = vadd.f32 %v1780, %v2571
        %v2573 = vpop.f32.mrf.mxu0
        %v2574 = vadd.f32 %v1784, %v2573
        %v2575 = vpop.f32.mrf.mxu0
        %v2576 = vadd.f32 %v1780, %v2575
        %v2577 = vpop.f32.mrf.mxu0
        %v2578 = vadd.f32 %v1784, %v2577
        %2579 = vmatprep.mubr.bf16.mxu0 %v1565
        %2580 = vmatmul.mubr.bf16.gmra.mxu0 %v1564
        %v2581 = vpop.f32.mrf.mxu0
        %v2582 = vadd.f32 %v1780, %v2581
        %v2583 = vpop.f32.mrf.mxu0
        %v2584 = vadd.f32 %v1784, %v2583
        %v2585 = vpop.f32.mrf.mxu0
        %v2586 = vadd.f32 %v1780, %v2585
        %v2587 = vpop.f32.mrf.mxu0
        %v2588 = vadd.f32 %v1784, %v2587
        %2589 = vmatprep.mubr.bf16.mxu0 %v1569
        %2590 = vmatmul.mubr.bf16.gmra.mxu0 %v1568
        %v2591 = vpop.f32.mrf.mxu0
        %v2592 = vadd.f32 %v1780, %v2591
        %v2593 = vpop.f32.mrf.mxu0
        %v2594 = vadd.f32 %v1784, %v2593
        %v2595 = vpop.f32.mrf.mxu0
        %v2596 = vadd.f32 %v1780, %v2595
        %v2597 = vpop.f32.mrf.mxu0
        %v2598 = vadd.f32 %v1784, %v2597
        %2599 = vmatprep.mubr.bf16.mxu0 %v1573
        %2600 = vmatmul.mubr.bf16.gmra.mxu0 %v1572
        %v2601 = vpop.f32.mrf.mxu0
        %v2602 = vadd.f32 %v1780, %v2601
        %v2603 = vpop.f32.mrf.mxu0
        %v2604 = vadd.f32 %v1784, %v2603
        %v2605 = vpop.f32.mrf.mxu0
        %v2606 = vadd.f32 %v1780, %v2605
        %v2607 = vpop.f32.mrf.mxu0
        %v2608 = vadd.f32 %v1784, %v2607
        %2609 = vmatprep.mubr.bf16.mxu0 %v1577
        %2610 = vmatmul.mubr.bf16.gmra.mxu0 %v1576
        %v2611 = vpop.f32.mrf.mxu0
        %v2612 = vadd.f32 %v1780, %v2611
        %v2613 = vpop.f32.mrf.mxu0
        %v2614 = vadd.f32 %v1784, %v2613
        %v2615 = vpop.f32.mrf.mxu0
        %v2616 = vadd.f32 %v1780, %v2615
        %v2617 = vpop.f32.mrf.mxu0
        %v2618 = vadd.f32 %v1784, %v2617
        %2619 = vmatprep.mubr.bf16.mxu0 %v1581
        %2620 = vmatmul.mubr.bf16.gmra.mxu0 %v1580
        %v2621 = vpop.f32.mrf.mxu0
        %v2622 = vadd.f32 %v1780, %v2621
        %v2623 = vpop.f32.mrf.mxu0
        %v2624 = vadd.f32 %v1784, %v2623
        %v2625 = vpop.f32.mrf.mxu0
        %v2626 = vadd.f32 %v1780, %v2625
        %v2627 = vpop.f32.mrf.mxu0
        %v2628 = vadd.f32 %v1784, %v2627
        %2629 = vdwg.mxu0
        %2630 = vmatprep.subr.bf16.mxu0 %v2274
        %2631 = vmatpush1.bf16.msra.mxu0 %v2273
        %2632 = vmatprep.subr.bf16.mxu0 %v2270
        %2633 = vmatpush1.bf16.msra.mxu0 %v2269
        %2634 = vmatprep.subr.bf16.mxu0 %v2266
        %2635 = vmatpush1.bf16.msra.mxu0 %v2265
        %2636 = vmatprep.subr.bf16.mxu0 %v2262
        %2637 = vmatpush1.bf16.msra.mxu0 %v2261
        %2638 = vmatprep.subr.bf16.mxu0 %v2258
        %2639 = vmatpush1.bf16.msra.mxu0 %v2257
        %2640 = vmatprep.subr.bf16.mxu0 %v2254
        %2641 = vmatpush1.bf16.msra.mxu0 %v2253
        %2642 = vmatprep.subr.bf16.mxu0 %v2250
        %2643 = vmatpush1.bf16.msra.mxu0 %v2249
        %2644 = vmatprep.subr.bf16.mxu0 %v2246
        %2645 = vmatpush1.bf16.msra.mxu0 %v2245
        %2646 = vmatprep.subr.bf16.mxu0 %v2306
        %2647 = vmatpush2.bf16.msra.mxu0 %v2305
        %2648 = vmatprep.subr.bf16.mxu0 %v2302
        %2649 = vmatpush2.bf16.msra.mxu0 %v2301
        %2650 = vmatprep.subr.bf16.mxu0 %v2298
        %2651 = vmatpush2.bf16.msra.mxu0 %v2297
        %2652 = vmatprep.subr.bf16.mxu0 %v2294
        %2653 = vmatpush2.bf16.msra.mxu0 %v2293
        %2654 = vmatprep.subr.bf16.mxu0 %v2290
        %2655 = vmatpush2.bf16.msra.mxu0 %v2289
        %2656 = vmatprep.subr.bf16.mxu0 %v2286
        %2657 = vmatpush2.bf16.msra.mxu0 %v2285
        %2658 = vmatprep.subr.bf16.mxu0 %v2282
        %2659 = vmatpush2.bf16.msra.mxu0 %v2281
        %2660 = vmatprep.subr.bf16.mxu0 %v2278
        %2661 = vmatpush2.bf16.msra.mxu0 %v2277
        %2662 = vmatprep.mubr.bf16.mxu0 %v1523
        %2663 = vmatmul.mubr.bf16.gmra.mxu0 %v1522
        %v2664 = vpop.f32.mrf.mxu0
        %v2665 = vadd.f32 %v2472, %v2664
        %v2666 = vpop.f32.mrf.mxu0
        %v2667 = vadd.f32 %v2474, %v2666
        %v2668 = vpop.f32.mrf.mxu0
        %v2669 = vadd.f32 %v2476, %v2668
        %v2670 = vpop.f32.mrf.mxu0
        %v2671 = vadd.f32 %v2478, %v2670
        %2672 = vmatprep.mubr.bf16.mxu0 %v1527
        %2673 = vmatmul.mubr.bf16.gmra.mxu0 %v1526
        %v2674 = vpop.f32.mrf.mxu0
        %v2675 = vadd.f32 %v2482, %v2674
        %v2676 = vpop.f32.mrf.mxu0
        %v2677 = vadd.f32 %v2484, %v2676
        %v2678 = vpop.f32.mrf.mxu0
        %v2679 = vadd.f32 %v2486, %v2678
        %v2680 = vpop.f32.mrf.mxu0
        %v2681 = vadd.f32 %v2488, %v2680
        %2682 = vmatprep.mubr.bf16.mxu0 %v1531
        %2683 = vmatmul.mubr.bf16.gmra.mxu0 %v1530
        %v2684 = vpop.f32.mrf.mxu0
        %v2685 = vadd.f32 %v2492, %v2684
        %v2686 = vpop.f32.mrf.mxu0
        %v2687 = vadd.f32 %v2494, %v2686
        %v2688 = vpop.f32.mrf.mxu0
        %v2689 = vadd.f32 %v2496, %v2688
        %v2690 = vpop.f32.mrf.mxu0
        %v2691 = vadd.f32 %v2498, %v2690
        %2692 = vmatprep.mubr.bf16.mxu0 %v1535
        %2693 = vmatmul.mubr.bf16.gmra.mxu0 %v1534
        %v2694 = vpop.f32.mrf.mxu0
        %v2695 = vadd.f32 %v2502, %v2694
        %v2696 = vpop.f32.mrf.mxu0
        %v2697 = vadd.f32 %v2504, %v2696
        %v2698 = vpop.f32.mrf.mxu0
        %v2699 = vadd.f32 %v2506, %v2698
        %v2700 = vpop.f32.mrf.mxu0
        %v2701 = vadd.f32 %v2508, %v2700
        %2702 = vmatprep.mubr.bf16.mxu0 %v1539
        %2703 = vmatmul.mubr.bf16.gmra.mxu0 %v1538
        %v2704 = vpop.f32.mrf.mxu0
        %v2705 = vadd.f32 %v2512, %v2704
        %v2706 = vpop.f32.mrf.mxu0
        %v2707 = vadd.f32 %v2514, %v2706
        %v2708 = vpop.f32.mrf.mxu0
        %v2709 = vadd.f32 %v2516, %v2708
        %v2710 = vpop.f32.mrf.mxu0
        %v2711 = vadd.f32 %v2518, %v2710
        %2712 = vmatprep.mubr.bf16.mxu0 %v1543
        %2713 = vmatmul.mubr.bf16.gmra.mxu0 %v1542
        %v2714 = vpop.f32.mrf.mxu0
        %v2715 = vadd.f32 %v2522, %v2714
        %v2716 = vpop.f32.mrf.mxu0
        %v2717 = vadd.f32 %v2524, %v2716
        %v2718 = vpop.f32.mrf.mxu0
        %v2719 = vadd.f32 %v2526, %v2718
        %v2720 = vpop.f32.mrf.mxu0
        %v2721 = vadd.f32 %v2528, %v2720
        %2722 = vmatprep.mubr.bf16.mxu0 %v1547
        %2723 = vmatmul.mubr.bf16.gmra.mxu0 %v1546
        %v2724 = vpop.f32.mrf.mxu0
        %v2725 = vadd.f32 %v2532, %v2724
        %v2726 = vpop.f32.mrf.mxu0
        %v2727 = vadd.f32 %v2534, %v2726
        %v2728 = vpop.f32.mrf.mxu0
        %v2729 = vadd.f32 %v2536, %v2728
        %v2730 = vpop.f32.mrf.mxu0
        %v2731 = vadd.f32 %v2538, %v2730
        %2732 = vmatprep.mubr.bf16.mxu0 %v1551
        %2733 = vmatmul.mubr.bf16.gmra.mxu0 %v1550
        %v2734 = vpop.f32.mrf.mxu0
        %v2735 = vadd.f32 %v2542, %v2734
        %v2736 = vpop.f32.mrf.mxu0
        %v2737 = vadd.f32 %v2544, %v2736
        %v2738 = vpop.f32.mrf.mxu0
        %v2739 = vadd.f32 %v2546, %v2738
        %v2740 = vpop.f32.mrf.mxu0
        %v2741 = vadd.f32 %v2548, %v2740
        %2742 = vmatprep.mubr.bf16.mxu0 %v1555
        %2743 = vmatmul.mubr.bf16.gmra.mxu0 %v1554
        %v2744 = vpop.f32.mrf.mxu0
        %v2745 = vadd.f32 %v2552, %v2744
        %v2746 = vpop.f32.mrf.mxu0
        %v2747 = vadd.f32 %v2554, %v2746
        %v2748 = vpop.f32.mrf.mxu0
        %v2749 = vadd.f32 %v2556, %v2748
        %v2750 = vpop.f32.mrf.mxu0
        %v2751 = vadd.f32 %v2558, %v2750
        %2752 = vmatprep.mubr.bf16.mxu0 %v1559
        %2753 = vmatmul.mubr.bf16.gmra.mxu0 %v1558
        %v2754 = vpop.f32.mrf.mxu0
        %v2755 = vadd.f32 %v2562, %v2754
        %v2756 = vpop.f32.mrf.mxu0
        %v2757 = vadd.f32 %v2564, %v2756
        %v2758 = vpop.f32.mrf.mxu0
        %v2759 = vadd.f32 %v2566, %v2758
        %v2760 = vpop.f32.mrf.mxu0
        %v2761 = vadd.f32 %v2568, %v2760
        %2762 = vmatprep.mubr.bf16.mxu0 %v1563
        %2763 = vmatmul.mubr.bf16.gmra.mxu0 %v1562
        %v2764 = vpop.f32.mrf.mxu0
        %v2765 = vadd.f32 %v2572, %v2764
        %v2766 = vpop.f32.mrf.mxu0
        %v2767 = vadd.f32 %v2574, %v2766
        %v2768 = vpop.f32.mrf.mxu0
        %v2769 = vadd.f32 %v2576, %v2768
        %v2770 = vpop.f32.mrf.mxu0
        %v2771 = vadd.f32 %v2578, %v2770
        %2772 = vmatprep.mubr.bf16.mxu0 %v1567
        %2773 = vmatmul.mubr.bf16.gmra.mxu0 %v1566
        %v2774 = vpop.f32.mrf.mxu0
        %v2775 = vadd.f32 %v2582, %v2774
        %v2776 = vpop.f32.mrf.mxu0
        %v2777 = vadd.f32 %v2584, %v2776
        %v2778 = vpop.f32.mrf.mxu0
        %v2779 = vadd.f32 %v2586, %v2778
        %v2780 = vpop.f32.mrf.mxu0
        %v2781 = vadd.f32 %v2588, %v2780
        %2782 = vmatprep.mubr.bf16.mxu0 %v1571
        %2783 = vmatmul.mubr.bf16.gmra.mxu0 %v1570
        %v2784 = vpop.f32.mrf.mxu0
        %v2785 = vadd.f32 %v2592, %v2784
        %v2786 = vpop.f32.mrf.mxu0
        %v2787 = vadd.f32 %v2594, %v2786
        %v2788 = vpop.f32.mrf.mxu0
        %v2789 = vadd.f32 %v2596, %v2788
        %v2790 = vpop.f32.mrf.mxu0
        %v2791 = vadd.f32 %v2598, %v2790
        %2792 = vmatprep.mubr.bf16.mxu0 %v1575
        %2793 = vmatmul.mubr.bf16.gmra.mxu0 %v1574
        %v2794 = vpop.f32.mrf.mxu0
        %v2795 = vadd.f32 %v2602, %v2794
        %v2796 = vpop.f32.mrf.mxu0
        %v2797 = vadd.f32 %v2604, %v2796
        %v2798 = vpop.f32.mrf.mxu0
        %v2799 = vadd.f32 %v2606, %v2798
        %v2800 = vpop.f32.mrf.mxu0
        %v2801 = vadd.f32 %v2608, %v2800
        %2802 = vmatprep.mubr.bf16.mxu0 %v1579
        %2803 = vmatmul.mubr.bf16.gmra.mxu0 %v1578
        %v2804 = vpop.f32.mrf.mxu0
        %v2805 = vadd.f32 %v2612, %v2804
        %v2806 = vpop.f32.mrf.mxu0
        %v2807 = vadd.f32 %v2614, %v2806
        %v2808 = vpop.f32.mrf.mxu0
        %v2809 = vadd.f32 %v2616, %v2808
        %v2810 = vpop.f32.mrf.mxu0
        %v2811 = vadd.f32 %v2618, %v2810
        %2812 = vmatprep.mubr.bf16.mxu0 %v1583
        %2813 = vmatmul.mubr.bf16.gmra.mxu0 %v1582
        %v2814 = vpop.f32.mrf.mxu0
        %v2815 = vadd.f32 %v2622, %v2814
        %v2816 = vpop.f32.mrf.mxu0
        %v2817 = vadd.f32 %v2624, %v2816
        %v2818 = vpop.f32.mrf.mxu0
        %v2819 = vadd.f32 %v2626, %v2818
        %v2820 = vpop.f32.mrf.mxu0
        %v2821 = vadd.f32 %v2628, %v2820
        %2822 = vdwg.mxu0
        %2823 = vmatprep.subr.bf16.mxu0 %v2212
        %2824 = vmatpush1.bf16.msra.mxu0 %v2211
        %2825 = vmatprep.subr.bf16.mxu0 %v2208
        %2826 = vmatpush1.bf16.msra.mxu0 %v2207
        %2827 = vmatprep.subr.bf16.mxu0 %v2204
        %2828 = vmatpush1.bf16.msra.mxu0 %v2203
        %2829 = vmatprep.subr.bf16.mxu0 %v2200
        %2830 = vmatpush1.bf16.msra.mxu0 %v2199
        %2831 = vmatprep.subr.bf16.mxu0 %v2196
        %2832 = vmatpush1.bf16.msra.mxu0 %v2195
        %2833 = vmatprep.subr.bf16.mxu0 %v2192
        %2834 = vmatpush1.bf16.msra.mxu0 %v2191
        %2835 = vmatprep.subr.bf16.mxu0 %v2188
        %2836 = vmatpush1.bf16.msra.mxu0 %v2187
        %2837 = vmatprep.subr.bf16.mxu0 %v2184
        %2838 = vmatpush1.bf16.msra.mxu0 %v2183
        %2839 = vmatprep.subr.bf16.mxu0 %v2244
        %2840 = vmatpush2.bf16.msra.mxu0 %v2243
        %2841 = vmatprep.subr.bf16.mxu0 %v2240
        %2842 = vmatpush2.bf16.msra.mxu0 %v2239
        %2843 = vmatprep.subr.bf16.mxu0 %v2236
        %2844 = vmatpush2.bf16.msra.mxu0 %v2235
        %2845 = vmatprep.subr.bf16.mxu0 %v2232
        %2846 = vmatpush2.bf16.msra.mxu0 %v2231
        %2847 = vmatprep.subr.bf16.mxu0 %v2228
        %2848 = vmatpush2.bf16.msra.mxu0 %v2227
        %2849 = vmatprep.subr.bf16.mxu0 %v2224
        %2850 = vmatpush2.bf16.msra.mxu0 %v2223
        %2851 = vmatprep.subr.bf16.mxu0 %v2220
        %2852 = vmatpush2.bf16.msra.mxu0 %v2219
        %2853 = vmatprep.subr.bf16.mxu0 %v2216
        %2854 = vmatpush2.bf16.msra.mxu0 %v2215
        %2855 = vmatprep.mubr.bf16.mxu0 %v1521
        %2856 = vmatmul.mubr.bf16.gmra.mxu0 %v1520
        %v2857 = vpop.f32.mrf.mxu0
        %v2858 = vadd.f32 %v1788, %v2857
        %v2859 = vpop.f32.mrf.mxu0
        %v2860 = vadd.f32 %v1792, %v2859
        %v2861 = vpop.f32.mrf.mxu0
        %v2862 = vadd.f32 %v1788, %v2861
        %v2863 = vpop.f32.mrf.mxu0
        %v2864 = vadd.f32 %v1792, %v2863
        %2865 = vmatprep.mubr.bf16.mxu0 %v1525
        %2866 = vmatmul.mubr.bf16.gmra.mxu0 %v1524
        %v2867 = vpop.f32.mrf.mxu0
        %v2868 = vadd.f32 %v1788, %v2867
        %v2869 = vpop.f32.mrf.mxu0
        %v2870 = vadd.f32 %v1792, %v2869
        %v2871 = vpop.f32.mrf.mxu0
        %v2872 = vadd.f32 %v1788, %v2871
        %v2873 = vpop.f32.mrf.mxu0
        %v2874 = vadd.f32 %v1792, %v2873
        %2875 = vmatprep.mubr.bf16.mxu0 %v1529
        %2876 = vmatmul.mubr.bf16.gmra.mxu0 %v1528
        %v2877 = vpop.f32.mrf.mxu0
        %v2878 = vadd.f32 %v1788, %v2877
        %v2879 = vpop.f32.mrf.mxu0
        %v2880 = vadd.f32 %v1792, %v2879
        %v2881 = vpop.f32.mrf.mxu0
        %v2882 = vadd.f32 %v1788, %v2881
        %v2883 = vpop.f32.mrf.mxu0
        %v2884 = vadd.f32 %v1792, %v2883
        %2885 = vmatprep.mubr.bf16.mxu0 %v1533
        %2886 = vmatmul.mubr.bf16.gmra.mxu0 %v1532
        %v2887 = vpop.f32.mrf.mxu0
        %v2888 = vadd.f32 %v1788, %v2887
        %v2889 = vpop.f32.mrf.mxu0
        %v2890 = vadd.f32 %v1792, %v2889
        %v2891 = vpop.f32.mrf.mxu0
        %v2892 = vadd.f32 %v1788, %v2891
        %v2893 = vpop.f32.mrf.mxu0
        %v2894 = vadd.f32 %v1792, %v2893
        %2895 = vmatprep.mubr.bf16.mxu0 %v1537
        %2896 = vmatmul.mubr.bf16.gmra.mxu0 %v1536
        %v2897 = vpop.f32.mrf.mxu0
        %v2898 = vadd.f32 %v1788, %v2897
        %v2899 = vpop.f32.mrf.mxu0
        %v2900 = vadd.f32 %v1792, %v2899
        %v2901 = vpop.f32.mrf.mxu0
        %v2902 = vadd.f32 %v1788, %v2901
        %v2903 = vpop.f32.mrf.mxu0
        %v2904 = vadd.f32 %v1792, %v2903
        %2905 = vmatprep.mubr.bf16.mxu0 %v1541
        %2906 = vmatmul.mubr.bf16.gmra.mxu0 %v1540
        %v2907 = vpop.f32.mrf.mxu0
        %v2908 = vadd.f32 %v1788, %v2907
        %v2909 = vpop.f32.mrf.mxu0
        %v2910 = vadd.f32 %v1792, %v2909
        %v2911 = vpop.f32.mrf.mxu0
        %v2912 = vadd.f32 %v1788, %v2911
        %v2913 = vpop.f32.mrf.mxu0
        %v2914 = vadd.f32 %v1792, %v2913
        %2915 = vmatprep.mubr.bf16.mxu0 %v1545
        %2916 = vmatmul.mubr.bf16.gmra.mxu0 %v1544
        %v2917 = vpop.f32.mrf.mxu0
        %v2918 = vadd.f32 %v1788, %v2917
        %v2919 = vpop.f32.mrf.mxu0
        %v2920 = vadd.f32 %v1792, %v2919
        %v2921 = vpop.f32.mrf.mxu0
        %v2922 = vadd.f32 %v1788, %v2921
        %v2923 = vpop.f32.mrf.mxu0
        %v2924 = vadd.f32 %v1792, %v2923
        %2925 = vmatprep.mubr.bf16.mxu0 %v1549
        %2926 = vmatmul.mubr.bf16.gmra.mxu0 %v1548
        %v2927 = vpop.f32.mrf.mxu0
        %v2928 = vadd.f32 %v1788, %v2927
        %v2929 = vpop.f32.mrf.mxu0
        %v2930 = vadd.f32 %v1792, %v2929
        %v2931 = vpop.f32.mrf.mxu0
        %v2932 = vadd.f32 %v1788, %v2931
        %v2933 = vpop.f32.mrf.mxu0
        %v2934 = vadd.f32 %v1792, %v2933
        %2935 = vmatprep.mubr.bf16.mxu0 %v1553
        %2936 = vmatmul.mubr.bf16.gmra.mxu0 %v1552
        %v2937 = vpop.f32.mrf.mxu0
        %v2938 = vadd.f32 %v1788, %v2937
        %v2939 = vpop.f32.mrf.mxu0
        %v2940 = vadd.f32 %v1792, %v2939
        %v2941 = vpop.f32.mrf.mxu0
        %v2942 = vadd.f32 %v1788, %v2941
        %v2943 = vpop.f32.mrf.mxu0
        %v2944 = vadd.f32 %v1792, %v2943
        %2945 = vmatprep.mubr.bf16.mxu0 %v1557
        %2946 = vmatmul.mubr.bf16.gmra.mxu0 %v1556
        %v2947 = vpop.f32.mrf.mxu0
        %v2948 = vadd.f32 %v1788, %v2947
        %v2949 = vpop.f32.mrf.mxu0
        %v2950 = vadd.f32 %v1792, %v2949
        %v2951 = vpop.f32.mrf.mxu0
        %v2952 = vadd.f32 %v1788, %v2951
        %v2953 = vpop.f32.mrf.mxu0
        %v2954 = vadd.f32 %v1792, %v2953
        %2955 = vmatprep.mubr.bf16.mxu0 %v1561
        %2956 = vmatmul.mubr.bf16.gmra.mxu0 %v1560
        %v2957 = vpop.f32.mrf.mxu0
        %v2958 = vadd.f32 %v1788, %v2957
        %v2959 = vpop.f32.mrf.mxu0
        %v2960 = vadd.f32 %v1792, %v2959
        %v2961 = vpop.f32.mrf.mxu0
        %v2962 = vadd.f32 %v1788, %v2961
        %v2963 = vpop.f32.mrf.mxu0
        %v2964 = vadd.f32 %v1792, %v2963
        %2965 = vmatprep.mubr.bf16.mxu0 %v1565
        %2966 = vmatmul.mubr.bf16.gmra.mxu0 %v1564
        %v2967 = vpop.f32.mrf.mxu0
        %v2968 = vadd.f32 %v1788, %v2967
        %v2969 = vpop.f32.mrf.mxu0
        %v2970 = vadd.f32 %v1792, %v2969
        %v2971 = vpop.f32.mrf.mxu0
        %v2972 = vadd.f32 %v1788, %v2971
        %v2973 = vpop.f32.mrf.mxu0
        %v2974 = vadd.f32 %v1792, %v2973
        %2975 = vmatprep.mubr.bf16.mxu0 %v1569
        %2976 = vmatmul.mubr.bf16.gmra.mxu0 %v1568
        %v2977 = vpop.f32.mrf.mxu0
        %v2978 = vadd.f32 %v1788, %v2977
        %v2979 = vpop.f32.mrf.mxu0
        %v2980 = vadd.f32 %v1792, %v2979
        %v2981 = vpop.f32.mrf.mxu0
        %v2982 = vadd.f32 %v1788, %v2981
        %v2983 = vpop.f32.mrf.mxu0
        %v2984 = vadd.f32 %v1792, %v2983
        %2985 = vmatprep.mubr.bf16.mxu0 %v1573
        %2986 = vmatmul.mubr.bf16.gmra.mxu0 %v1572
        %v2987 = vpop.f32.mrf.mxu0
        %v2988 = vadd.f32 %v1788, %v2987
        %v2989 = vpop.f32.mrf.mxu0
        %v2990 = vadd.f32 %v1792, %v2989
        %v2991 = vpop.f32.mrf.mxu0
        %v2992 = vadd.f32 %v1788, %v2991
        %v2993 = vpop.f32.mrf.mxu0
        %v2994 = vadd.f32 %v1792, %v2993
        %2995 = vmatprep.mubr.bf16.mxu0 %v1577
        %2996 = vmatmul.mubr.bf16.gmra.mxu0 %v1576
        %v2997 = vpop.f32.mrf.mxu0
        %v2998 = vadd.f32 %v1788, %v2997
        %v2999 = vpop.f32.mrf.mxu0
        %v3000 = vadd.f32 %v1792, %v2999
        %v3001 = vpop.f32.mrf.mxu0
        %v3002 = vadd.f32 %v1788, %v3001
        %v3003 = vpop.f32.mrf.mxu0
        %v3004 = vadd.f32 %v1792, %v3003
        %3005 = vmatprep.mubr.bf16.mxu0 %v1581
        %3006 = vmatmul.mubr.bf16.gmra.mxu0 %v1580
        %v3007 = vpop.f32.mrf.mxu0
        %v3008 = vadd.f32 %v1788, %v3007
        %v3009 = vpop.f32.mrf.mxu0
        %v3010 = vadd.f32 %v1792, %v3009
        %v3011 = vpop.f32.mrf.mxu0
        %v3012 = vadd.f32 %v1788, %v3011
        %v3013 = vpop.f32.mrf.mxu0
        %v3014 = vadd.f32 %v1792, %v3013
        %3015 = vdwg.mxu0
        %3016 = vmatprep.subr.bf16.mxu0 %v2276
        %3017 = vmatpush1.bf16.msra.mxu0 %v2275
        %3018 = vmatprep.subr.bf16.mxu0 %v2272
        %3019 = vmatpush1.bf16.msra.mxu0 %v2271
        %3020 = vmatprep.subr.bf16.mxu0 %v2268
        %3021 = vmatpush1.bf16.msra.mxu0 %v2267
        %3022 = vmatprep.subr.bf16.mxu0 %v2264
        %3023 = vmatpush1.bf16.msra.mxu0 %v2263
        %3024 = vmatprep.subr.bf16.mxu0 %v2260
        %3025 = vmatpush1.bf16.msra.mxu0 %v2259
        %3026 = vmatprep.subr.bf16.mxu0 %v2256
        %3027 = vmatpush1.bf16.msra.mxu0 %v2255
        %3028 = vmatprep.subr.bf16.mxu0 %v2252
        %3029 = vmatpush1.bf16.msra.mxu0 %v2251
        %3030 = vmatprep.subr.bf16.mxu0 %v2248
        %3031 = vmatpush1.bf16.msra.mxu0 %v2247
        %3032 = vmatprep.subr.bf16.mxu0 %v2308
        %3033 = vmatpush2.bf16.msra.mxu0 %v2307
        %3034 = vmatprep.subr.bf16.mxu0 %v2304
        %3035 = vmatpush2.bf16.msra.mxu0 %v2303
        %3036 = vmatprep.subr.bf16.mxu0 %v2300
        %3037 = vmatpush2.bf16.msra.mxu0 %v2299
        %3038 = vmatprep.subr.bf16.mxu0 %v2296
        %3039 = vmatpush2.bf16.msra.mxu0 %v2295
        %3040 = vmatprep.subr.bf16.mxu0 %v2292
        %3041 = vmatpush2.bf16.msra.mxu0 %v2291
        %3042 = vmatprep.subr.bf16.mxu0 %v2288
        %3043 = vmatpush2.bf16.msra.mxu0 %v2287
        %3044 = vmatprep.subr.bf16.mxu0 %v2284
        %3045 = vmatpush2.bf16.msra.mxu0 %v2283
        %3046 = vmatprep.subr.bf16.mxu0 %v2280
        %3047 = vmatpush2.bf16.msra.mxu0 %v2279
        %3048 = vmatprep.mubr.bf16.mxu0 %v1523
        %3049 = vmatmul.mubr.bf16.gmra.mxu0 %v1522
        %v3050 = vpop.f32.mrf.mxu0
        %v3051 = vadd.f32 %v2858, %v3050
        %v3052 = vpop.f32.mrf.mxu0
        %v3053 = vadd.f32 %v2860, %v3052
        %v3054 = vpop.f32.mrf.mxu0
        %v3055 = vadd.f32 %v2862, %v3054
        %v3056 = vpop.f32.mrf.mxu0
        %v3057 = vadd.f32 %v2864, %v3056
        %3058 = vmatprep.mubr.bf16.mxu0 %v1527
        %3059 = vmatmul.mubr.bf16.gmra.mxu0 %v1526
        %v3060 = vpop.f32.mrf.mxu0
        %v3061 = vadd.f32 %v2868, %v3060
        %v3062 = vpop.f32.mrf.mxu0
        %v3063 = vadd.f32 %v2870, %v3062
        %v3064 = vpop.f32.mrf.mxu0
        %v3065 = vadd.f32 %v2872, %v3064
        %v3066 = vpop.f32.mrf.mxu0
        %v3067 = vadd.f32 %v2874, %v3066
        %3068 = vmatprep.mubr.bf16.mxu0 %v1531
        %3069 = vmatmul.mubr.bf16.gmra.mxu0 %v1530
        %v3070 = vpop.f32.mrf.mxu0
        %v3071 = vadd.f32 %v2878, %v3070
        %v3072 = vpop.f32.mrf.mxu0
        %v3073 = vadd.f32 %v2880, %v3072
        %v3074 = vpop.f32.mrf.mxu0
        %v3075 = vadd.f32 %v2882, %v3074
        %v3076 = vpop.f32.mrf.mxu0
        %v3077 = vadd.f32 %v2884, %v3076
        %3078 = vmatprep.mubr.bf16.mxu0 %v1535
        %3079 = vmatmul.mubr.bf16.gmra.mxu0 %v1534
        %v3080 = vpop.f32.mrf.mxu0
        %v3081 = vadd.f32 %v2888, %v3080
        %v3082 = vpop.f32.mrf.mxu0
        %v3083 = vadd.f32 %v2890, %v3082
        %v3084 = vpop.f32.mrf.mxu0
        %v3085 = vadd.f32 %v2892, %v3084
        %v3086 = vpop.f32.mrf.mxu0
        %v3087 = vadd.f32 %v2894, %v3086
        %3088 = vmatprep.mubr.bf16.mxu0 %v1539
        %3089 = vmatmul.mubr.bf16.gmra.mxu0 %v1538
        %v3090 = vpop.f32.mrf.mxu0
        %v3091 = vadd.f32 %v2898, %v3090
        %v3092 = vpop.f32.mrf.mxu0
        %v3093 = vadd.f32 %v2900, %v3092
        %v3094 = vpop.f32.mrf.mxu0
        %v3095 = vadd.f32 %v2902, %v3094
        %v3096 = vpop.f32.mrf.mxu0
        %v3097 = vadd.f32 %v2904, %v3096
        %3098 = vmatprep.mubr.bf16.mxu0 %v1543
        %3099 = vmatmul.mubr.bf16.gmra.mxu0 %v1542
        %v3100 = vpop.f32.mrf.mxu0
        %v3101 = vadd.f32 %v2908, %v3100
        %v3102 = vpop.f32.mrf.mxu0
        %v3103 = vadd.f32 %v2910, %v3102
        %v3104 = vpop.f32.mrf.mxu0
        %v3105 = vadd.f32 %v2912, %v3104
        %v3106 = vpop.f32.mrf.mxu0
        %v3107 = vadd.f32 %v2914, %v3106
        %3108 = vmatprep.mubr.bf16.mxu0 %v1547
        %3109 = vmatmul.mubr.bf16.gmra.mxu0 %v1546
        %v3110 = vpop.f32.mrf.mxu0
        %v3111 = vadd.f32 %v2918, %v3110
        %v3112 = vpop.f32.mrf.mxu0
        %v3113 = vadd.f32 %v2920, %v3112
        %v3114 = vpop.f32.mrf.mxu0
        %v3115 = vadd.f32 %v2922, %v3114
        %v3116 = vpop.f32.mrf.mxu0
        %v3117 = vadd.f32 %v2924, %v3116
        %3118 = vmatprep.mubr.bf16.mxu0 %v1551
        %3119 = vmatmul.mubr.bf16.gmra.mxu0 %v1550
        %v3120 = vpop.f32.mrf.mxu0
        %v3121 = vadd.f32 %v2928, %v3120
        %v3122 = vpop.f32.mrf.mxu0
        %v3123 = vadd.f32 %v2930, %v3122
        %v3124 = vpop.f32.mrf.mxu0
        %v3125 = vadd.f32 %v2932, %v3124
        %v3126 = vpop.f32.mrf.mxu0
        %v3127 = vadd.f32 %v2934, %v3126
        %3128 = vmatprep.mubr.bf16.mxu0 %v1555
        %3129 = vmatmul.mubr.bf16.gmra.mxu0 %v1554
        %v3130 = vpop.f32.mrf.mxu0
        %v3131 = vadd.f32 %v2938, %v3130
        %v3132 = vpop.f32.mrf.mxu0
        %v3133 = vadd.f32 %v2940, %v3132
        %v3134 = vpop.f32.mrf.mxu0
        %v3135 = vadd.f32 %v2942, %v3134
        %v3136 = vpop.f32.mrf.mxu0
        %v3137 = vadd.f32 %v2944, %v3136
        %3138 = vmatprep.mubr.bf16.mxu0 %v1559
        %3139 = vmatmul.mubr.bf16.gmra.mxu0 %v1558
        %v3140 = vpop.f32.mrf.mxu0
        %v3141 = vadd.f32 %v2948, %v3140
        %v3142 = vpop.f32.mrf.mxu0
        %v3143 = vadd.f32 %v2950, %v3142
        %v3144 = vpop.f32.mrf.mxu0
        %v3145 = vadd.f32 %v2952, %v3144
        %v3146 = vpop.f32.mrf.mxu0
        %v3147 = vadd.f32 %v2954, %v3146
        %3148 = vmatprep.mubr.bf16.mxu0 %v1563
        %3149 = vmatmul.mubr.bf16.gmra.mxu0 %v1562
        %v3150 = vpop.f32.mrf.mxu0
        %v3151 = vadd.f32 %v2958, %v3150
        %v3152 = vpop.f32.mrf.mxu0
        %v3153 = vadd.f32 %v2960, %v3152
        %v3154 = vpop.f32.mrf.mxu0
        %v3155 = vadd.f32 %v2962, %v3154
        %v3156 = vpop.f32.mrf.mxu0
        %v3157 = vadd.f32 %v2964, %v3156
        %3158 = vmatprep.mubr.bf16.mxu0 %v1567
        %3159 = vmatmul.mubr.bf16.gmra.mxu0 %v1566
        %v3160 = vpop.f32.mrf.mxu0
        %v3161 = vadd.f32 %v2968, %v3160
        %v3162 = vpop.f32.mrf.mxu0
        %v3163 = vadd.f32 %v2970, %v3162
        %v3164 = vpop.f32.mrf.mxu0
        %v3165 = vadd.f32 %v2972, %v3164
        %v3166 = vpop.f32.mrf.mxu0
        %v3167 = vadd.f32 %v2974, %v3166
        %3168 = vmatprep.mubr.bf16.mxu0 %v1571
        %3169 = vmatmul.mubr.bf16.gmra.mxu0 %v1570
        %v3170 = vpop.f32.mrf.mxu0
        %v3171 = vadd.f32 %v2978, %v3170
        %v3172 = vpop.f32.mrf.mxu0
        %v3173 = vadd.f32 %v2980, %v3172
        %v3174 = vpop.f32.mrf.mxu0
        %v3175 = vadd.f32 %v2982, %v3174
        %v3176 = vpop.f32.mrf.mxu0
        %v3177 = vadd.f32 %v2984, %v3176
        %3178 = vmatprep.mubr.bf16.mxu0 %v1575
        %3179 = vmatmul.mubr.bf16.gmra.mxu0 %v1574
        %v3180 = vpop.f32.mrf.mxu0
        %v3181 = vadd.f32 %v2988, %v3180
        %v3182 = vpop.f32.mrf.mxu0
        %v3183 = vadd.f32 %v2990, %v3182
        %v3184 = vpop.f32.mrf.mxu0
        %v3185 = vadd.f32 %v2992, %v3184
        %v3186 = vpop.f32.mrf.mxu0
        %v3187 = vadd.f32 %v2994, %v3186
        %3188 = vmatprep.mubr.bf16.mxu0 %v1579
        %3189 = vmatmul.mubr.bf16.gmra.mxu0 %v1578
        %v3190 = vpop.f32.mrf.mxu0
        %v3191 = vadd.f32 %v2998, %v3190
        %v3192 = vpop.f32.mrf.mxu0
        %v3193 = vadd.f32 %v3000, %v3192
        %v3194 = vpop.f32.mrf.mxu0
        %v3195 = vadd.f32 %v3002, %v3194
        %v3196 = vpop.f32.mrf.mxu0
        %v3197 = vadd.f32 %v3004, %v3196
        %3198 = vmatprep.mubr.bf16.mxu0 %v1583
        %3199 = vmatmul.mubr.bf16.gmra.mxu0 %v1582
        %v3200 = vpop.f32.mrf.mxu0
        %v3201 = vadd.f32 %v3008, %v3200
        %v3202 = vpop.f32.mrf.mxu0
        %v3203 = vadd.f32 %v3010, %v3202
        %v3204 = vpop.f32.mrf.mxu0
        %v3205 = vadd.f32 %v3012, %v3204
        %v3206 = vpop.f32.mrf.mxu0
        %v3207 = vadd.f32 %v3014, %v3206
        %3208 = vdwg.mxu0
        %v3209 = vtanh.pop %v2665
        %v3210 = vtanh.pop %v2667
        %v3211 = vtanh.pop %v3051
        %v3212 = vtanh.pop %v3053
        %v3213 = vtanh.pop %v2669
        %v3214 = vtanh.pop %v2671
        %v3215 = vtanh.pop %v3055
        %v3216 = vtanh.pop %v3057
        %v3217 = vtanh.pop %v2675
        %v3218 = vtanh.pop %v2677
        %v3219 = vtanh.pop %v3061
        %v3220 = vtanh.pop %v3063
        %v3221 = vtanh.pop %v2679
        %v3222 = vtanh.pop %v2681
        %v3223 = vtanh.pop %v3065
        %v3224 = vtanh.pop %v3067
        %v3225 = vtanh.pop %v2685
        %v3226 = vtanh.pop %v2687
        %v3227 = vtanh.pop %v3071
        %v3228 = vtanh.pop %v3073
        %v3229 = vtanh.pop %v2689
        %v3230 = vtanh.pop %v2691
        %v3231 = vtanh.pop %v3075
        %v3232 = vtanh.pop %v3077
        %v3233 = vtanh.pop %v2695
        %v3234 = vtanh.pop %v2697
        %v3235 = vtanh.pop %v3081
        %v3236 = vtanh.pop %v3083
        %v3237 = vtanh.pop %v2699
        %v3238 = vtanh.pop %v2701
        %v3239 = vtanh.pop %v3085
        %v3240 = vtanh.pop %v3087
        %v3241 = vtanh.pop %v2705
        %v3242 = vtanh.pop %v2707
        %v3243 = vtanh.pop %v3091
        %v3244 = vtanh.pop %v3093
        %v3245 = vtanh.pop %v2709
        %v3246 = vtanh.pop %v2711
        %v3247 = vtanh.pop %v3095
        %v3248 = vtanh.pop %v3097
        %v3249 = vtanh.pop %v2715
        %v3250 = vtanh.pop %v2717
        %v3251 = vtanh.pop %v3101
        %v3252 = vtanh.pop %v3103
        %v3253 = vtanh.pop %v2719
        %v3254 = vtanh.pop %v2721
        %v3255 = vtanh.pop %v3105
        %v3256 = vtanh.pop %v3107
        %v3257 = vtanh.pop %v2725
        %v3258 = vtanh.pop %v2727
        %v3259 = vtanh.pop %v3111
        %v3260 = vtanh.pop %v3113
        %v3261 = vtanh.pop %v2729
        %v3262 = vtanh.pop %v2731
        %v3263 = vtanh.pop %v3115
        %v3264 = vtanh.pop %v3117
        %v3265 = vtanh.pop %v2735
        %v3266 = vtanh.pop %v2737
        %v3267 = vtanh.pop %v3121
        %v3268 = vtanh.pop %v3123
        %v3269 = vtanh.pop %v2739
        %v3270 = vtanh.pop %v2741
        %v3271 = vtanh.pop %v3125
        %v3272 = vtanh.pop %v3127
        %v3273 = vtanh.pop %v2745
        %v3274 = vtanh.pop %v2747
        %v3275 = vtanh.pop %v3131
        %v3276 = vtanh.pop %v3133
        %v3277 = vtanh.pop %v2749
        %v3278 = vtanh.pop %v2751
        %v3279 = vtanh.pop %v3135
        %v3280 = vtanh.pop %v3137
        %v3281 = vtanh.pop %v2755
        %v3282 = vtanh.pop %v2757
        %v3283 = vtanh.pop %v3141
        %v3284 = vtanh.pop %v3143
        %v3285 = vtanh.pop %v2759
        %v3286 = vtanh.pop %v2761
        %v3287 = vtanh.pop %v3145
        %v3288 = vtanh.pop %v3147
        %v3289 = vtanh.pop %v2765
        %v3290 = vtanh.pop %v2767
        %v3291 = vtanh.pop %v3151
        %v3292 = vtanh.pop %v3153
        %v3293 = vtanh.pop %v2769
        %v3294 = vtanh.pop %v2771
        %v3295 = vtanh.pop %v3155
        %v3296 = vtanh.pop %v3157
        %v3297 = vtanh.pop %v2775
        %v3298 = vtanh.pop %v2777
        %v3299 = vtanh.pop %v3161
        %v3300 = vtanh.pop %v3163
        %v3301 = vtanh.pop %v2779
        %v3302 = vtanh.pop %v2781
        %v3303 = vtanh.pop %v3165
        %v3304 = vtanh.pop %v3167
        %v3305 = vtanh.pop %v2785
        %v3306 = vtanh.pop %v2787
        %v3307 = vtanh.pop %v3171
        %v3308 = vtanh.pop %v3173
        %v3309 = vtanh.pop %v2789
        %v3310 = vtanh.pop %v2791
        %v3311 = vtanh.pop %v3175
        %v3312 = vtanh.pop %v3177
        %v3313 = vtanh.pop %v2795
        %v3314 = vtanh.pop %v2797
        %v3315 = vtanh.pop %v3181
        %v3316 = vtanh.pop %v3183
        %v3317 = vtanh.pop %v2799
        %v3318 = vtanh.pop %v2801
        %v3319 = vtanh.pop %v3185
        %v3320 = vtanh.pop %v3187
        %v3321 = vtanh.pop %v2805
        %v3322 = vtanh.pop %v2807
        %v3323 = vtanh.pop %v3191
        %v3324 = vtanh.pop %v3193
        %v3325 = vtanh.pop %v2809
        %v3326 = vtanh.pop %v2811
        %v3327 = vtanh.pop %v3195
        %v3328 = vtanh.pop %v3197
        %v3329 = vtanh.pop %v2815
        %v3330 = vtanh.pop %v2817
        %v3331 = vtanh.pop %v3201
        %v3332 = vtanh.pop %v3203
        %v3333 = vtanh.pop %v2819
        %v3334 = vtanh.pop %v2821
        %v3335 = vtanh.pop %v3205
        %v3336 = vtanh.pop %v3207
        %v3337 = vld [vmem:[#allocation4] sm:$0xff]
        %v3338 = vld [vmem:[#allocation4 + $0x8] sm:$0xff]
        %v3339 = vld [vmem:[#allocation4 + $0x10] sm:$0xff]
        %v3340 = vld [vmem:[#allocation4 + $0x18] sm:$0xff]
        %v3341 = vld [vmem:[#allocation4 + $0x20] sm:$0xff]
        %v3342 = vld [vmem:[#allocation4 + $0x28] sm:$0xff]
        %v3343 = vld [vmem:[#allocation4 + $0x30] sm:$0xff]
        %v3344 = vld [vmem:[#allocation4 + $0x38] sm:$0xff]
        %v3345 = vld [vmem:[#allocation4 + $0x40] sm:$0xff]
        %v3346 = vld [vmem:[#allocation4 + $0x48] sm:$0xff]
        %v3347 = vld [vmem:[#allocation4 + $0x50] sm:$0xff]
        %v3348 = vld [vmem:[#allocation4 + $0x58] sm:$0xff]
        %v3349 = vld [vmem:[#allocation4 + $0x60] sm:$0xff]
        %v3350 = vld [vmem:[#allocation4 + $0x68] sm:$0xff]
        %v3351 = vld [vmem:[#allocation4 + $0x70] sm:$0xff]
        %v3352 = vld [vmem:[#allocation4 + $0x78] sm:$0xff]
        %v3353 = vld [vmem:[#allocation4 + $0x80] sm:$0xff]
        %v3354 = vld [vmem:[#allocation4 + $0x88] sm:$0xff]
        %v3355 = vld [vmem:[#allocation4 + $0x90] sm:$0xff]
        %v3356 = vld [vmem:[#allocation4 + $0x98] sm:$0xff]
        %v3357 = vld [vmem:[#allocation4 + $0xa0] sm:$0xff]
        %v3358 = vld [vmem:[#allocation4 + $0xa8] sm:$0xff]
        %v3359 = vld [vmem:[#allocation4 + $0xb0] sm:$0xff]
        %v3360 = vld [vmem:[#allocation4 + $0xb8] sm:$0xff]
        %v3361 = vld [vmem:[#allocation4 + $0xc0] sm:$0xff]
        %v3362 = vld [vmem:[#allocation4 + $0xc8] sm:$0xff]
        %v3363 = vld [vmem:[#allocation4 + $0xd0] sm:$0xff]
        %v3364 = vld [vmem:[#allocation4 + $0xd8] sm:$0xff]
        %v3365 = vld [vmem:[#allocation4 + $0xe0] sm:$0xff]
        %v3366 = vld [vmem:[#allocation4 + $0xe8] sm:$0xff]
        %v3367 = vld [vmem:[#allocation4 + $0xf0] sm:$0xff]
        %v3368 = vld [vmem:[#allocation4 + $0xf8] sm:$0xff]
        %v3369 = vld [vmem:[#allocation4 + $0x100] sm:$0xff]
        %v3370 = vld [vmem:[#allocation4 + $0x108] sm:$0xff]
        %v3371 = vld [vmem:[#allocation4 + $0x110] sm:$0xff]
        %v3372 = vld [vmem:[#allocation4 + $0x118] sm:$0xff]
        %v3373 = vld [vmem:[#allocation4 + $0x120] sm:$0xff]
        %v3374 = vld [vmem:[#allocation4 + $0x128] sm:$0xff]
        %v3375 = vld [vmem:[#allocation4 + $0x130] sm:$0xff]
        %v3376 = vld [vmem:[#allocation4 + $0x138] sm:$0xff]
        %v3377 = vld [vmem:[#allocation4 + $0x140] sm:$0xff]
        %v3378 = vld [vmem:[#allocation4 + $0x148] sm:$0xff]
        %v3379 = vld [vmem:[#allocation4 + $0x150] sm:$0xff]
        %v3380 = vld [vmem:[#allocation4 + $0x158] sm:$0xff]
        %v3381 = vld [vmem:[#allocation4 + $0x160] sm:$0xff]
        %v3382 = vld [vmem:[#allocation4 + $0x168] sm:$0xff]
        %v3383 = vld [vmem:[#allocation4 + $0x170] sm:$0xff]
        %v3384 = vld [vmem:[#allocation4 + $0x178] sm:$0xff]
        %v3385 = vld [vmem:[#allocation4 + $0x180] sm:$0xff]
        %v3386 = vld [vmem:[#allocation4 + $0x188] sm:$0xff]
        %v3387 = vld [vmem:[#allocation4 + $0x190] sm:$0xff]
        %v3388 = vld [vmem:[#allocation4 + $0x198] sm:$0xff]
        %v3389 = vld [vmem:[#allocation4 + $0x1a0] sm:$0xff]
        %v3390 = vld [vmem:[#allocation4 + $0x1a8] sm:$0xff]
        %v3391 = vld [vmem:[#allocation4 + $0x1b0] sm:$0xff]
        %v3392 = vld [vmem:[#allocation4 + $0x1b8] sm:$0xff]
        %v3393 = vld [vmem:[#allocation4 + $0x1c0] sm:$0xff]
        %v3394 = vld [vmem:[#allocation4 + $0x1c8] sm:$0xff]
        %v3395 = vld [vmem:[#allocation4 + $0x1d0] sm:$0xff]
        %v3396 = vld [vmem:[#allocation4 + $0x1d8] sm:$0xff]
        %v3397 = vld [vmem:[#allocation4 + $0x1e0] sm:$0xff]
        %v3398 = vld [vmem:[#allocation4 + $0x1e8] sm:$0xff]
        %v3399 = vld [vmem:[#allocation4 + $0x1f0] sm:$0xff]
        %v3400 = vld [vmem:[#allocation4 + $0x1f8] sm:$0xff]
        %v3401 = vld [vmem:[#allocation4 + $0x200] sm:$0xff]
        %v3402 = vld [vmem:[#allocation4 + $0x208] sm:$0xff]
        %v3403 = vld [vmem:[#allocation4 + $0x210] sm:$0xff]
        %v3404 = vld [vmem:[#allocation4 + $0x218] sm:$0xff]
        %v3405 = vld [vmem:[#allocation4 + $0x220] sm:$0xff]
        %v3406 = vld [vmem:[#allocation4 + $0x228] sm:$0xff]
        %v3407 = vld [vmem:[#allocation4 + $0x230] sm:$0xff]
        %v3408 = vld [vmem:[#allocation4 + $0x238] sm:$0xff]
        %v3409 = vld [vmem:[#allocation4 + $0x240] sm:$0xff]
        %v3410 = vld [vmem:[#allocation4 + $0x248] sm:$0xff]
        %v3411 = vld [vmem:[#allocation4 + $0x250] sm:$0xff]
        %v3412 = vld [vmem:[#allocation4 + $0x258] sm:$0xff]
        %v3413 = vld [vmem:[#allocation4 + $0x260] sm:$0xff]
        %v3414 = vld [vmem:[#allocation4 + $0x268] sm:$0xff]
        %v3415 = vld [vmem:[#allocation4 + $0x270] sm:$0xff]
        %v3416 = vld [vmem:[#allocation4 + $0x278] sm:$0xff]
        %v3417 = vld [vmem:[#allocation4 + $0x280] sm:$0xff]
        %v3418 = vld [vmem:[#allocation4 + $0x288] sm:$0xff]
        %v3419 = vld [vmem:[#allocation4 + $0x290] sm:$0xff]
        %v3420 = vld [vmem:[#allocation4 + $0x298] sm:$0xff]
        %v3421 = vld [vmem:[#allocation4 + $0x2a0] sm:$0xff]
        %v3422 = vld [vmem:[#allocation4 + $0x2a8] sm:$0xff]
        %v3423 = vld [vmem:[#allocation4 + $0x2b0] sm:$0xff]
        %v3424 = vld [vmem:[#allocation4 + $0x2b8] sm:$0xff]
        %v3425 = vld [vmem:[#allocation4 + $0x2c0] sm:$0xff]
        %v3426 = vld [vmem:[#allocation4 + $0x2c8] sm:$0xff]
        %v3427 = vld [vmem:[#allocation4 + $0x2d0] sm:$0xff]
        %v3428 = vld [vmem:[#allocation4 + $0x2d8] sm:$0xff]
        %v3429 = vld [vmem:[#allocation4 + $0x2e0] sm:$0xff]
        %v3430 = vld [vmem:[#allocation4 + $0x2e8] sm:$0xff]
        %v3431 = vld [vmem:[#allocation4 + $0x2f0] sm:$0xff]
        %v3432 = vld [vmem:[#allocation4 + $0x2f8] sm:$0xff]
        %v3433 = vld [vmem:[#allocation4 + $0x300] sm:$0xff]
        %v3434 = vld [vmem:[#allocation4 + $0x308] sm:$0xff]
        %v3435 = vld [vmem:[#allocation4 + $0x310] sm:$0xff]
        %v3436 = vld [vmem:[#allocation4 + $0x318] sm:$0xff]
        %v3437 = vld [vmem:[#allocation4 + $0x320] sm:$0xff]
        %v3438 = vld [vmem:[#allocation4 + $0x328] sm:$0xff]
        %v3439 = vld [vmem:[#allocation4 + $0x330] sm:$0xff]
        %v3440 = vld [vmem:[#allocation4 + $0x338] sm:$0xff]
        %v3441 = vld [vmem:[#allocation4 + $0x340] sm:$0xff]
        %v3442 = vld [vmem:[#allocation4 + $0x348] sm:$0xff]
        %v3443 = vld [vmem:[#allocation4 + $0x350] sm:$0xff]
        %v3444 = vld [vmem:[#allocation4 + $0x358] sm:$0xff]
        %v3445 = vld [vmem:[#allocation4 + $0x360] sm:$0xff]
        %v3446 = vld [vmem:[#allocation4 + $0x368] sm:$0xff]
        %v3447 = vld [vmem:[#allocation4 + $0x370] sm:$0xff]
        %v3448 = vld [vmem:[#allocation4 + $0x378] sm:$0xff]
        %v3449 = vld [vmem:[#allocation4 + $0x380] sm:$0xff]
        %v3450 = vld [vmem:[#allocation4 + $0x388] sm:$0xff]
        %v3451 = vld [vmem:[#allocation4 + $0x390] sm:$0xff]
        %v3452 = vld [vmem:[#allocation4 + $0x398] sm:$0xff]
        %v3453 = vld [vmem:[#allocation4 + $0x3a0] sm:$0xff]
        %v3454 = vld [vmem:[#allocation4 + $0x3a8] sm:$0xff]
        %v3455 = vld [vmem:[#allocation4 + $0x3b0] sm:$0xff]
        %v3456 = vld [vmem:[#allocation4 + $0x3b8] sm:$0xff]
        %v3457 = vld [vmem:[#allocation4 + $0x3c0] sm:$0xff]
        %v3458 = vld [vmem:[#allocation4 + $0x3c8] sm:$0xff]
        %v3459 = vld [vmem:[#allocation4 + $0x3d0] sm:$0xff]
        %v3460 = vld [vmem:[#allocation4 + $0x3d8] sm:$0xff]
        %v3461 = vld [vmem:[#allocation4 + $0x3e0] sm:$0xff]
        %v3462 = vld [vmem:[#allocation4 + $0x3e8] sm:$0xff]
        %v3463 = vld [vmem:[#allocation4 + $0x3f0] sm:$0xff]
        %v3464 = vld [vmem:[#allocation4 + $0x3f8] sm:$0xff]
        %v3466 = vlaneseq
        %v3467 = vshrl.u32 %v3466, 7
        %v3468 = vsub.s32 0, %v3467
        %v3469 = vrot.slane %v352, %v3468
        %v3470 = vlaneseq
        %v3471 = vshrl.u32 %v3470, 7
        %v3472 = vsub.s32 1, %v3471
        %v3473 = vrot.slane %v352, %v3472
        %v3474 = vlaneseq
        %v3475 = vshrl.u32 %v3474, 7
        %v3476 = vsub.s32 2, %v3475
        %v3477 = vrot.slane %v352, %v3476
        %v3478 = vlaneseq
        %v3479 = vshrl.u32 %v3478, 7
        %v3480 = vsub.s32 3, %v3479
        %v3481 = vrot.slane %v352, %v3480
        %v3614 = vunpack.c.l.b16 %v3337
        %v3615 = vunpack.c.h.b16 %v3337
        %v3616 = vunpack.c.l.b16 %v3338
        %v3617 = vunpack.c.h.b16 %v3338
        %v3618 = vunpack.c.l.b16 %v3339
        %v3619 = vunpack.c.h.b16 %v3339
        %v3620 = vunpack.c.l.b16 %v3340
        %v3621 = vunpack.c.h.b16 %v3340
        %v3622 = vunpack.c.l.b16 %v3341
        %v3623 = vunpack.c.h.b16 %v3341
        %v3624 = vunpack.c.l.b16 %v3342
        %v3625 = vunpack.c.h.b16 %v3342
        %v3626 = vunpack.c.l.b16 %v3343
        %v3627 = vunpack.c.h.b16 %v3343
        %v3628 = vunpack.c.l.b16 %v3344
        %v3629 = vunpack.c.h.b16 %v3344
        %v3630 = vunpack.c.l.b16 %v3345
        %v3631 = vunpack.c.h.b16 %v3345
        %v3632 = vunpack.c.l.b16 %v3346
        %v3633 = vunpack.c.h.b16 %v3346
        %v3634 = vunpack.c.l.b16 %v3347
        %v3635 = vunpack.c.h.b16 %v3347
        %v3636 = vunpack.c.l.b16 %v3348
        %v3637 = vunpack.c.h.b16 %v3348
        %v3638 = vunpack.c.l.b16 %v3349
        %v3639 = vunpack.c.h.b16 %v3349
        %v3640 = vunpack.c.l.b16 %v3350
        %v3641 = vunpack.c.h.b16 %v3350
        %v3642 = vunpack.c.l.b16 %v3351
        %v3643 = vunpack.c.h.b16 %v3351
        %v3644 = vunpack.c.l.b16 %v3352
        %v3645 = vunpack.c.h.b16 %v3352
        %v3646 = vunpack.c.l.b16 %v3353
        %v3647 = vunpack.c.h.b16 %v3353
        %v3648 = vunpack.c.l.b16 %v3354
        %v3649 = vunpack.c.h.b16 %v3354
        %v3650 = vunpack.c.l.b16 %v3355
        %v3651 = vunpack.c.h.b16 %v3355
        %v3652 = vunpack.c.l.b16 %v3356
        %v3653 = vunpack.c.h.b16 %v3356
        %v3654 = vunpack.c.l.b16 %v3357
        %v3655 = vunpack.c.h.b16 %v3357
        %v3656 = vunpack.c.l.b16 %v3358
        %v3657 = vunpack.c.h.b16 %v3358
        %v3658 = vunpack.c.l.b16 %v3359
        %v3659 = vunpack.c.h.b16 %v3359
        %v3660 = vunpack.c.l.b16 %v3360
        %v3661 = vunpack.c.h.b16 %v3360
        %v3662 = vunpack.c.l.b16 %v3361
        %v3663 = vunpack.c.h.b16 %v3361
        %v3664 = vunpack.c.l.b16 %v3362
        %v3665 = vunpack.c.h.b16 %v3362
        %v3666 = vunpack.c.l.b16 %v3363
        %v3667 = vunpack.c.h.b16 %v3363
        %v3668 = vunpack.c.l.b16 %v3364
        %v3669 = vunpack.c.h.b16 %v3364
        %v3670 = vunpack.c.l.b16 %v3365
        %v3671 = vunpack.c.h.b16 %v3365
        %v3672 = vunpack.c.l.b16 %v3366
        %v3673 = vunpack.c.h.b16 %v3366
        %v3674 = vunpack.c.l.b16 %v3367
        %v3675 = vunpack.c.h.b16 %v3367
        %v3676 = vunpack.c.l.b16 %v3368
        %v3677 = vunpack.c.h.b16 %v3368
        %v3678 = vunpack.c.l.b16 %v3369
        %v3679 = vunpack.c.h.b16 %v3369
        %v3680 = vunpack.c.l.b16 %v3370
        %v3681 = vunpack.c.h.b16 %v3370
        %v3682 = vunpack.c.l.b16 %v3371
        %v3683 = vunpack.c.h.b16 %v3371
        %v3684 = vunpack.c.l.b16 %v3372
        %v3685 = vunpack.c.h.b16 %v3372
        %v3686 = vunpack.c.l.b16 %v3373
        %v3687 = vunpack.c.h.b16 %v3373
        %v3688 = vunpack.c.l.b16 %v3374
        %v3689 = vunpack.c.h.b16 %v3374
        %v3690 = vunpack.c.l.b16 %v3375
        %v3691 = vunpack.c.h.b16 %v3375
        %v3692 = vunpack.c.l.b16 %v3376
        %v3693 = vunpack.c.h.b16 %v3376
        %v3694 = vunpack.c.l.b16 %v3377
        %v3695 = vunpack.c.h.b16 %v3377
        %v3696 = vunpack.c.l.b16 %v3378
        %v3697 = vunpack.c.h.b16 %v3378
        %v3698 = vunpack.c.l.b16 %v3379
        %v3699 = vunpack.c.h.b16 %v3379
        %v3700 = vunpack.c.l.b16 %v3380
        %v3701 = vunpack.c.h.b16 %v3380
        %v3702 = vunpack.c.l.b16 %v3381
        %v3703 = vunpack.c.h.b16 %v3381
        %v3704 = vunpack.c.l.b16 %v3382
        %v3705 = vunpack.c.h.b16 %v3382
        %v3706 = vunpack.c.l.b16 %v3383
        %v3707 = vunpack.c.h.b16 %v3383
        %v3708 = vunpack.c.l.b16 %v3384
        %v3709 = vunpack.c.h.b16 %v3384
        %v3710 = vunpack.c.l.b16 %v3385
        %v3711 = vunpack.c.h.b16 %v3385
        %v3712 = vunpack.c.l.b16 %v3386
        %v3713 = vunpack.c.h.b16 %v3386
        %v3714 = vunpack.c.l.b16 %v3387
        %v3715 = vunpack.c.h.b16 %v3387
        %v3716 = vunpack.c.l.b16 %v3388
        %v3717 = vunpack.c.h.b16 %v3388
        %v3718 = vunpack.c.l.b16 %v3389
        %v3719 = vunpack.c.h.b16 %v3389
        %v3720 = vunpack.c.l.b16 %v3390
        %v3721 = vunpack.c.h.b16 %v3390
        %v3722 = vunpack.c.l.b16 %v3391
        %v3723 = vunpack.c.h.b16 %v3391
        %v3724 = vunpack.c.l.b16 %v3392
        %v3725 = vunpack.c.h.b16 %v3392
        %v3726 = vunpack.c.l.b16 %v3393
        %v3727 = vunpack.c.h.b16 %v3393
        %v3728 = vunpack.c.l.b16 %v3394
        %v3729 = vunpack.c.h.b16 %v3394
        %v3730 = vunpack.c.l.b16 %v3395
        %v3731 = vunpack.c.h.b16 %v3395
        %v3732 = vunpack.c.l.b16 %v3396
        %v3733 = vunpack.c.h.b16 %v3396
        %v3734 = vunpack.c.l.b16 %v3397
        %v3735 = vunpack.c.h.b16 %v3397
        %v3736 = vunpack.c.l.b16 %v3398
        %v3737 = vunpack.c.h.b16 %v3398
        %v3738 = vunpack.c.l.b16 %v3399
        %v3739 = vunpack.c.h.b16 %v3399
        %v3740 = vunpack.c.l.b16 %v3400
        %v3741 = vunpack.c.h.b16 %v3400
        %v3742 = vunpack.c.l.b16 %v3401
        %v3743 = vunpack.c.h.b16 %v3401
        %v3744 = vunpack.c.l.b16 %v3402
        %v3745 = vunpack.c.h.b16 %v3402
        %v3746 = vunpack.c.l.b16 %v3403
        %v3747 = vunpack.c.h.b16 %v3403
        %v3748 = vunpack.c.l.b16 %v3404
        %v3749 = vunpack.c.h.b16 %v3404
        %v3750 = vunpack.c.l.b16 %v3405
        %v3751 = vunpack.c.h.b16 %v3405
        %v3752 = vunpack.c.l.b16 %v3406
        %v3753 = vunpack.c.h.b16 %v3406
        %v3754 = vunpack.c.l.b16 %v3407
        %v3755 = vunpack.c.h.b16 %v3407
        %v3756 = vunpack.c.l.b16 %v3408
        %v3757 = vunpack.c.h.b16 %v3408
        %v3758 = vunpack.c.l.b16 %v3409
        %v3759 = vunpack.c.h.b16 %v3409
        %v3760 = vunpack.c.l.b16 %v3410
        %v3761 = vunpack.c.h.b16 %v3410
        %v3762 = vunpack.c.l.b16 %v3411
        %v3763 = vunpack.c.h.b16 %v3411
        %v3764 = vunpack.c.l.b16 %v3412
        %v3765 = vunpack.c.h.b16 %v3412
        %v3766 = vunpack.c.l.b16 %v3413
        %v3767 = vunpack.c.h.b16 %v3413
        %v3768 = vunpack.c.l.b16 %v3414
        %v3769 = vunpack.c.h.b16 %v3414
        %v3770 = vunpack.c.l.b16 %v3415
        %v3771 = vunpack.c.h.b16 %v3415
        %v3772 = vunpack.c.l.b16 %v3416
        %v3773 = vunpack.c.h.b16 %v3416
        %v3774 = vunpack.c.l.b16 %v3417
        %v3775 = vunpack.c.h.b16 %v3417
        %v3776 = vunpack.c.l.b16 %v3418
        %v3777 = vunpack.c.h.b16 %v3418
        %v3778 = vunpack.c.l.b16 %v3419
        %v3779 = vunpack.c.h.b16 %v3419
        %v3780 = vunpack.c.l.b16 %v3420
        %v3781 = vunpack.c.h.b16 %v3420
        %v3782 = vunpack.c.l.b16 %v3421
        %v3783 = vunpack.c.h.b16 %v3421
        %v3784 = vunpack.c.l.b16 %v3422
        %v3785 = vunpack.c.h.b16 %v3422
        %v3786 = vunpack.c.l.b16 %v3423
        %v3787 = vunpack.c.h.b16 %v3423
        %v3788 = vunpack.c.l.b16 %v3424
        %v3789 = vunpack.c.h.b16 %v3424
        %v3790 = vunpack.c.l.b16 %v3425
        %v3791 = vunpack.c.h.b16 %v3425
        %v3792 = vunpack.c.l.b16 %v3426
        %v3793 = vunpack.c.h.b16 %v3426
        %v3794 = vunpack.c.l.b16 %v3427
        %v3795 = vunpack.c.h.b16 %v3427
        %v3796 = vunpack.c.l.b16 %v3428
        %v3797 = vunpack.c.h.b16 %v3428
        %v3798 = vunpack.c.l.b16 %v3429
        %v3799 = vunpack.c.h.b16 %v3429
        %v3800 = vunpack.c.l.b16 %v3430
        %v3801 = vunpack.c.h.b16 %v3430
        %v3802 = vunpack.c.l.b16 %v3431
        %v3803 = vunpack.c.h.b16 %v3431
        %v3804 = vunpack.c.l.b16 %v3432
        %v3805 = vunpack.c.h.b16 %v3432
        %v3806 = vunpack.c.l.b16 %v3433
        %v3807 = vunpack.c.h.b16 %v3433
        %v3808 = vunpack.c.l.b16 %v3434
        %v3809 = vunpack.c.h.b16 %v3434
        %v3810 = vunpack.c.l.b16 %v3435
        %v3811 = vunpack.c.h.b16 %v3435
        %v3812 = vunpack.c.l.b16 %v3436
        %v3813 = vunpack.c.h.b16 %v3436
        %v3814 = vunpack.c.l.b16 %v3437
        %v3815 = vunpack.c.h.b16 %v3437
        %v3816 = vunpack.c.l.b16 %v3438
        %v3817 = vunpack.c.h.b16 %v3438
        %v3818 = vunpack.c.l.b16 %v3439
        %v3819 = vunpack.c.h.b16 %v3439
        %v3820 = vunpack.c.l.b16 %v3440
        %v3821 = vunpack.c.h.b16 %v3440
        %v3822 = vunpack.c.l.b16 %v3441
        %v3823 = vunpack.c.h.b16 %v3441
        %v3824 = vunpack.c.l.b16 %v3442
        %v3825 = vunpack.c.h.b16 %v3442
        %v3826 = vunpack.c.l.b16 %v3443
        %v3827 = vunpack.c.h.b16 %v3443
        %v3828 = vunpack.c.l.b16 %v3444
        %v3829 = vunpack.c.h.b16 %v3444
        %v3830 = vunpack.c.l.b16 %v3445
        %v3831 = vunpack.c.h.b16 %v3445
        %v3832 = vunpack.c.l.b16 %v3446
        %v3833 = vunpack.c.h.b16 %v3446
        %v3834 = vunpack.c.l.b16 %v3447
        %v3835 = vunpack.c.h.b16 %v3447
        %v3836 = vunpack.c.l.b16 %v3448
        %v3837 = vunpack.c.h.b16 %v3448
        %v3838 = vunpack.c.l.b16 %v3449
        %v3839 = vunpack.c.h.b16 %v3449
        %v3840 = vunpack.c.l.b16 %v3450
        %v3841 = vunpack.c.h.b16 %v3450
        %v3842 = vunpack.c.l.b16 %v3451
        %v3843 = vunpack.c.h.b16 %v3451
        %v3844 = vunpack.c.l.b16 %v3452
        %v3845 = vunpack.c.h.b16 %v3452
        %v3846 = vunpack.c.l.b16 %v3453
        %v3847 = vunpack.c.h.b16 %v3453
        %v3848 = vunpack.c.l.b16 %v3454
        %v3849 = vunpack.c.h.b16 %v3454
        %v3850 = vunpack.c.l.b16 %v3455
        %v3851 = vunpack.c.h.b16 %v3455
        %v3852 = vunpack.c.l.b16 %v3456
        %v3853 = vunpack.c.h.b16 %v3456
        %v3854 = vunpack.c.l.b16 %v3457
        %v3855 = vunpack.c.h.b16 %v3457
        %v3856 = vunpack.c.l.b16 %v3458
        %v3857 = vunpack.c.h.b16 %v3458
        %v3858 = vunpack.c.l.b16 %v3459
        %v3859 = vunpack.c.h.b16 %v3459
        %v3860 = vunpack.c.l.b16 %v3460
        %v3861 = vunpack.c.h.b16 %v3460
        %v3862 = vunpack.c.l.b16 %v3461
        %v3863 = vunpack.c.h.b16 %v3461
        %v3864 = vunpack.c.l.b16 %v3462
        %v3865 = vunpack.c.h.b16 %v3462
        %v3866 = vunpack.c.l.b16 %v3463
        %v3867 = vunpack.c.h.b16 %v3463
        %v3868 = vunpack.c.l.b16 %v3464
        %v3869 = vunpack.c.h.b16 %v3464
        %v3870 = vpack.c.b16 %v3618, %v3614
        %v3871 = vpack.c.b16 %v3619, %v3615
        %v3872 = vpack.c.b16 %v3620, %v3616
        %v3873 = vpack.c.b16 %v3621, %v3617
        %v3874 = vpack.c.b16 %v3626, %v3622
        %v3875 = vpack.c.b16 %v3627, %v3623
        %v3876 = vpack.c.b16 %v3628, %v3624
        %v3877 = vpack.c.b16 %v3629, %v3625
        %v3878 = vpack.c.b16 %v3634, %v3630
        %v3879 = vpack.c.b16 %v3635, %v3631
        %v3880 = vpack.c.b16 %v3636, %v3632
        %v3881 = vpack.c.b16 %v3637, %v3633
        %v3882 = vpack.c.b16 %v3642, %v3638
        %v3883 = vpack.c.b16 %v3643, %v3639
        %v3884 = vpack.c.b16 %v3644, %v3640
        %v3885 = vpack.c.b16 %v3645, %v3641
        %v3886 = vpack.c.b16 %v3650, %v3646
        %v3887 = vpack.c.b16 %v3651, %v3647
        %v3888 = vpack.c.b16 %v3652, %v3648
        %v3889 = vpack.c.b16 %v3653, %v3649
        %v3890 = vpack.c.b16 %v3658, %v3654
        %v3891 = vpack.c.b16 %v3659, %v3655
        %v3892 = vpack.c.b16 %v3660, %v3656
        %v3893 = vpack.c.b16 %v3661, %v3657
        %v3894 = vpack.c.b16 %v3666, %v3662
        %v3895 = vpack.c.b16 %v3667, %v3663
        %v3896 = vpack.c.b16 %v3668, %v3664
        %v3897 = vpack.c.b16 %v3669, %v3665
        %v3898 = vpack.c.b16 %v3674, %v3670
        %v3899 = vpack.c.b16 %v3675, %v3671
        %v3900 = vpack.c.b16 %v3676, %v3672
        %v3901 = vpack.c.b16 %v3677, %v3673
        %v3902 = vpack.c.b16 %v3682, %v3678
        %v3903 = vpack.c.b16 %v3683, %v3679
        %v3904 = vpack.c.b16 %v3684, %v3680
        %v3905 = vpack.c.b16 %v3685, %v3681
        %v3906 = vpack.c.b16 %v3690, %v3686
        %v3907 = vpack.c.b16 %v3691, %v3687
        %v3908 = vpack.c.b16 %v3692, %v3688
        %v3909 = vpack.c.b16 %v3693, %v3689
        %v3910 = vpack.c.b16 %v3698, %v3694
        %v3911 = vpack.c.b16 %v3699, %v3695
        %v3912 = vpack.c.b16 %v3700, %v3696
        %v3913 = vpack.c.b16 %v3701, %v3697
        %v3914 = vpack.c.b16 %v3706, %v3702
        %v3915 = vpack.c.b16 %v3707, %v3703
        %v3916 = vpack.c.b16 %v3708, %v3704
        %v3917 = vpack.c.b16 %v3709, %v3705
        %v3918 = vpack.c.b16 %v3714, %v3710
        %v3919 = vpack.c.b16 %v3715, %v3711
        %v3920 = vpack.c.b16 %v3716, %v3712
        %v3921 = vpack.c.b16 %v3717, %v3713
        %v3922 = vpack.c.b16 %v3722, %v3718
        %v3923 = vpack.c.b16 %v3723, %v3719
        %v3924 = vpack.c.b16 %v3724, %v3720
        %v3925 = vpack.c.b16 %v3725, %v3721
        %v3926 = vpack.c.b16 %v3730, %v3726
        %v3927 = vpack.c.b16 %v3731, %v3727
        %v3928 = vpack.c.b16 %v3732, %v3728
        %v3929 = vpack.c.b16 %v3733, %v3729
        %v3930 = vpack.c.b16 %v3738, %v3734
        %v3931 = vpack.c.b16 %v3739, %v3735
        %v3932 = vpack.c.b16 %v3740, %v3736
        %v3933 = vpack.c.b16 %v3741, %v3737
        %v3934 = vpack.c.b16 %v3746, %v3742
        %v3935 = vpack.c.b16 %v3747, %v3743
        %v3936 = vpack.c.b16 %v3748, %v3744
        %v3937 = vpack.c.b16 %v3749, %v3745
        %v3938 = vpack.c.b16 %v3754, %v3750
        %v3939 = vpack.c.b16 %v3755, %v3751
        %v3940 = vpack.c.b16 %v3756, %v3752
        %v3941 = vpack.c.b16 %v3757, %v3753
        %v3942 = vpack.c.b16 %v3762, %v3758
        %v3943 = vpack.c.b16 %v3763, %v3759
        %v3944 = vpack.c.b16 %v3764, %v3760
        %v3945 = vpack.c.b16 %v3765, %v3761
        %v3946 = vpack.c.b16 %v3770, %v3766
        %v3947 = vpack.c.b16 %v3771, %v3767
        %v3948 = vpack.c.b16 %v3772, %v3768
        %v3949 = vpack.c.b16 %v3773, %v3769
        %v3950 = vpack.c.b16 %v3778, %v3774
        %v3951 = vpack.c.b16 %v3779, %v3775
        %v3952 = vpack.c.b16 %v3780, %v3776
        %v3953 = vpack.c.b16 %v3781, %v3777
        %v3954 = vpack.c.b16 %v3786, %v3782
        %v3955 = vpack.c.b16 %v3787, %v3783
        %v3956 = vpack.c.b16 %v3788, %v3784
        %v3957 = vpack.c.b16 %v3789, %v3785
        %v3958 = vpack.c.b16 %v3794, %v3790
        %v3959 = vpack.c.b16 %v3795, %v3791
        %v3960 = vpack.c.b16 %v3796, %v3792
        %v3961 = vpack.c.b16 %v3797, %v3793
        %v3962 = vpack.c.b16 %v3802, %v3798
        %v3963 = vpack.c.b16 %v3803, %v3799
        %v3964 = vpack.c.b16 %v3804, %v3800
        %v3965 = vpack.c.b16 %v3805, %v3801
        %v3966 = vpack.c.b16 %v3810, %v3806
        %v3967 = vpack.c.b16 %v3811, %v3807
        %v3968 = vpack.c.b16 %v3812, %v3808
        %v3969 = vpack.c.b16 %v3813, %v3809
        %v3970 = vpack.c.b16 %v3818, %v3814
        %v3971 = vpack.c.b16 %v3819, %v3815
        %v3972 = vpack.c.b16 %v3820, %v3816
        %v3973 = vpack.c.b16 %v3821, %v3817
        %v3974 = vpack.c.b16 %v3826, %v3822
        %v3975 = vpack.c.b16 %v3827, %v3823
        %v3976 = vpack.c.b16 %v3828, %v3824
        %v3977 = vpack.c.b16 %v3829, %v3825
        %v3978 = vpack.c.b16 %v3834, %v3830
        %v3979 = vpack.c.b16 %v3835, %v3831
        %v3980 = vpack.c.b16 %v3836, %v3832
        %v3981 = vpack.c.b16 %v3837, %v3833
        %v3982 = vpack.c.b16 %v3842, %v3838
        %v3983 = vpack.c.b16 %v3843, %v3839
        %v3984 = vpack.c.b16 %v3844, %v3840
        %v3985 = vpack.c.b16 %v3845, %v3841
        %v3986 = vpack.c.b16 %v3850, %v3846
        %v3987 = vpack.c.b16 %v3851, %v3847
        %v3988 = vpack.c.b16 %v3852, %v3848
        %v3989 = vpack.c.b16 %v3853, %v3849
        %v3990 = vpack.c.b16 %v3858, %v3854
        %v3991 = vpack.c.b16 %v3859, %v3855
        %v3992 = vpack.c.b16 %v3860, %v3856
        %v3993 = vpack.c.b16 %v3861, %v3857
        %v3994 = vpack.c.b16 %v3866, %v3862
        %v3995 = vpack.c.b16 %v3867, %v3863
        %v3996 = vpack.c.b16 %v3868, %v3864
        %v3997 = vpack.c.b16 %v3869, %v3865
        %4126 = vmatprep.subr.bf16.mxu0 %v3899
        %4127 = vmatpush1.bf16.msra.mxu0 %v3898
        %4128 = vmatprep.subr.bf16.mxu0 %v3895
        %4129 = vmatpush1.bf16.msra.mxu0 %v3894
        %4130 = vmatprep.subr.bf16.mxu0 %v3891
        %4131 = vmatpush1.bf16.msra.mxu0 %v3890
        %4132 = vmatprep.subr.bf16.mxu0 %v3887
        %4133 = vmatpush1.bf16.msra.mxu0 %v3886
        %4134 = vmatprep.subr.bf16.mxu0 %v3883
        %4135 = vmatpush1.bf16.msra.mxu0 %v3882
        %4136 = vmatprep.subr.bf16.mxu0 %v3879
        %4137 = vmatpush1.bf16.msra.mxu0 %v3878
        %4138 = vmatprep.subr.bf16.mxu0 %v3875
        %4139 = vmatpush1.bf16.msra.mxu0 %v3874
        %4140 = vmatprep.subr.bf16.mxu0 %v3871
        %4141 = vmatpush1.bf16.msra.mxu0 %v3870
        %4142 = vmatprep.subr.bf16.mxu0 %v3931
        %4143 = vmatpush2.bf16.msra.mxu0 %v3930
        %4144 = vmatprep.subr.bf16.mxu0 %v3927
        %4145 = vmatpush2.bf16.msra.mxu0 %v3926
        %4146 = vmatprep.subr.bf16.mxu0 %v3923
        %4147 = vmatpush2.bf16.msra.mxu0 %v3922
        %4148 = vmatprep.subr.bf16.mxu0 %v3919
        %4149 = vmatpush2.bf16.msra.mxu0 %v3918
        %4150 = vmatprep.subr.bf16.mxu0 %v3915
        %4151 = vmatpush2.bf16.msra.mxu0 %v3914
        %4152 = vmatprep.subr.bf16.mxu0 %v3911
        %4153 = vmatpush2.bf16.msra.mxu0 %v3910
        %4154 = vmatprep.subr.bf16.mxu0 %v3907
        %4155 = vmatpush2.bf16.msra.mxu0 %v3906
        %4156 = vmatprep.subr.bf16.mxu0 %v3903
        %4157 = vmatpush2.bf16.msra.mxu0 %v3902
        %4158 = vmatprep.mubr.bf16.mxu0 %v1585
        %4159 = vmatmul.mubr.bf16.gmra.mxu0 %v1584
        %v4160 = vpop.f32.mrf.mxu0
        %v4161 = vadd.f32 %v3469, %v4160
        %v4162 = vpop.f32.mrf.mxu0
        %v4163 = vadd.f32 %v3473, %v4162
        %v4164 = vpop.f32.mrf.mxu0
        %v4165 = vadd.f32 %v3469, %v4164
        %v4166 = vpop.f32.mrf.mxu0
        %v4167 = vadd.f32 %v3473, %v4166
        %4168 = vmatprep.mubr.bf16.mxu0 %v1589
        %4169 = vmatmul.mubr.bf16.gmra.mxu0 %v1588
        %v4170 = vpop.f32.mrf.mxu0
        %v4171 = vadd.f32 %v3469, %v4170
        %v4172 = vpop.f32.mrf.mxu0
        %v4173 = vadd.f32 %v3473, %v4172
        %v4174 = vpop.f32.mrf.mxu0
        %v4175 = vadd.f32 %v3469, %v4174
        %v4176 = vpop.f32.mrf.mxu0
        %v4177 = vadd.f32 %v3473, %v4176
        %4178 = vmatprep.mubr.bf16.mxu0 %v1593
        %4179 = vmatmul.mubr.bf16.gmra.mxu0 %v1592
        %v4180 = vpop.f32.mrf.mxu0
        %v4181 = vadd.f32 %v3469, %v4180
        %v4182 = vpop.f32.mrf.mxu0
        %v4183 = vadd.f32 %v3473, %v4182
        %v4184 = vpop.f32.mrf.mxu0
        %v4185 = vadd.f32 %v3469, %v4184
        %v4186 = vpop.f32.mrf.mxu0
        %v4187 = vadd.f32 %v3473, %v4186
        %4188 = vmatprep.mubr.bf16.mxu0 %v1597
        %4189 = vmatmul.mubr.bf16.gmra.mxu0 %v1596
        %v4190 = vpop.f32.mrf.mxu0
        %v4191 = vadd.f32 %v3469, %v4190
        %v4192 = vpop.f32.mrf.mxu0
        %v4193 = vadd.f32 %v3473, %v4192
        %v4194 = vpop.f32.mrf.mxu0
        %v4195 = vadd.f32 %v3469, %v4194
        %v4196 = vpop.f32.mrf.mxu0
        %v4197 = vadd.f32 %v3473, %v4196
        %4198 = vmatprep.mubr.bf16.mxu0 %v1601
        %4199 = vmatmul.mubr.bf16.gmra.mxu0 %v1600
        %v4200 = vpop.f32.mrf.mxu0
        %v4201 = vadd.f32 %v3469, %v4200
        %v4202 = vpop.f32.mrf.mxu0
        %v4203 = vadd.f32 %v3473, %v4202
        %v4204 = vpop.f32.mrf.mxu0
        %v4205 = vadd.f32 %v3469, %v4204
        %v4206 = vpop.f32.mrf.mxu0
        %v4207 = vadd.f32 %v3473, %v4206
        %4208 = vmatprep.mubr.bf16.mxu0 %v1605
        %4209 = vmatmul.mubr.bf16.gmra.mxu0 %v1604
        %v4210 = vpop.f32.mrf.mxu0
        %v4211 = vadd.f32 %v3469, %v4210
        %v4212 = vpop.f32.mrf.mxu0
        %v4213 = vadd.f32 %v3473, %v4212
        %v4214 = vpop.f32.mrf.mxu0
        %v4215 = vadd.f32 %v3469, %v4214
        %v4216 = vpop.f32.mrf.mxu0
        %v4217 = vadd.f32 %v3473, %v4216
        %4218 = vmatprep.mubr.bf16.mxu0 %v1609
        %4219 = vmatmul.mubr.bf16.gmra.mxu0 %v1608
        %v4220 = vpop.f32.mrf.mxu0
        %v4221 = vadd.f32 %v3469, %v4220
        %v4222 = vpop.f32.mrf.mxu0
        %v4223 = vadd.f32 %v3473, %v4222
        %v4224 = vpop.f32.mrf.mxu0
        %v4225 = vadd.f32 %v3469, %v4224
        %v4226 = vpop.f32.mrf.mxu0
        %v4227 = vadd.f32 %v3473, %v4226
        %4228 = vmatprep.mubr.bf16.mxu0 %v1613
        %4229 = vmatmul.mubr.bf16.gmra.mxu0 %v1612
        %v4230 = vpop.f32.mrf.mxu0
        %v4231 = vadd.f32 %v3469, %v4230
        %v4232 = vpop.f32.mrf.mxu0
        %v4233 = vadd.f32 %v3473, %v4232
        %v4234 = vpop.f32.mrf.mxu0
        %v4235 = vadd.f32 %v3469, %v4234
        %v4236 = vpop.f32.mrf.mxu0
        %v4237 = vadd.f32 %v3473, %v4236
        %4238 = vmatprep.mubr.bf16.mxu0 %v1617
        %4239 = vmatmul.mubr.bf16.gmra.mxu0 %v1616
        %v4240 = vpop.f32.mrf.mxu0
        %v4241 = vadd.f32 %v3469, %v4240
        %v4242 = vpop.f32.mrf.mxu0
        %v4243 = vadd.f32 %v3473, %v4242
        %v4244 = vpop.f32.mrf.mxu0
        %v4245 = vadd.f32 %v3469, %v4244
        %v4246 = vpop.f32.mrf.mxu0
        %v4247 = vadd.f32 %v3473, %v4246
        %4248 = vmatprep.mubr.bf16.mxu0 %v1621
        %4249 = vmatmul.mubr.bf16.gmra.mxu0 %v1620
        %v4250 = vpop.f32.mrf.mxu0
        %v4251 = vadd.f32 %v3469, %v4250
        %v4252 = vpop.f32.mrf.mxu0
        %v4253 = vadd.f32 %v3473, %v4252
        %v4254 = vpop.f32.mrf.mxu0
        %v4255 = vadd.f32 %v3469, %v4254
        %v4256 = vpop.f32.mrf.mxu0
        %v4257 = vadd.f32 %v3473, %v4256
        %4258 = vmatprep.mubr.bf16.mxu0 %v1625
        %4259 = vmatmul.mubr.bf16.gmra.mxu0 %v1624
        %v4260 = vpop.f32.mrf.mxu0
        %v4261 = vadd.f32 %v3469, %v4260
        %v4262 = vpop.f32.mrf.mxu0
        %v4263 = vadd.f32 %v3473, %v4262
        %v4264 = vpop.f32.mrf.mxu0
        %v4265 = vadd.f32 %v3469, %v4264
        %v4266 = vpop.f32.mrf.mxu0
        %v4267 = vadd.f32 %v3473, %v4266
        %4268 = vmatprep.mubr.bf16.mxu0 %v1629
        %4269 = vmatmul.mubr.bf16.gmra.mxu0 %v1628
        %v4270 = vpop.f32.mrf.mxu0
        %v4271 = vadd.f32 %v3469, %v4270
        %v4272 = vpop.f32.mrf.mxu0
        %v4273 = vadd.f32 %v3473, %v4272
        %v4274 = vpop.f32.mrf.mxu0
        %v4275 = vadd.f32 %v3469, %v4274
        %v4276 = vpop.f32.mrf.mxu0
        %v4277 = vadd.f32 %v3473, %v4276
        %4278 = vmatprep.mubr.bf16.mxu0 %v1633
        %4279 = vmatmul.mubr.bf16.gmra.mxu0 %v1632
        %v4280 = vpop.f32.mrf.mxu0
        %v4281 = vadd.f32 %v3469, %v4280
        %v4282 = vpop.f32.mrf.mxu0
        %v4283 = vadd.f32 %v3473, %v4282
        %v4284 = vpop.f32.mrf.mxu0
        %v4285 = vadd.f32 %v3469, %v4284
        %v4286 = vpop.f32.mrf.mxu0
        %v4287 = vadd.f32 %v3473, %v4286
        %4288 = vmatprep.mubr.bf16.mxu0 %v1637
        %4289 = vmatmul.mubr.bf16.gmra.mxu0 %v1636
        %v4290 = vpop.f32.mrf.mxu0
        %v4291 = vadd.f32 %v3469, %v4290
        %v4292 = vpop.f32.mrf.mxu0
        %v4293 = vadd.f32 %v3473, %v4292
        %v4294 = vpop.f32.mrf.mxu0
        %v4295 = vadd.f32 %v3469, %v4294
        %v4296 = vpop.f32.mrf.mxu0
        %v4297 = vadd.f32 %v3473, %v4296
        %4298 = vmatprep.mubr.bf16.mxu0 %v1641
        %4299 = vmatmul.mubr.bf16.gmra.mxu0 %v1640
        %v4300 = vpop.f32.mrf.mxu0
        %v4301 = vadd.f32 %v3469, %v4300
        %v4302 = vpop.f32.mrf.mxu0
        %v4303 = vadd.f32 %v3473, %v4302
        %v4304 = vpop.f32.mrf.mxu0
        %v4305 = vadd.f32 %v3469, %v4304
        %v4306 = vpop.f32.mrf.mxu0
        %v4307 = vadd.f32 %v3473, %v4306
        %4308 = vmatprep.mubr.bf16.mxu0 %v1645
        %4309 = vmatmul.mubr.bf16.gmra.mxu0 %v1644
        %v4310 = vpop.f32.mrf.mxu0
        %v4311 = vadd.f32 %v3469, %v4310
        %v4312 = vpop.f32.mrf.mxu0
        %v4313 = vadd.f32 %v3473, %v4312
        %v4314 = vpop.f32.mrf.mxu0
        %v4315 = vadd.f32 %v3469, %v4314
        %v4316 = vpop.f32.mrf.mxu0
        %v4317 = vadd.f32 %v3473, %v4316
        %4318 = vdwg.mxu0
        %4319 = vmatprep.subr.bf16.mxu0 %v3963
        %4320 = vmatpush1.bf16.msra.mxu0 %v3962
        %4321 = vmatprep.subr.bf16.mxu0 %v3959
        %4322 = vmatpush1.bf16.msra.mxu0 %v3958
        %4323 = vmatprep.subr.bf16.mxu0 %v3955
        %4324 = vmatpush1.bf16.msra.mxu0 %v3954
        %4325 = vmatprep.subr.bf16.mxu0 %v3951
        %4326 = vmatpush1.bf16.msra.mxu0 %v3950
        %4327 = vmatprep.subr.bf16.mxu0 %v3947
        %4328 = vmatpush1.bf16.msra.mxu0 %v3946
        %4329 = vmatprep.subr.bf16.mxu0 %v3943
        %4330 = vmatpush1.bf16.msra.mxu0 %v3942
        %4331 = vmatprep.subr.bf16.mxu0 %v3939
        %4332 = vmatpush1.bf16.msra.mxu0 %v3938
        %4333 = vmatprep.subr.bf16.mxu0 %v3935
        %4334 = vmatpush1.bf16.msra.mxu0 %v3934
        %4335 = vmatprep.subr.bf16.mxu0 %v3995
        %4336 = vmatpush2.bf16.msra.mxu0 %v3994
        %4337 = vmatprep.subr.bf16.mxu0 %v3991
        %4338 = vmatpush2.bf16.msra.mxu0 %v3990
        %4339 = vmatprep.subr.bf16.mxu0 %v3987
        %4340 = vmatpush2.bf16.msra.mxu0 %v3986
        %4341 = vmatprep.subr.bf16.mxu0 %v3983
        %4342 = vmatpush2.bf16.msra.mxu0 %v3982
        %4343 = vmatprep.subr.bf16.mxu0 %v3979
        %4344 = vmatpush2.bf16.msra.mxu0 %v3978
        %4345 = vmatprep.subr.bf16.mxu0 %v3975
        %4346 = vmatpush2.bf16.msra.mxu0 %v3974
        %4347 = vmatprep.subr.bf16.mxu0 %v3971
        %4348 = vmatpush2.bf16.msra.mxu0 %v3970
        %4349 = vmatprep.subr.bf16.mxu0 %v3967
        %4350 = vmatpush2.bf16.msra.mxu0 %v3966
        %4351 = vmatprep.mubr.bf16.mxu0 %v1587
        %4352 = vmatmul.mubr.bf16.gmra.mxu0 %v1586
        %v4353 = vpop.f32.mrf.mxu0
        %v4354 = vadd.f32 %v4161, %v4353
        %v4355 = vpop.f32.mrf.mxu0
        %v4356 = vadd.f32 %v4163, %v4355
        %v4357 = vpop.f32.mrf.mxu0
        %v4358 = vadd.f32 %v4165, %v4357
        %v4359 = vpop.f32.mrf.mxu0
        %v4360 = vadd.f32 %v4167, %v4359
        %4361 = vmatprep.mubr.bf16.mxu0 %v1591
        %4362 = vmatmul.mubr.bf16.gmra.mxu0 %v1590
        %v4363 = vpop.f32.mrf.mxu0
        %v4364 = vadd.f32 %v4171, %v4363
        %v4365 = vpop.f32.mrf.mxu0
        %v4366 = vadd.f32 %v4173, %v4365
        %v4367 = vpop.f32.mrf.mxu0
        %v4368 = vadd.f32 %v4175, %v4367
        %v4369 = vpop.f32.mrf.mxu0
        %v4370 = vadd.f32 %v4177, %v4369
        %4371 = vmatprep.mubr.bf16.mxu0 %v1595
        %4372 = vmatmul.mubr.bf16.gmra.mxu0 %v1594
        %v4373 = vpop.f32.mrf.mxu0
        %v4374 = vadd.f32 %v4181, %v4373
        %v4375 = vpop.f32.mrf.mxu0
        %v4376 = vadd.f32 %v4183, %v4375
        %v4377 = vpop.f32.mrf.mxu0
        %v4378 = vadd.f32 %v4185, %v4377
        %v4379 = vpop.f32.mrf.mxu0
        %v4380 = vadd.f32 %v4187, %v4379
        %4381 = vmatprep.mubr.bf16.mxu0 %v1599
        %4382 = vmatmul.mubr.bf16.gmra.mxu0 %v1598
        %v4383 = vpop.f32.mrf.mxu0
        %v4384 = vadd.f32 %v4191, %v4383
        %v4385 = vpop.f32.mrf.mxu0
        %v4386 = vadd.f32 %v4193, %v4385
        %v4387 = vpop.f32.mrf.mxu0
        %v4388 = vadd.f32 %v4195, %v4387
        %v4389 = vpop.f32.mrf.mxu0
        %v4390 = vadd.f32 %v4197, %v4389
        %4391 = vmatprep.mubr.bf16.mxu0 %v1603
        %4392 = vmatmul.mubr.bf16.gmra.mxu0 %v1602
        %v4393 = vpop.f32.mrf.mxu0
        %v4394 = vadd.f32 %v4201, %v4393
        %v4395 = vpop.f32.mrf.mxu0
        %v4396 = vadd.f32 %v4203, %v4395
        %v4397 = vpop.f32.mrf.mxu0
        %v4398 = vadd.f32 %v4205, %v4397
        %v4399 = vpop.f32.mrf.mxu0
        %v4400 = vadd.f32 %v4207, %v4399
        %4401 = vmatprep.mubr.bf16.mxu0 %v1607
        %4402 = vmatmul.mubr.bf16.gmra.mxu0 %v1606
        %v4403 = vpop.f32.mrf.mxu0
        %v4404 = vadd.f32 %v4211, %v4403
        %v4405 = vpop.f32.mrf.mxu0
        %v4406 = vadd.f32 %v4213, %v4405
        %v4407 = vpop.f32.mrf.mxu0
        %v4408 = vadd.f32 %v4215, %v4407
        %v4409 = vpop.f32.mrf.mxu0
        %v4410 = vadd.f32 %v4217, %v4409
        %4411 = vmatprep.mubr.bf16.mxu0 %v1611
        %4412 = vmatmul.mubr.bf16.gmra.mxu0 %v1610
        %v4413 = vpop.f32.mrf.mxu0
        %v4414 = vadd.f32 %v4221, %v4413
        %v4415 = vpop.f32.mrf.mxu0
        %v4416 = vadd.f32 %v4223, %v4415
        %v4417 = vpop.f32.mrf.mxu0
        %v4418 = vadd.f32 %v4225, %v4417
        %v4419 = vpop.f32.mrf.mxu0
        %v4420 = vadd.f32 %v4227, %v4419
        %4421 = vmatprep.mubr.bf16.mxu0 %v1615
        %4422 = vmatmul.mubr.bf16.gmra.mxu0 %v1614
        %v4423 = vpop.f32.mrf.mxu0
        %v4424 = vadd.f32 %v4231, %v4423
        %v4425 = vpop.f32.mrf.mxu0
        %v4426 = vadd.f32 %v4233, %v4425
        %v4427 = vpop.f32.mrf.mxu0
        %v4428 = vadd.f32 %v4235, %v4427
        %v4429 = vpop.f32.mrf.mxu0
        %v4430 = vadd.f32 %v4237, %v4429
        %4431 = vmatprep.mubr.bf16.mxu0 %v1619
        %4432 = vmatmul.mubr.bf16.gmra.mxu0 %v1618
        %v4433 = vpop.f32.mrf.mxu0
        %v4434 = vadd.f32 %v4241, %v4433
        %v4435 = vpop.f32.mrf.mxu0
        %v4436 = vadd.f32 %v4243, %v4435
        %v4437 = vpop.f32.mrf.mxu0
        %v4438 = vadd.f32 %v4245, %v4437
        %v4439 = vpop.f32.mrf.mxu0
        %v4440 = vadd.f32 %v4247, %v4439
        %4441 = vmatprep.mubr.bf16.mxu0 %v1623
        %4442 = vmatmul.mubr.bf16.gmra.mxu0 %v1622
        %v4443 = vpop.f32.mrf.mxu0
        %v4444 = vadd.f32 %v4251, %v4443
        %v4445 = vpop.f32.mrf.mxu0
        %v4446 = vadd.f32 %v4253, %v4445
        %v4447 = vpop.f32.mrf.mxu0
        %v4448 = vadd.f32 %v4255, %v4447
        %v4449 = vpop.f32.mrf.mxu0
        %v4450 = vadd.f32 %v4257, %v4449
        %4451 = vmatprep.mubr.bf16.mxu0 %v1627
        %4452 = vmatmul.mubr.bf16.gmra.mxu0 %v1626
        %v4453 = vpop.f32.mrf.mxu0
        %v4454 = vadd.f32 %v4261, %v4453
        %v4455 = vpop.f32.mrf.mxu0
        %v4456 = vadd.f32 %v4263, %v4455
        %v4457 = vpop.f32.mrf.mxu0
        %v4458 = vadd.f32 %v4265, %v4457
        %v4459 = vpop.f32.mrf.mxu0
        %v4460 = vadd.f32 %v4267, %v4459
        %4461 = vmatprep.mubr.bf16.mxu0 %v1631
        %4462 = vmatmul.mubr.bf16.gmra.mxu0 %v1630
        %v4463 = vpop.f32.mrf.mxu0
        %v4464 = vadd.f32 %v4271, %v4463
        %v4465 = vpop.f32.mrf.mxu0
        %v4466 = vadd.f32 %v4273, %v4465
        %v4467 = vpop.f32.mrf.mxu0
        %v4468 = vadd.f32 %v4275, %v4467
        %v4469 = vpop.f32.mrf.mxu0
        %v4470 = vadd.f32 %v4277, %v4469
        %4471 = vmatprep.mubr.bf16.mxu0 %v1635
        %4472 = vmatmul.mubr.bf16.gmra.mxu0 %v1634
        %v4473 = vpop.f32.mrf.mxu0
        %v4474 = vadd.f32 %v4281, %v4473
        %v4475 = vpop.f32.mrf.mxu0
        %v4476 = vadd.f32 %v4283, %v4475
        %v4477 = vpop.f32.mrf.mxu0
        %v4478 = vadd.f32 %v4285, %v4477
        %v4479 = vpop.f32.mrf.mxu0
        %v4480 = vadd.f32 %v4287, %v4479
        %4481 = vmatprep.mubr.bf16.mxu0 %v1639
        %4482 = vmatmul.mubr.bf16.gmra.mxu0 %v1638
        %v4483 = vpop.f32.mrf.mxu0
        %v4484 = vadd.f32 %v4291, %v4483
        %v4485 = vpop.f32.mrf.mxu0
        %v4486 = vadd.f32 %v4293, %v4485
        %v4487 = vpop.f32.mrf.mxu0
        %v4488 = vadd.f32 %v4295, %v4487
        %v4489 = vpop.f32.mrf.mxu0
        %v4490 = vadd.f32 %v4297, %v4489
        %4491 = vmatprep.mubr.bf16.mxu0 %v1643
        %4492 = vmatmul.mubr.bf16.gmra.mxu0 %v1642
        %v4493 = vpop.f32.mrf.mxu0
        %v4494 = vadd.f32 %v4301, %v4493
        %v4495 = vpop.f32.mrf.mxu0
        %v4496 = vadd.f32 %v4303, %v4495
        %v4497 = vpop.f32.mrf.mxu0
        %v4498 = vadd.f32 %v4305, %v4497
        %v4499 = vpop.f32.mrf.mxu0
        %v4500 = vadd.f32 %v4307, %v4499
        %4501 = vmatprep.mubr.bf16.mxu0 %v1647
        %4502 = vmatmul.mubr.bf16.gmra.mxu0 %v1646
        %v4503 = vpop.f32.mrf.mxu0
        %v4504 = vadd.f32 %v4311, %v4503
        %v4505 = vpop.f32.mrf.mxu0
        %v4506 = vadd.f32 %v4313, %v4505
        %v4507 = vpop.f32.mrf.mxu0
        %v4508 = vadd.f32 %v4315, %v4507
        %v4509 = vpop.f32.mrf.mxu0
        %v4510 = vadd.f32 %v4317, %v4509
        %4511 = vdwg.mxu0
        %4512 = vmatprep.subr.bf16.mxu0 %v3901
        %4513 = vmatpush1.bf16.msra.mxu0 %v3900
        %4514 = vmatprep.subr.bf16.mxu0 %v3897
        %4515 = vmatpush1.bf16.msra.mxu0 %v3896
        %4516 = vmatprep.subr.bf16.mxu0 %v3893
        %4517 = vmatpush1.bf16.msra.mxu0 %v3892
        %4518 = vmatprep.subr.bf16.mxu0 %v3889
        %4519 = vmatpush1.bf16.msra.mxu0 %v3888
        %4520 = vmatprep.subr.bf16.mxu0 %v3885
        %4521 = vmatpush1.bf16.msra.mxu0 %v3884
        %4522 = vmatprep.subr.bf16.mxu0 %v3881
        %4523 = vmatpush1.bf16.msra.mxu0 %v3880
        %4524 = vmatprep.subr.bf16.mxu0 %v3877
        %4525 = vmatpush1.bf16.msra.mxu0 %v3876
        %4526 = vmatprep.subr.bf16.mxu0 %v3873
        %4527 = vmatpush1.bf16.msra.mxu0 %v3872
        %4528 = vmatprep.subr.bf16.mxu0 %v3933
        %4529 = vmatpush2.bf16.msra.mxu0 %v3932
        %4530 = vmatprep.subr.bf16.mxu0 %v3929
        %4531 = vmatpush2.bf16.msra.mxu0 %v3928
        %4532 = vmatprep.subr.bf16.mxu0 %v3925
        %4533 = vmatpush2.bf16.msra.mxu0 %v3924
        %4534 = vmatprep.subr.bf16.mxu0 %v3921
        %4535 = vmatpush2.bf16.msra.mxu0 %v3920
        %4536 = vmatprep.subr.bf16.mxu0 %v3917
        %4537 = vmatpush2.bf16.msra.mxu0 %v3916
        %4538 = vmatprep.subr.bf16.mxu0 %v3913
        %4539 = vmatpush2.bf16.msra.mxu0 %v3912
        %4540 = vmatprep.subr.bf16.mxu0 %v3909
        %4541 = vmatpush2.bf16.msra.mxu0 %v3908
        %4542 = vmatprep.subr.bf16.mxu0 %v3905
        %4543 = vmatpush2.bf16.msra.mxu0 %v3904
        %4544 = vmatprep.mubr.bf16.mxu0 %v1585
        %4545 = vmatmul.mubr.bf16.gmra.mxu0 %v1584
        %v4546 = vpop.f32.mrf.mxu0
        %v4547 = vadd.f32 %v3477, %v4546
        %v4548 = vpop.f32.mrf.mxu0
        %v4549 = vadd.f32 %v3481, %v4548
        %v4550 = vpop.f32.mrf.mxu0
        %v4551 = vadd.f32 %v3477, %v4550
        %v4552 = vpop.f32.mrf.mxu0
        %v4553 = vadd.f32 %v3481, %v4552
        %4554 = vmatprep.mubr.bf16.mxu0 %v1589
        %4555 = vmatmul.mubr.bf16.gmra.mxu0 %v1588
        %v4556 = vpop.f32.mrf.mxu0
        %v4557 = vadd.f32 %v3477, %v4556
        %v4558 = vpop.f32.mrf.mxu0
        %v4559 = vadd.f32 %v3481, %v4558
        %v4560 = vpop.f32.mrf.mxu0
        %v4561 = vadd.f32 %v3477, %v4560
        %v4562 = vpop.f32.mrf.mxu0
        %v4563 = vadd.f32 %v3481, %v4562
        %4564 = vmatprep.mubr.bf16.mxu0 %v1593
        %4565 = vmatmul.mubr.bf16.gmra.mxu0 %v1592
        %v4566 = vpop.f32.mrf.mxu0
        %v4567 = vadd.f32 %v3477, %v4566
        %v4568 = vpop.f32.mrf.mxu0
        %v4569 = vadd.f32 %v3481, %v4568
        %v4570 = vpop.f32.mrf.mxu0
        %v4571 = vadd.f32 %v3477, %v4570
        %v4572 = vpop.f32.mrf.mxu0
        %v4573 = vadd.f32 %v3481, %v4572
        %4574 = vmatprep.mubr.bf16.mxu0 %v1597
        %4575 = vmatmul.mubr.bf16.gmra.mxu0 %v1596
        %v4576 = vpop.f32.mrf.mxu0
        %v4577 = vadd.f32 %v3477, %v4576
        %v4578 = vpop.f32.mrf.mxu0
        %v4579 = vadd.f32 %v3481, %v4578
        %v4580 = vpop.f32.mrf.mxu0
        %v4581 = vadd.f32 %v3477, %v4580
        %v4582 = vpop.f32.mrf.mxu0
        %v4583 = vadd.f32 %v3481, %v4582
        %4584 = vmatprep.mubr.bf16.mxu0 %v1601
        %4585 = vmatmul.mubr.bf16.gmra.mxu0 %v1600
        %v4586 = vpop.f32.mrf.mxu0
        %v4587 = vadd.f32 %v3477, %v4586
        %v4588 = vpop.f32.mrf.mxu0
        %v4589 = vadd.f32 %v3481, %v4588
        %v4590 = vpop.f32.mrf.mxu0
        %v4591 = vadd.f32 %v3477, %v4590
        %v4592 = vpop.f32.mrf.mxu0
        %v4593 = vadd.f32 %v3481, %v4592
        %4594 = vmatprep.mubr.bf16.mxu0 %v1605
        %4595 = vmatmul.mubr.bf16.gmra.mxu0 %v1604
        %v4596 = vpop.f32.mrf.mxu0
        %v4597 = vadd.f32 %v3477, %v4596
        %v4598 = vpop.f32.mrf.mxu0
        %v4599 = vadd.f32 %v3481, %v4598
        %v4600 = vpop.f32.mrf.mxu0
        %v4601 = vadd.f32 %v3477, %v4600
        %v4602 = vpop.f32.mrf.mxu0
        %v4603 = vadd.f32 %v3481, %v4602
        %4604 = vmatprep.mubr.bf16.mxu0 %v1609
        %4605 = vmatmul.mubr.bf16.gmra.mxu0 %v1608
        %v4606 = vpop.f32.mrf.mxu0
        %v4607 = vadd.f32 %v3477, %v4606
        %v4608 = vpop.f32.mrf.mxu0
        %v4609 = vadd.f32 %v3481, %v4608
        %v4610 = vpop.f32.mrf.mxu0
        %v4611 = vadd.f32 %v3477, %v4610
        %v4612 = vpop.f32.mrf.mxu0
        %v4613 = vadd.f32 %v3481, %v4612
        %4614 = vmatprep.mubr.bf16.mxu0 %v1613
        %4615 = vmatmul.mubr.bf16.gmra.mxu0 %v1612
        %v4616 = vpop.f32.mrf.mxu0
        %v4617 = vadd.f32 %v3477, %v4616
        %v4618 = vpop.f32.mrf.mxu0
        %v4619 = vadd.f32 %v3481, %v4618
        %v4620 = vpop.f32.mrf.mxu0
        %v4621 = vadd.f32 %v3477, %v4620
        %v4622 = vpop.f32.mrf.mxu0
        %v4623 = vadd.f32 %v3481, %v4622
        %4624 = vmatprep.mubr.bf16.mxu0 %v1617
        %4625 = vmatmul.mubr.bf16.gmra.mxu0 %v1616
        %v4626 = vpop.f32.mrf.mxu0
        %v4627 = vadd.f32 %v3477, %v4626
        %v4628 = vpop.f32.mrf.mxu0
        %v4629 = vadd.f32 %v3481, %v4628
        %v4630 = vpop.f32.mrf.mxu0
        %v4631 = vadd.f32 %v3477, %v4630
        %v4632 = vpop.f32.mrf.mxu0
        %v4633 = vadd.f32 %v3481, %v4632
        %4634 = vmatprep.mubr.bf16.mxu0 %v1621
        %4635 = vmatmul.mubr.bf16.gmra.mxu0 %v1620
        %v4636 = vpop.f32.mrf.mxu0
        %v4637 = vadd.f32 %v3477, %v4636
        %v4638 = vpop.f32.mrf.mxu0
        %v4639 = vadd.f32 %v3481, %v4638
        %v4640 = vpop.f32.mrf.mxu0
        %v4641 = vadd.f32 %v3477, %v4640
        %v4642 = vpop.f32.mrf.mxu0
        %v4643 = vadd.f32 %v3481, %v4642
        %4644 = vmatprep.mubr.bf16.mxu0 %v1625
        %4645 = vmatmul.mubr.bf16.gmra.mxu0 %v1624
        %v4646 = vpop.f32.mrf.mxu0
        %v4647 = vadd.f32 %v3477, %v4646
        %v4648 = vpop.f32.mrf.mxu0
        %v4649 = vadd.f32 %v3481, %v4648
        %v4650 = vpop.f32.mrf.mxu0
        %v4651 = vadd.f32 %v3477, %v4650
        %v4652 = vpop.f32.mrf.mxu0
        %v4653 = vadd.f32 %v3481, %v4652
        %4654 = vmatprep.mubr.bf16.mxu0 %v1629
        %4655 = vmatmul.mubr.bf16.gmra.mxu0 %v1628
        %v4656 = vpop.f32.mrf.mxu0
        %v4657 = vadd.f32 %v3477, %v4656
        %v4658 = vpop.f32.mrf.mxu0
        %v4659 = vadd.f32 %v3481, %v4658
        %v4660 = vpop.f32.mrf.mxu0
        %v4661 = vadd.f32 %v3477, %v4660
        %v4662 = vpop.f32.mrf.mxu0
        %v4663 = vadd.f32 %v3481, %v4662
        %4664 = vmatprep.mubr.bf16.mxu0 %v1633
        %4665 = vmatmul.mubr.bf16.gmra.mxu0 %v1632
        %v4666 = vpop.f32.mrf.mxu0
        %v4667 = vadd.f32 %v3477, %v4666
        %v4668 = vpop.f32.mrf.mxu0
        %v4669 = vadd.f32 %v3481, %v4668
        %v4670 = vpop.f32.mrf.mxu0
        %v4671 = vadd.f32 %v3477, %v4670
        %v4672 = vpop.f32.mrf.mxu0
        %v4673 = vadd.f32 %v3481, %v4672
        %4674 = vmatprep.mubr.bf16.mxu0 %v1637
        %4675 = vmatmul.mubr.bf16.gmra.mxu0 %v1636
        %v4676 = vpop.f32.mrf.mxu0
        %v4677 = vadd.f32 %v3477, %v4676
        %v4678 = vpop.f32.mrf.mxu0
        %v4679 = vadd.f32 %v3481, %v4678
        %v4680 = vpop.f32.mrf.mxu0
        %v4681 = vadd.f32 %v3477, %v4680
        %v4682 = vpop.f32.mrf.mxu0
        %v4683 = vadd.f32 %v3481, %v4682
        %4684 = vmatprep.mubr.bf16.mxu0 %v1641
        %4685 = vmatmul.mubr.bf16.gmra.mxu0 %v1640
        %v4686 = vpop.f32.mrf.mxu0
        %v4687 = vadd.f32 %v3477, %v4686
        %v4688 = vpop.f32.mrf.mxu0
        %v4689 = vadd.f32 %v3481, %v4688
        %v4690 = vpop.f32.mrf.mxu0
        %v4691 = vadd.f32 %v3477, %v4690
        %v4692 = vpop.f32.mrf.mxu0
        %v4693 = vadd.f32 %v3481, %v4692
        %4694 = vmatprep.mubr.bf16.mxu0 %v1645
        %4695 = vmatmul.mubr.bf16.gmra.mxu0 %v1644
        %v4696 = vpop.f32.mrf.mxu0
        %v4697 = vadd.f32 %v3477, %v4696
        %v4698 = vpop.f32.mrf.mxu0
        %v4699 = vadd.f32 %v3481, %v4698
        %v4700 = vpop.f32.mrf.mxu0
        %v4701 = vadd.f32 %v3477, %v4700
        %v4702 = vpop.f32.mrf.mxu0
        %v4703 = vadd.f32 %v3481, %v4702
        %4704 = vdwg.mxu0
        %4705 = vmatprep.subr.bf16.mxu0 %v3965
        %4706 = vmatpush1.bf16.msra.mxu0 %v3964
        %4707 = vmatprep.subr.bf16.mxu0 %v3961
        %4708 = vmatpush1.bf16.msra.mxu0 %v3960
        %4709 = vmatprep.subr.bf16.mxu0 %v3957
        %4710 = vmatpush1.bf16.msra.mxu0 %v3956
        %4711 = vmatprep.subr.bf16.mxu0 %v3953
        %4712 = vmatpush1.bf16.msra.mxu0 %v3952
        %4713 = vmatprep.subr.bf16.mxu0 %v3949
        %4714 = vmatpush1.bf16.msra.mxu0 %v3948
        %4715 = vmatprep.subr.bf16.mxu0 %v3945
        %4716 = vmatpush1.bf16.msra.mxu0 %v3944
        %4717 = vmatprep.subr.bf16.mxu0 %v3941
        %4718 = vmatpush1.bf16.msra.mxu0 %v3940
        %4719 = vmatprep.subr.bf16.mxu0 %v3937
        %4720 = vmatpush1.bf16.msra.mxu0 %v3936
        %4721 = vmatprep.subr.bf16.mxu0 %v3997
        %4722 = vmatpush2.bf16.msra.mxu0 %v3996
        %4723 = vmatprep.subr.bf16.mxu0 %v3993
        %4724 = vmatpush2.bf16.msra.mxu0 %v3992
        %4725 = vmatprep.subr.bf16.mxu0 %v3989
        %4726 = vmatpush2.bf16.msra.mxu0 %v3988
        %4727 = vmatprep.subr.bf16.mxu0 %v3985
        %4728 = vmatpush2.bf16.msra.mxu0 %v3984
        %4729 = vmatprep.subr.bf16.mxu0 %v3981
        %4730 = vmatpush2.bf16.msra.mxu0 %v3980
        %4731 = vmatprep.subr.bf16.mxu0 %v3977
        %4732 = vmatpush2.bf16.msra.mxu0 %v3976
        %4733 = vmatprep.subr.bf16.mxu0 %v3973
        %4734 = vmatpush2.bf16.msra.mxu0 %v3972
        %4735 = vmatprep.subr.bf16.mxu0 %v3969
        %4736 = vmatpush2.bf16.msra.mxu0 %v3968
        %4737 = vmatprep.mubr.bf16.mxu0 %v1587
        %4738 = vmatmul.mubr.bf16.gmra.mxu0 %v1586
        %v4739 = vpop.f32.mrf.mxu0
        %v4740 = vadd.f32 %v4547, %v4739
        %v4741 = vpop.f32.mrf.mxu0
        %v4742 = vadd.f32 %v4549, %v4741
        %v4743 = vpop.f32.mrf.mxu0
        %v4744 = vadd.f32 %v4551, %v4743
        %v4745 = vpop.f32.mrf.mxu0
        %v4746 = vadd.f32 %v4553, %v4745
        %4747 = vmatprep.mubr.bf16.mxu0 %v1591
        %4748 = vmatmul.mubr.bf16.gmra.mxu0 %v1590
        %v4749 = vpop.f32.mrf.mxu0
        %v4750 = vadd.f32 %v4557, %v4749
        %v4751 = vpop.f32.mrf.mxu0
        %v4752 = vadd.f32 %v4559, %v4751
        %v4753 = vpop.f32.mrf.mxu0
        %v4754 = vadd.f32 %v4561, %v4753
        %v4755 = vpop.f32.mrf.mxu0
        %v4756 = vadd.f32 %v4563, %v4755
        %4757 = vmatprep.mubr.bf16.mxu0 %v1595
        %4758 = vmatmul.mubr.bf16.gmra.mxu0 %v1594
        %v4759 = vpop.f32.mrf.mxu0
        %v4760 = vadd.f32 %v4567, %v4759
        %v4761 = vpop.f32.mrf.mxu0
        %v4762 = vadd.f32 %v4569, %v4761
        %v4763 = vpop.f32.mrf.mxu0
        %v4764 = vadd.f32 %v4571, %v4763
        %v4765 = vpop.f32.mrf.mxu0
        %v4766 = vadd.f32 %v4573, %v4765
        %4767 = vmatprep.mubr.bf16.mxu0 %v1599
        %4768 = vmatmul.mubr.bf16.gmra.mxu0 %v1598
        %v4769 = vpop.f32.mrf.mxu0
        %v4770 = vadd.f32 %v4577, %v4769
        %v4771 = vpop.f32.mrf.mxu0
        %v4772 = vadd.f32 %v4579, %v4771
        %v4773 = vpop.f32.mrf.mxu0
        %v4774 = vadd.f32 %v4581, %v4773
        %v4775 = vpop.f32.mrf.mxu0
        %v4776 = vadd.f32 %v4583, %v4775
        %4777 = vmatprep.mubr.bf16.mxu0 %v1603
        %4778 = vmatmul.mubr.bf16.gmra.mxu0 %v1602
        %v4779 = vpop.f32.mrf.mxu0
        %v4780 = vadd.f32 %v4587, %v4779
        %v4781 = vpop.f32.mrf.mxu0
        %v4782 = vadd.f32 %v4589, %v4781
        %v4783 = vpop.f32.mrf.mxu0
        %v4784 = vadd.f32 %v4591, %v4783
        %v4785 = vpop.f32.mrf.mxu0
        %v4786 = vadd.f32 %v4593, %v4785
        %4787 = vmatprep.mubr.bf16.mxu0 %v1607
        %4788 = vmatmul.mubr.bf16.gmra.mxu0 %v1606
        %v4789 = vpop.f32.mrf.mxu0
        %v4790 = vadd.f32 %v4597, %v4789
        %v4791 = vpop.f32.mrf.mxu0
        %v4792 = vadd.f32 %v4599, %v4791
        %v4793 = vpop.f32.mrf.mxu0
        %v4794 = vadd.f32 %v4601, %v4793
        %v4795 = vpop.f32.mrf.mxu0
        %v4796 = vadd.f32 %v4603, %v4795
        %4797 = vmatprep.mubr.bf16.mxu0 %v1611
        %4798 = vmatmul.mubr.bf16.gmra.mxu0 %v1610
        %v4799 = vpop.f32.mrf.mxu0
        %v4800 = vadd.f32 %v4607, %v4799
        %v4801 = vpop.f32.mrf.mxu0
        %v4802 = vadd.f32 %v4609, %v4801
        %v4803 = vpop.f32.mrf.mxu0
        %v4804 = vadd.f32 %v4611, %v4803
        %v4805 = vpop.f32.mrf.mxu0
        %v4806 = vadd.f32 %v4613, %v4805
        %4807 = vmatprep.mubr.bf16.mxu0 %v1615
        %4808 = vmatmul.mubr.bf16.gmra.mxu0 %v1614
        %v4809 = vpop.f32.mrf.mxu0
        %v4810 = vadd.f32 %v4617, %v4809
        %v4811 = vpop.f32.mrf.mxu0
        %v4812 = vadd.f32 %v4619, %v4811
        %v4813 = vpop.f32.mrf.mxu0
        %v4814 = vadd.f32 %v4621, %v4813
        %v4815 = vpop.f32.mrf.mxu0
        %v4816 = vadd.f32 %v4623, %v4815
        %4817 = vmatprep.mubr.bf16.mxu0 %v1619
        %4818 = vmatmul.mubr.bf16.gmra.mxu0 %v1618
        %v4819 = vpop.f32.mrf.mxu0
        %v4820 = vadd.f32 %v4627, %v4819
        %v4821 = vpop.f32.mrf.mxu0
        %v4822 = vadd.f32 %v4629, %v4821
        %v4823 = vpop.f32.mrf.mxu0
        %v4824 = vadd.f32 %v4631, %v4823
        %v4825 = vpop.f32.mrf.mxu0
        %v4826 = vadd.f32 %v4633, %v4825
        %4827 = vmatprep.mubr.bf16.mxu0 %v1623
        %4828 = vmatmul.mubr.bf16.gmra.mxu0 %v1622
        %v4829 = vpop.f32.mrf.mxu0
        %v4830 = vadd.f32 %v4637, %v4829
        %v4831 = vpop.f32.mrf.mxu0
        %v4832 = vadd.f32 %v4639, %v4831
        %v4833 = vpop.f32.mrf.mxu0
        %v4834 = vadd.f32 %v4641, %v4833
        %v4835 = vpop.f32.mrf.mxu0
        %v4836 = vadd.f32 %v4643, %v4835
        %4837 = vmatprep.mubr.bf16.mxu0 %v1627
        %4838 = vmatmul.mubr.bf16.gmra.mxu0 %v1626
        %v4839 = vpop.f32.mrf.mxu0
        %v4840 = vadd.f32 %v4647, %v4839
        %v4841 = vpop.f32.mrf.mxu0
        %v4842 = vadd.f32 %v4649, %v4841
        %v4843 = vpop.f32.mrf.mxu0
        %v4844 = vadd.f32 %v4651, %v4843
        %v4845 = vpop.f32.mrf.mxu0
        %v4846 = vadd.f32 %v4653, %v4845
        %4847 = vmatprep.mubr.bf16.mxu0 %v1631
        %4848 = vmatmul.mubr.bf16.gmra.mxu0 %v1630
        %v4849 = vpop.f32.mrf.mxu0
        %v4850 = vadd.f32 %v4657, %v4849
        %v4851 = vpop.f32.mrf.mxu0
        %v4852 = vadd.f32 %v4659, %v4851
        %v4853 = vpop.f32.mrf.mxu0
        %v4854 = vadd.f32 %v4661, %v4853
        %v4855 = vpop.f32.mrf.mxu0
        %v4856 = vadd.f32 %v4663, %v4855
        %4857 = vmatprep.mubr.bf16.mxu0 %v1635
        %4858 = vmatmul.mubr.bf16.gmra.mxu0 %v1634
        %v4859 = vpop.f32.mrf.mxu0
        %v4860 = vadd.f32 %v4667, %v4859
        %v4861 = vpop.f32.mrf.mxu0
        %v4862 = vadd.f32 %v4669, %v4861
        %v4863 = vpop.f32.mrf.mxu0
        %v4864 = vadd.f32 %v4671, %v4863
        %v4865 = vpop.f32.mrf.mxu0
        %v4866 = vadd.f32 %v4673, %v4865
        %4867 = vmatprep.mubr.bf16.mxu0 %v1639
        %4868 = vmatmul.mubr.bf16.gmra.mxu0 %v1638
        %v4869 = vpop.f32.mrf.mxu0
        %v4870 = vadd.f32 %v4677, %v4869
        %v4871 = vpop.f32.mrf.mxu0
        %v4872 = vadd.f32 %v4679, %v4871
        %v4873 = vpop.f32.mrf.mxu0
        %v4874 = vadd.f32 %v4681, %v4873
        %v4875 = vpop.f32.mrf.mxu0
        %v4876 = vadd.f32 %v4683, %v4875
        %4877 = vmatprep.mubr.bf16.mxu0 %v1643
        %4878 = vmatmul.mubr.bf16.gmra.mxu0 %v1642
        %v4879 = vpop.f32.mrf.mxu0
        %v4880 = vadd.f32 %v4687, %v4879
        %v4881 = vpop.f32.mrf.mxu0
        %v4882 = vadd.f32 %v4689, %v4881
        %v4883 = vpop.f32.mrf.mxu0
        %v4884 = vadd.f32 %v4691, %v4883
        %v4885 = vpop.f32.mrf.mxu0
        %v4886 = vadd.f32 %v4693, %v4885
        %4887 = vmatprep.mubr.bf16.mxu0 %v1647
        %4888 = vmatmul.mubr.bf16.gmra.mxu0 %v1646
        %v4889 = vpop.f32.mrf.mxu0
        %v4890 = vadd.f32 %v4697, %v4889
        %v4891 = vpop.f32.mrf.mxu0
        %v4892 = vadd.f32 %v4699, %v4891
        %v4893 = vpop.f32.mrf.mxu0
        %v4894 = vadd.f32 %v4701, %v4893
        %v4895 = vpop.f32.mrf.mxu0
        %v4896 = vadd.f32 %v4703, %v4895
        %4897 = vdwg.mxu0
        %v4898 = vtanh.pop %v4354
        %v4899 = vtanh.pop %v4356
        %v4900 = vtanh.pop %v4740
        %v4901 = vtanh.pop %v4742
        %v4902 = vtanh.pop %v4358
        %v4903 = vtanh.pop %v4360
        %v4904 = vtanh.pop %v4744
        %v4905 = vtanh.pop %v4746
        %v4906 = vtanh.pop %v4364
        %v4907 = vtanh.pop %v4366
        %v4908 = vtanh.pop %v4750
        %v4909 = vtanh.pop %v4752
        %v4910 = vtanh.pop %v4368
        %v4911 = vtanh.pop %v4370
        %v4912 = vtanh.pop %v4754
        %v4913 = vtanh.pop %v4756
        %v4914 = vtanh.pop %v4374
        %v4915 = vtanh.pop %v4376
        %v4916 = vtanh.pop %v4760
        %v4917 = vtanh.pop %v4762
        %v4918 = vtanh.pop %v4378
        %v4919 = vtanh.pop %v4380
        %v4920 = vtanh.pop %v4764
        %v4921 = vtanh.pop %v4766
        %v4922 = vtanh.pop %v4384
        %v4923 = vtanh.pop %v4386
        %v4924 = vtanh.pop %v4770
        %v4925 = vtanh.pop %v4772
        %v4926 = vtanh.pop %v4388
        %v4927 = vtanh.pop %v4390
        %v4928 = vtanh.pop %v4774
        %v4929 = vtanh.pop %v4776
        %v4930 = vtanh.pop %v4394
        %v4931 = vtanh.pop %v4396
        %v4932 = vtanh.pop %v4780
        %v4933 = vtanh.pop %v4782
        %v4934 = vtanh.pop %v4398
        %v4935 = vtanh.pop %v4400
        %v4936 = vtanh.pop %v4784
        %v4937 = vtanh.pop %v4786
        %v4938 = vtanh.pop %v4404
        %v4939 = vtanh.pop %v4406
        %v4940 = vtanh.pop %v4790
        %v4941 = vtanh.pop %v4792
        %v4942 = vtanh.pop %v4408
        %v4943 = vtanh.pop %v4410
        %v4944 = vtanh.pop %v4794
        %v4945 = vtanh.pop %v4796
        %v4946 = vtanh.pop %v4414
        %v4947 = vtanh.pop %v4416
        %v4948 = vtanh.pop %v4800
        %v4949 = vtanh.pop %v4802
        %v4950 = vtanh.pop %v4418
        %v4951 = vtanh.pop %v4420
        %v4952 = vtanh.pop %v4804
        %v4953 = vtanh.pop %v4806
        %v4954 = vtanh.pop %v4424
        %v4955 = vtanh.pop %v4426
        %v4956 = vtanh.pop %v4810
        %v4957 = vtanh.pop %v4812
        %v4958 = vtanh.pop %v4428
        %v4959 = vtanh.pop %v4430
        %v4960 = vtanh.pop %v4814
        %v4961 = vtanh.pop %v4816
        %v4962 = vtanh.pop %v4434
        %v4963 = vtanh.pop %v4436
        %v4964 = vtanh.pop %v4820
        %v4965 = vtanh.pop %v4822
        %v4966 = vtanh.pop %v4438
        %v4967 = vtanh.pop %v4440
        %v4968 = vtanh.pop %v4824
        %v4969 = vtanh.pop %v4826
        %v4970 = vtanh.pop %v4444
        %v4971 = vtanh.pop %v4446
        %v4972 = vtanh.pop %v4830
        %v4973 = vtanh.pop %v4832
        %v4974 = vtanh.pop %v4448
        %v4975 = vtanh.pop %v4450
        %v4976 = vtanh.pop %v4834
        %v4977 = vtanh.pop %v4836
        %v4978 = vtanh.pop %v4454
        %v4979 = vtanh.pop %v4456
        %v4980 = vtanh.pop %v4840
        %v4981 = vtanh.pop %v4842
        %v4982 = vtanh.pop %v4458
        %v4983 = vtanh.pop %v4460
        %v4984 = vtanh.pop %v4844
        %v4985 = vtanh.pop %v4846
        %v4986 = vtanh.pop %v4464
        %v4987 = vtanh.pop %v4466
        %v4988 = vtanh.pop %v4850
        %v4989 = vtanh.pop %v4852
        %v4990 = vtanh.pop %v4468
        %v4991 = vtanh.pop %v4470
        %v4992 = vtanh.pop %v4854
        %v4993 = vtanh.pop %v4856
        %v4994 = vtanh.pop %v4474
        %v4995 = vtanh.pop %v4476
        %v4996 = vtanh.pop %v4860
        %v4997 = vtanh.pop %v4862
        %v4998 = vtanh.pop %v4478
        %v4999 = vtanh.pop %v4480
        %v5000 = vtanh.pop %v4864
        %v5001 = vtanh.pop %v4866
        %v5002 = vtanh.pop %v4484
        %v5003 = vtanh.pop %v4486
        %v5004 = vtanh.pop %v4870
        %v5005 = vtanh.pop %v4872
        %v5006 = vtanh.pop %v4488
        %v5007 = vtanh.pop %v4490
        %v5008 = vtanh.pop %v4874
        %v5009 = vtanh.pop %v4876
        %v5010 = vtanh.pop %v4494
        %v5011 = vtanh.pop %v4496
        %v5012 = vtanh.pop %v4880
        %v5013 = vtanh.pop %v4882
        %v5014 = vtanh.pop %v4498
        %v5015 = vtanh.pop %v4500
        %v5016 = vtanh.pop %v4884
        %v5017 = vtanh.pop %v4886
        %v5018 = vtanh.pop %v4504
        %v5019 = vtanh.pop %v4506
        %v5020 = vtanh.pop %v4890
        %v5021 = vtanh.pop %v4892
        %v5022 = vtanh.pop %v4508
        %v5023 = vtanh.pop %v4510
        %v5024 = vtanh.pop %v4894
        %v5025 = vtanh.pop %v4896
        %v5026 = vpack.c.bf16 %v3213, %v3209
        %v5027 = vpack.c.bf16 %v3214, %v3210
        %v5028 = vpack.c.bf16 %v3215, %v3211
        %v5029 = vpack.c.bf16 %v3216, %v3212
        %v5030 = vpack.c.bf16 %v3221, %v3217
        %v5031 = vpack.c.bf16 %v3222, %v3218
        %v5032 = vpack.c.bf16 %v3223, %v3219
        %v5033 = vpack.c.bf16 %v3224, %v3220
        %v5034 = vpack.c.bf16 %v3229, %v3225
        %v5035 = vpack.c.bf16 %v3230, %v3226
        %v5036 = vpack.c.bf16 %v3231, %v3227
        %v5037 = vpack.c.bf16 %v3232, %v3228
        %v5038 = vpack.c.bf16 %v3237, %v3233
        %v5039 = vpack.c.bf16 %v3238, %v3234
        %v5040 = vpack.c.bf16 %v3239, %v3235
        %v5041 = vpack.c.bf16 %v3240, %v3236
        %v5042 = vpack.c.bf16 %v3245, %v3241
        %v5043 = vpack.c.bf16 %v3246, %v3242
        %v5044 = vpack.c.bf16 %v3247, %v3243
        %v5045 = vpack.c.bf16 %v3248, %v3244
        %v5046 = vpack.c.bf16 %v3253, %v3249
        %v5047 = vpack.c.bf16 %v3254, %v3250
        %v5048 = vpack.c.bf16 %v3255, %v3251
        %v5049 = vpack.c.bf16 %v3256, %v3252
        %v5050 = vpack.c.bf16 %v3261, %v3257
        %v5051 = vpack.c.bf16 %v3262, %v3258
        %v5052 = vpack.c.bf16 %v3263, %v3259
        %v5053 = vpack.c.bf16 %v3264, %v3260
        %v5054 = vpack.c.bf16 %v3269, %v3265
        %v5055 = vpack.c.bf16 %v3270, %v3266
        %v5056 = vpack.c.bf16 %v3271, %v3267
        %v5057 = vpack.c.bf16 %v3272, %v3268
        %v5058 = vpack.c.bf16 %v3277, %v3273
        %v5059 = vpack.c.bf16 %v3278, %v3274
        %v5060 = vpack.c.bf16 %v3279, %v3275
        %v5061 = vpack.c.bf16 %v3280, %v3276
        %v5062 = vpack.c.bf16 %v3285, %v3281
        %v5063 = vpack.c.bf16 %v3286, %v3282
        %v5064 = vpack.c.bf16 %v3287, %v3283
        %v5065 = vpack.c.bf16 %v3288, %v3284
        %v5066 = vpack.c.bf16 %v3293, %v3289
        %v5067 = vpack.c.bf16 %v3294, %v3290
        %v5068 = vpack.c.bf16 %v3295, %v3291
        %v5069 = vpack.c.bf16 %v3296, %v3292
        %v5070 = vpack.c.bf16 %v3301, %v3297
        %v5071 = vpack.c.bf16 %v3302, %v3298
        %v5072 = vpack.c.bf16 %v3303, %v3299
        %v5073 = vpack.c.bf16 %v3304, %v3300
        %v5074 = vpack.c.bf16 %v3309, %v3305
        %v5075 = vpack.c.bf16 %v3310, %v3306
        %v5076 = vpack.c.bf16 %v3311, %v3307
        %v5077 = vpack.c.bf16 %v3312, %v3308
        %v5078 = vpack.c.bf16 %v3317, %v3313
        %v5079 = vpack.c.bf16 %v3318, %v3314
        %v5080 = vpack.c.bf16 %v3319, %v3315
        %v5081 = vpack.c.bf16 %v3320, %v3316
        %v5082 = vpack.c.bf16 %v3325, %v3321
        %v5083 = vpack.c.bf16 %v3326, %v3322
        %v5084 = vpack.c.bf16 %v3327, %v3323
        %v5085 = vpack.c.bf16 %v3328, %v3324
        %v5086 = vpack.c.bf16 %v3333, %v3329
        %v5087 = vpack.c.bf16 %v3334, %v3330
        %v5088 = vpack.c.bf16 %v3335, %v3331
        %v5089 = vpack.c.bf16 %v3336, %v3332
        %v5090 = vld [vmem:[%s4] sm:$0xf]
        %v5091 = vld [vmem:[%s4 + $0x4] sm:$0xf]
        %v5092 = vld [vmem:[%s4 + $0x8] sm:$0xf]
        %v5093 = vld [vmem:[%s4 + $0xc] sm:$0xf]
        %v5094 = vld [vmem:[%s4 + $0x10] sm:$0xf]
        %v5095 = vld [vmem:[%s4 + $0x14] sm:$0xf]
        %v5096 = vld [vmem:[%s4 + $0x18] sm:$0xf]
        %v5097 = vld [vmem:[%s4 + $0x1c] sm:$0xf]
        %v5098 = vld [vmem:[%s4 + $0x20] sm:$0xf]
        %v5099 = vld [vmem:[%s4 + $0x24] sm:$0xf]
        %v5100 = vld [vmem:[%s4 + $0x28] sm:$0xf]
        %v5101 = vld [vmem:[%s4 + $0x2c] sm:$0xf]
        %v5102 = vld [vmem:[%s4 + $0x30] sm:$0xf]
        %v5103 = vld [vmem:[%s4 + $0x34] sm:$0xf]
        %v5104 = vld [vmem:[%s4 + $0x38] sm:$0xf]
        %v5105 = vld [vmem:[%s4 + $0x3c] sm:$0xf]
        %v5106 = vld [vmem:[%s4 + $0x40] sm:$0xf]
        %v5107 = vld [vmem:[%s4 + $0x44] sm:$0xf]
        %v5108 = vld [vmem:[%s4 + $0x48] sm:$0xf]
        %v5109 = vld [vmem:[%s4 + $0x4c] sm:$0xf]
        %v5110 = vld [vmem:[%s4 + $0x50] sm:$0xf]
        %v5111 = vld [vmem:[%s4 + $0x54] sm:$0xf]
        %v5112 = vld [vmem:[%s4 + $0x58] sm:$0xf]
        %v5113 = vld [vmem:[%s4 + $0x5c] sm:$0xf]
        %v5114 = vld [vmem:[%s4 + $0x60] sm:$0xf]
        %v5115 = vld [vmem:[%s4 + $0x64] sm:$0xf]
        %v5116 = vld [vmem:[%s4 + $0x68] sm:$0xf]
        %v5117 = vld [vmem:[%s4 + $0x6c] sm:$0xf]
        %v5118 = vld [vmem:[%s4 + $0x70] sm:$0xf]
        %v5119 = vld [vmem:[%s4 + $0x74] sm:$0xf]
        %v5120 = vld [vmem:[%s4 + $0x78] sm:$0xf]
        %v5121 = vld [vmem:[%s4 + $0x7c] sm:$0xf]
        %v5122 = vld [vmem:[%s4 + $0x80] sm:$0xf]
        %v5123 = vld [vmem:[%s4 + $0x84] sm:$0xf]
        %v5124 = vld [vmem:[%s4 + $0x88] sm:$0xf]
        %v5125 = vld [vmem:[%s4 + $0x8c] sm:$0xf]
        %v5126 = vld [vmem:[%s4 + $0x90] sm:$0xf]
        %v5127 = vld [vmem:[%s4 + $0x94] sm:$0xf]
        %v5128 = vld [vmem:[%s4 + $0x98] sm:$0xf]
        %v5129 = vld [vmem:[%s4 + $0x9c] sm:$0xf]
        %v5130 = vld [vmem:[%s4 + $0xa0] sm:$0xf]
        %v5131 = vld [vmem:[%s4 + $0xa4] sm:$0xf]
        %v5132 = vld [vmem:[%s4 + $0xa8] sm:$0xf]
        %v5133 = vld [vmem:[%s4 + $0xac] sm:$0xf]
        %v5134 = vld [vmem:[%s4 + $0xb0] sm:$0xf]
        %v5135 = vld [vmem:[%s4 + $0xb4] sm:$0xf]
        %v5136 = vld [vmem:[%s4 + $0xb8] sm:$0xf]
        %v5137 = vld [vmem:[%s4 + $0xbc] sm:$0xf]
        %v5138 = vld [vmem:[%s4 + $0xc0] sm:$0xf]
        %v5139 = vld [vmem:[%s4 + $0xc4] sm:$0xf]
        %v5140 = vld [vmem:[%s4 + $0xc8] sm:$0xf]
        %v5141 = vld [vmem:[%s4 + $0xcc] sm:$0xf]
        %v5142 = vld [vmem:[%s4 + $0xd0] sm:$0xf]
        %v5143 = vld [vmem:[%s4 + $0xd4] sm:$0xf]
        %v5144 = vld [vmem:[%s4 + $0xd8] sm:$0xf]
        %v5145 = vld [vmem:[%s4 + $0xdc] sm:$0xf]
        %v5146 = vld [vmem:[%s4 + $0xe0] sm:$0xf]
        %v5147 = vld [vmem:[%s4 + $0xe4] sm:$0xf]
        %v5148 = vld [vmem:[%s4 + $0xe8] sm:$0xf]
        %v5149 = vld [vmem:[%s4 + $0xec] sm:$0xf]
        %v5150 = vld [vmem:[%s4 + $0xf0] sm:$0xf]
        %v5151 = vld [vmem:[%s4 + $0xf4] sm:$0xf]
        %v5152 = vld [vmem:[%s4 + $0xf8] sm:$0xf]
        %v5153 = vld [vmem:[%s4 + $0xfc] sm:$0xf]
        %v5154 = vpack.c.bf16 %v4902, %v4898
        %v5155 = vpack.c.bf16 %v4903, %v4899
        %v5156 = vpack.c.bf16 %v4904, %v4900
        %v5157 = vpack.c.bf16 %v4905, %v4901
        %v5158 = vpack.c.bf16 %v4910, %v4906
        %v5159 = vpack.c.bf16 %v4911, %v4907
        %v5160 = vpack.c.bf16 %v4912, %v4908
        %v5161 = vpack.c.bf16 %v4913, %v4909
        %v5162 = vpack.c.bf16 %v4918, %v4914
        %v5163 = vpack.c.bf16 %v4919, %v4915
        %v5164 = vpack.c.bf16 %v4920, %v4916
        %v5165 = vpack.c.bf16 %v4921, %v4917
        %v5166 = vpack.c.bf16 %v4926, %v4922
        %v5167 = vpack.c.bf16 %v4927, %v4923
        %v5168 = vpack.c.bf16 %v4928, %v4924
        %v5169 = vpack.c.bf16 %v4929, %v4925
        %v5170 = vpack.c.bf16 %v4934, %v4930
        %v5171 = vpack.c.bf16 %v4935, %v4931
        %v5172 = vpack.c.bf16 %v4936, %v4932
        %v5173 = vpack.c.bf16 %v4937, %v4933
        %v5174 = vpack.c.bf16 %v4942, %v4938
        %v5175 = vpack.c.bf16 %v4943, %v4939
        %v5176 = vpack.c.bf16 %v4944, %v4940
        %v5177 = vpack.c.bf16 %v4945, %v4941
        %v5178 = vpack.c.bf16 %v4950, %v4946
        %v5179 = vpack.c.bf16 %v4951, %v4947
        %v5180 = vpack.c.bf16 %v4952, %v4948
        %v5181 = vpack.c.bf16 %v4953, %v4949
        %v5182 = vpack.c.bf16 %v4958, %v4954
        %v5183 = vpack.c.bf16 %v4959, %v4955
        %v5184 = vpack.c.bf16 %v4960, %v4956
        %v5185 = vpack.c.bf16 %v4961, %v4957
        %v5186 = vpack.c.bf16 %v4966, %v4962
        %v5187 = vpack.c.bf16 %v4967, %v4963
        %v5188 = vpack.c.bf16 %v4968, %v4964
        %v5189 = vpack.c.bf16 %v4969, %v4965
        %v5190 = vpack.c.bf16 %v4974, %v4970
        %v5191 = vpack.c.bf16 %v4975, %v4971
        %v5192 = vpack.c.bf16 %v4976, %v4972
        %v5193 = vpack.c.bf16 %v4977, %v4973
        %v5194 = vpack.c.bf16 %v4982, %v4978
        %v5195 = vpack.c.bf16 %v4983, %v4979
        %v5196 = vpack.c.bf16 %v4984, %v4980
        %v5197 = vpack.c.bf16 %v4985, %v4981
        %v5198 = vpack.c.bf16 %v4990, %v4986
        %v5199 = vpack.c.bf16 %v4991, %v4987
        %v5200 = vpack.c.bf16 %v4992, %v4988
        %v5201 = vpack.c.bf16 %v4993, %v4989
        %v5202 = vpack.c.bf16 %v4998, %v4994
        %v5203 = vpack.c.bf16 %v4999, %v4995
        %v5204 = vpack.c.bf16 %v5000, %v4996
        %v5205 = vpack.c.bf16 %v5001, %v4997
        %v5206 = vpack.c.bf16 %v5006, %v5002
        %v5207 = vpack.c.bf16 %v5007, %v5003
        %v5208 = vpack.c.bf16 %v5008, %v5004
        %v5209 = vpack.c.bf16 %v5009, %v5005
        %v5210 = vpack.c.bf16 %v5014, %v5010
        %v5211 = vpack.c.bf16 %v5015, %v5011
        %v5212 = vpack.c.bf16 %v5016, %v5012
        %v5213 = vpack.c.bf16 %v5017, %v5013
        %v5214 = vpack.c.bf16 %v5022, %v5018
        %v5215 = vpack.c.bf16 %v5023, %v5019
        %v5216 = vpack.c.bf16 %v5024, %v5020
        %v5217 = vpack.c.bf16 %v5025, %v5021
        %v5218 = vld [vmem:[%s4 + $0x100] sm:$0xf]
        %v5219 = vld [vmem:[%s4 + $0x104] sm:$0xf]
        %v5220 = vld [vmem:[%s4 + $0x108] sm:$0xf]
        %v5221 = vld [vmem:[%s4 + $0x10c] sm:$0xf]
        %v5222 = vld [vmem:[%s4 + $0x110] sm:$0xf]
        %v5223 = vld [vmem:[%s4 + $0x114] sm:$0xf]
        %v5224 = vld [vmem:[%s4 + $0x118] sm:$0xf]
        %v5225 = vld [vmem:[%s4 + $0x11c] sm:$0xf]
        %v5226 = vld [vmem:[%s4 + $0x120] sm:$0xf]
        %v5227 = vld [vmem:[%s4 + $0x124] sm:$0xf]
        %v5228 = vld [vmem:[%s4 + $0x128] sm:$0xf]
        %v5229 = vld [vmem:[%s4 + $0x12c] sm:$0xf]
        %v5230 = vld [vmem:[%s4 + $0x130] sm:$0xf]
        %v5231 = vld [vmem:[%s4 + $0x134] sm:$0xf]
        %v5232 = vld [vmem:[%s4 + $0x138] sm:$0xf]
        %v5233 = vld [vmem:[%s4 + $0x13c] sm:$0xf]
        %v5234 = vld [vmem:[%s4 + $0x140] sm:$0xf]
        %v5235 = vld [vmem:[%s4 + $0x144] sm:$0xf]
        %v5236 = vld [vmem:[%s4 + $0x148] sm:$0xf]
        %v5237 = vld [vmem:[%s4 + $0x14c] sm:$0xf]
        %v5238 = vld [vmem:[%s4 + $0x150] sm:$0xf]
        %v5239 = vld [vmem:[%s4 + $0x154] sm:$0xf]
        %v5240 = vld [vmem:[%s4 + $0x158] sm:$0xf]
        %v5241 = vld [vmem:[%s4 + $0x15c] sm:$0xf]
        %v5242 = vld [vmem:[%s4 + $0x160] sm:$0xf]
        %v5243 = vld [vmem:[%s4 + $0x164] sm:$0xf]
        %v5244 = vld [vmem:[%s4 + $0x168] sm:$0xf]
        %v5245 = vld [vmem:[%s4 + $0x16c] sm:$0xf]
        %v5246 = vld [vmem:[%s4 + $0x170] sm:$0xf]
        %v5247 = vld [vmem:[%s4 + $0x174] sm:$0xf]
        %v5248 = vld [vmem:[%s4 + $0x178] sm:$0xf]
        %v5249 = vld [vmem:[%s4 + $0x17c] sm:$0xf]
        %v5250 = vld [vmem:[%s4 + $0x180] sm:$0xf]
        %v5251 = vld [vmem:[%s4 + $0x184] sm:$0xf]
        %v5252 = vld [vmem:[%s4 + $0x188] sm:$0xf]
        %v5253 = vld [vmem:[%s4 + $0x18c] sm:$0xf]
        %v5254 = vld [vmem:[%s4 + $0x190] sm:$0xf]
        %v5255 = vld [vmem:[%s4 + $0x194] sm:$0xf]
        %v5256 = vld [vmem:[%s4 + $0x198] sm:$0xf]
        %v5257 = vld [vmem:[%s4 + $0x19c] sm:$0xf]
        %v5258 = vld [vmem:[%s4 + $0x1a0] sm:$0xf]
        %v5259 = vld [vmem:[%s4 + $0x1a4] sm:$0xf]
        %v5260 = vld [vmem:[%s4 + $0x1a8] sm:$0xf]
        %v5261 = vld [vmem:[%s4 + $0x1ac] sm:$0xf]
        %v5262 = vld [vmem:[%s4 + $0x1b0] sm:$0xf]
        %v5263 = vld [vmem:[%s4 + $0x1b4] sm:$0xf]
        %v5264 = vld [vmem:[%s4 + $0x1b8] sm:$0xf]
        %v5265 = vld [vmem:[%s4 + $0x1bc] sm:$0xf]
        %v5266 = vld [vmem:[%s4 + $0x1c0] sm:$0xf]
        %v5267 = vld [vmem:[%s4 + $0x1c4] sm:$0xf]
        %v5268 = vld [vmem:[%s4 + $0x1c8] sm:$0xf]
        %v5269 = vld [vmem:[%s4 + $0x1cc] sm:$0xf]
        %v5270 = vld [vmem:[%s4 + $0x1d0] sm:$0xf]
        %v5271 = vld [vmem:[%s4 + $0x1d4] sm:$0xf]
        %v5272 = vld [vmem:[%s4 + $0x1d8] sm:$0xf]
        %v5273 = vld [vmem:[%s4 + $0x1dc] sm:$0xf]
        %v5274 = vld [vmem:[%s4 + $0x1e0] sm:$0xf]
        %v5275 = vld [vmem:[%s4 + $0x1e4] sm:$0xf]
        %v5276 = vld [vmem:[%s4 + $0x1e8] sm:$0xf]
        %v5277 = vld [vmem:[%s4 + $0x1ec] sm:$0xf]
        %v5278 = vld [vmem:[%s4 + $0x1f0] sm:$0xf]
        %v5279 = vld [vmem:[%s4 + $0x1f4] sm:$0xf]
        %v5280 = vld [vmem:[%s4 + $0x1f8] sm:$0xf]
        %v5281 = vld [vmem:[%s4 + $0x1fc] sm:$0xf]
        %v5346 = vunpack.c.l.b16 %v5218
        %v5347 = vunpack.c.l.b16 %v5219
        %v5348 = vunpack.c.l.b16 %v5220
        %v5349 = vunpack.c.l.b16 %v5221
        %v5350 = vunpack.c.l.b16 %v5222
        %v5351 = vunpack.c.l.b16 %v5223
        %v5352 = vunpack.c.l.b16 %v5224
        %v5353 = vunpack.c.l.b16 %v5225
        %v5354 = vunpack.c.l.b16 %v5226
        %v5355 = vunpack.c.l.b16 %v5227
        %v5356 = vunpack.c.l.b16 %v5228
        %v5357 = vunpack.c.l.b16 %v5229
        %v5358 = vunpack.c.l.b16 %v5230
        %v5359 = vunpack.c.l.b16 %v5231
        %v5360 = vunpack.c.l.b16 %v5232
        %v5361 = vunpack.c.l.b16 %v5233
        %v5362 = vunpack.c.l.b16 %v5234
        %v5363 = vunpack.c.l.b16 %v5235
        %v5364 = vunpack.c.l.b16 %v5236
        %v5365 = vunpack.c.l.b16 %v5237
        %v5366 = vunpack.c.l.b16 %v5238
        %v5367 = vunpack.c.l.b16 %v5239
        %v5368 = vunpack.c.l.b16 %v5240
        %v5369 = vunpack.c.l.b16 %v5241
        %v5370 = vunpack.c.l.b16 %v5242
        %v5371 = vunpack.c.l.b16 %v5243
        %v5372 = vunpack.c.l.b16 %v5244
        %v5373 = vunpack.c.l.b16 %v5245
        %v5374 = vunpack.c.l.b16 %v5246
        %v5375 = vunpack.c.l.b16 %v5247
        %v5376 = vunpack.c.l.b16 %v5248
        %v5377 = vunpack.c.l.b16 %v5249
        %v5378 = vunpack.c.l.b16 %v5250
        %v5379 = vunpack.c.l.b16 %v5251
        %v5380 = vunpack.c.l.b16 %v5252
        %v5381 = vunpack.c.l.b16 %v5253
        %v5382 = vunpack.c.l.b16 %v5254
        %v5383 = vunpack.c.l.b16 %v5255
        %v5384 = vunpack.c.l.b16 %v5256
        %v5385 = vunpack.c.l.b16 %v5257
        %v5386 = vunpack.c.l.b16 %v5258
        %v5387 = vunpack.c.l.b16 %v5259
        %v5388 = vunpack.c.l.b16 %v5260
        %v5389 = vunpack.c.l.b16 %v5261
        %v5390 = vunpack.c.l.b16 %v5262
        %v5391 = vunpack.c.l.b16 %v5263
        %v5392 = vunpack.c.l.b16 %v5264
        %v5393 = vunpack.c.l.b16 %v5265
        %v5394 = vunpack.c.l.b16 %v5266
        %v5395 = vunpack.c.l.b16 %v5267
        %v5396 = vunpack.c.l.b16 %v5268
        %v5397 = vunpack.c.l.b16 %v5269
        %v5398 = vunpack.c.l.b16 %v5270
        %v5399 = vunpack.c.l.b16 %v5271
        %v5400 = vunpack.c.l.b16 %v5272
        %v5401 = vunpack.c.l.b16 %v5273
        %v5402 = vunpack.c.l.b16 %v5274
        %v5403 = vunpack.c.l.b16 %v5275
        %v5404 = vunpack.c.l.b16 %v5276
        %v5405 = vunpack.c.l.b16 %v5277
        %v5406 = vunpack.c.l.b16 %v5278
        %v5407 = vunpack.c.l.b16 %v5279
        %v5408 = vunpack.c.l.b16 %v5280
        %v5409 = vunpack.c.l.b16 %v5281
        %v5410 = vpack.c.b16 %v5347, %v5346
        %v5411 = vpack.c.b16 %v5349, %v5348
        %v5412 = vpack.c.b16 %v5351, %v5350
        %v5413 = vpack.c.b16 %v5353, %v5352
        %v5414 = vpack.c.b16 %v5355, %v5354
        %v5415 = vpack.c.b16 %v5357, %v5356
        %v5416 = vpack.c.b16 %v5359, %v5358
        %v5417 = vpack.c.b16 %v5361, %v5360
        %v5418 = vpack.c.b16 %v5363, %v5362
        %v5419 = vpack.c.b16 %v5365, %v5364
        %v5420 = vpack.c.b16 %v5367, %v5366
        %v5421 = vpack.c.b16 %v5369, %v5368
        %v5422 = vpack.c.b16 %v5371, %v5370
        %v5423 = vpack.c.b16 %v5373, %v5372
        %v5424 = vpack.c.b16 %v5375, %v5374
        %v5425 = vpack.c.b16 %v5377, %v5376
        %v5426 = vpack.c.b16 %v5379, %v5378
        %v5427 = vpack.c.b16 %v5381, %v5380
        %v5428 = vpack.c.b16 %v5383, %v5382
        %v5429 = vpack.c.b16 %v5385, %v5384
        %v5430 = vpack.c.b16 %v5387, %v5386
        %v5431 = vpack.c.b16 %v5389, %v5388
        %v5432 = vpack.c.b16 %v5391, %v5390
        %v5433 = vpack.c.b16 %v5393, %v5392
        %v5434 = vpack.c.b16 %v5395, %v5394
        %v5435 = vpack.c.b16 %v5397, %v5396
        %v5436 = vpack.c.b16 %v5399, %v5398
        %v5437 = vpack.c.b16 %v5401, %v5400
        %v5438 = vpack.c.b16 %v5403, %v5402
        %v5439 = vpack.c.b16 %v5405, %v5404
        %v5440 = vpack.c.b16 %v5407, %v5406
        %v5441 = vpack.c.b16 %v5409, %v5408
        %5474 = vmatprep.subr.bf16.mxu0 0
        %5475 = vmatpush1.bf16.msra.mxu0 %v5417
        %5476 = vmatprep.subr.bf16.mxu0 0
        %5477 = vmatpush1.bf16.msra.mxu0 %v5416
        %5478 = vmatprep.subr.bf16.mxu0 0
        %5479 = vmatpush1.bf16.msra.mxu0 %v5415
        %5480 = vmatprep.subr.bf16.mxu0 0
        %5481 = vmatpush1.bf16.msra.mxu0 %v5414
        %5482 = vmatprep.subr.bf16.mxu0 0
        %5483 = vmatpush1.bf16.msra.mxu0 %v5413
        %5484 = vmatprep.subr.bf16.mxu0 0
        %5485 = vmatpush1.bf16.msra.mxu0 %v5412
        %5486 = vmatprep.subr.bf16.mxu0 0
        %5487 = vmatpush1.bf16.msra.mxu0 %v5411
        %5488 = vmatprep.subr.bf16.mxu0 0
        %5489 = vmatpush1.bf16.msra.mxu0 %v5410
        %5490 = vmatprep.subr.bf16.mxu0 0
        %5491 = vmatpush2.bf16.msra.mxu0 %v5425
        %5492 = vmatprep.subr.bf16.mxu0 0
        %5493 = vmatpush2.bf16.msra.mxu0 %v5424
        %5494 = vmatprep.subr.bf16.mxu0 0
        %5495 = vmatpush2.bf16.msra.mxu0 %v5423
        %5496 = vmatprep.subr.bf16.mxu0 0
        %5497 = vmatpush2.bf16.msra.mxu0 %v5422
        %5498 = vmatprep.subr.bf16.mxu0 0
        %5499 = vmatpush2.bf16.msra.mxu0 %v5421
        %5500 = vmatprep.subr.bf16.mxu0 0
        %5501 = vmatpush2.bf16.msra.mxu0 %v5420
        %5502 = vmatprep.subr.bf16.mxu0 0
        %5503 = vmatpush2.bf16.msra.mxu0 %v5419
        %5504 = vmatprep.subr.bf16.mxu0 0
        %5505 = vmatpush2.bf16.msra.mxu0 %v5418
        %5506 = vmatprep.mubr.bf16.mxu0 %v5155
        %5507 = vmatmul.mubr.bf16.gmra.mxu0 %v5154
        %v5508 = vpop.f32.mrf.mxu0
        %v5509 = vadd.f32 0.0, %v5508
        %v5510 = vpop.f32.mrf.mxu0
        %v5511 = vpop.f32.mrf.mxu0
        %v5512 = vadd.f32 0.0, %v5511
        %v5513 = vpop.f32.mrf.mxu0
        %5514 = vmatprep.mubr.bf16.mxu0 %v5159
        %5515 = vmatmul.mubr.bf16.gmra.mxu0 %v5158
        %v5516 = vpop.f32.mrf.mxu0
        %v5517 = vadd.f32 0.0, %v5516
        %v5518 = vpop.f32.mrf.mxu0
        %v5519 = vpop.f32.mrf.mxu0
        %v5520 = vadd.f32 0.0, %v5519
        %v5521 = vpop.f32.mrf.mxu0
        %5522 = vmatprep.mubr.bf16.mxu0 %v5163
        %5523 = vmatmul.mubr.bf16.gmra.mxu0 %v5162
        %v5524 = vpop.f32.mrf.mxu0
        %v5525 = vadd.f32 0.0, %v5524
        %v5526 = vpop.f32.mrf.mxu0
        %v5527 = vpop.f32.mrf.mxu0
        %v5528 = vadd.f32 0.0, %v5527
        %v5529 = vpop.f32.mrf.mxu0
        %5530 = vmatprep.mubr.bf16.mxu0 %v5167
        %5531 = vmatmul.mubr.bf16.gmra.mxu0 %v5166
        %v5532 = vpop.f32.mrf.mxu0
        %v5533 = vadd.f32 0.0, %v5532
        %v5534 = vpop.f32.mrf.mxu0
        %v5535 = vpop.f32.mrf.mxu0
        %v5536 = vadd.f32 0.0, %v5535
        %v5537 = vpop.f32.mrf.mxu0
        %5538 = vmatprep.mubr.bf16.mxu0 %v5171
        %5539 = vmatmul.mubr.bf16.gmra.mxu0 %v5170
        %v5540 = vpop.f32.mrf.mxu0
        %v5541 = vadd.f32 0.0, %v5540
        %v5542 = vpop.f32.mrf.mxu0
        %v5543 = vpop.f32.mrf.mxu0
        %v5544 = vadd.f32 0.0, %v5543
        %v5545 = vpop.f32.mrf.mxu0
        %5546 = vmatprep.mubr.bf16.mxu0 %v5175
        %5547 = vmatmul.mubr.bf16.gmra.mxu0 %v5174
        %v5548 = vpop.f32.mrf.mxu0
        %v5549 = vadd.f32 0.0, %v5548
        %v5550 = vpop.f32.mrf.mxu0
        %v5551 = vpop.f32.mrf.mxu0
        %v5552 = vadd.f32 0.0, %v5551
        %v5553 = vpop.f32.mrf.mxu0
        %5554 = vmatprep.mubr.bf16.mxu0 %v5179
        %5555 = vmatmul.mubr.bf16.gmra.mxu0 %v5178
        %v5556 = vpop.f32.mrf.mxu0
        %v5557 = vadd.f32 0.0, %v5556
        %v5558 = vpop.f32.mrf.mxu0
        %v5559 = vpop.f32.mrf.mxu0
        %v5560 = vadd.f32 0.0, %v5559
        %v5561 = vpop.f32.mrf.mxu0
        %5562 = vmatprep.mubr.bf16.mxu0 %v5183
        %5563 = vmatmul.mubr.bf16.gmra.mxu0 %v5182
        %v5564 = vpop.f32.mrf.mxu0
        %v5565 = vadd.f32 0.0, %v5564
        %v5566 = vpop.f32.mrf.mxu0
        %v5567 = vpop.f32.mrf.mxu0
        %v5568 = vadd.f32 0.0, %v5567
        %v5569 = vpop.f32.mrf.mxu0
        %5570 = vmatprep.mubr.bf16.mxu0 %v5187
        %5571 = vmatmul.mubr.bf16.gmra.mxu0 %v5186
        %v5572 = vpop.f32.mrf.mxu0
        %v5573 = vadd.f32 0.0, %v5572
        %v5574 = vpop.f32.mrf.mxu0
        %v5575 = vpop.f32.mrf.mxu0
        %v5576 = vadd.f32 0.0, %v5575
        %v5577 = vpop.f32.mrf.mxu0
        %5578 = vmatprep.mubr.bf16.mxu0 %v5191
        %5579 = vmatmul.mubr.bf16.gmra.mxu0 %v5190
        %v5580 = vpop.f32.mrf.mxu0
        %v5581 = vadd.f32 0.0, %v5580
        %v5582 = vpop.f32.mrf.mxu0
        %v5583 = vpop.f32.mrf.mxu0
        %v5584 = vadd.f32 0.0, %v5583
        %v5585 = vpop.f32.mrf.mxu0
        %5586 = vmatprep.mubr.bf16.mxu0 %v5195
        %5587 = vmatmul.mubr.bf16.gmra.mxu0 %v5194
        %v5588 = vpop.f32.mrf.mxu0
        %v5589 = vadd.f32 0.0, %v5588
        %v5590 = vpop.f32.mrf.mxu0
        %v5591 = vpop.f32.mrf.mxu0
        %v5592 = vadd.f32 0.0, %v5591
        %v5593 = vpop.f32.mrf.mxu0
        %5594 = vmatprep.mubr.bf16.mxu0 %v5199
        %5595 = vmatmul.mubr.bf16.gmra.mxu0 %v5198
        %v5596 = vpop.f32.mrf.mxu0
        %v5597 = vadd.f32 0.0, %v5596
        %v5598 = vpop.f32.mrf.mxu0
        %v5599 = vpop.f32.mrf.mxu0
        %v5600 = vadd.f32 0.0, %v5599
        %v5601 = vpop.f32.mrf.mxu0
        %5602 = vmatprep.mubr.bf16.mxu0 %v5203
        %5603 = vmatmul.mubr.bf16.gmra.mxu0 %v5202
        %v5604 = vpop.f32.mrf.mxu0
        %v5605 = vadd.f32 0.0, %v5604
        %v5606 = vpop.f32.mrf.mxu0
        %v5607 = vpop.f32.mrf.mxu0
        %v5608 = vadd.f32 0.0, %v5607
        %v5609 = vpop.f32.mrf.mxu0
        %5610 = vmatprep.mubr.bf16.mxu0 %v5207
        %5611 = vmatmul.mubr.bf16.gmra.mxu0 %v5206
        %v5612 = vpop.f32.mrf.mxu0
        %v5613 = vadd.f32 0.0, %v5612
        %v5614 = vpop.f32.mrf.mxu0
        %v5615 = vpop.f32.mrf.mxu0
        %v5616 = vadd.f32 0.0, %v5615
        %v5617 = vpop.f32.mrf.mxu0
        %5618 = vmatprep.mubr.bf16.mxu0 %v5211
        %5619 = vmatmul.mubr.bf16.gmra.mxu0 %v5210
        %v5620 = vpop.f32.mrf.mxu0
        %v5621 = vadd.f32 0.0, %v5620
        %v5622 = vpop.f32.mrf.mxu0
        %v5623 = vpop.f32.mrf.mxu0
        %v5624 = vadd.f32 0.0, %v5623
        %v5625 = vpop.f32.mrf.mxu0
        %5626 = vmatprep.mubr.bf16.mxu0 %v5215
        %5627 = vmatmul.mubr.bf16.gmra.mxu0 %v5214
        %v5628 = vpop.f32.mrf.mxu0
        %v5629 = vadd.f32 0.0, %v5628
        %v5630 = vpop.f32.mrf.mxu0
        %v5631 = vpop.f32.mrf.mxu0
        %v5632 = vadd.f32 0.0, %v5631
        %v5633 = vpop.f32.mrf.mxu0
        %5634 = vdwg.mxu0
        %5635 = vmatprep.subr.bf16.mxu0 0
        %5636 = vmatpush1.bf16.msra.mxu0 %v5433
        %5637 = vmatprep.subr.bf16.mxu0 0
        %5638 = vmatpush1.bf16.msra.mxu0 %v5432
        %5639 = vmatprep.subr.bf16.mxu0 0
        %5640 = vmatpush1.bf16.msra.mxu0 %v5431
        %5641 = vmatprep.subr.bf16.mxu0 0
        %5642 = vmatpush1.bf16.msra.mxu0 %v5430
        %5643 = vmatprep.subr.bf16.mxu0 0
        %5644 = vmatpush1.bf16.msra.mxu0 %v5429
        %5645 = vmatprep.subr.bf16.mxu0 0
        %5646 = vmatpush1.bf16.msra.mxu0 %v5428
        %5647 = vmatprep.subr.bf16.mxu0 0
        %5648 = vmatpush1.bf16.msra.mxu0 %v5427
        %5649 = vmatprep.subr.bf16.mxu0 0
        %5650 = vmatpush1.bf16.msra.mxu0 %v5426
        %5651 = vmatprep.subr.bf16.mxu0 0
        %5652 = vmatpush2.bf16.msra.mxu0 %v5441
        %5653 = vmatprep.subr.bf16.mxu0 0
        %5654 = vmatpush2.bf16.msra.mxu0 %v5440
        %5655 = vmatprep.subr.bf16.mxu0 0
        %5656 = vmatpush2.bf16.msra.mxu0 %v5439
        %5657 = vmatprep.subr.bf16.mxu0 0
        %5658 = vmatpush2.bf16.msra.mxu0 %v5438
        %5659 = vmatprep.subr.bf16.mxu0 0
        %5660 = vmatpush2.bf16.msra.mxu0 %v5437
        %5661 = vmatprep.subr.bf16.mxu0 0
        %5662 = vmatpush2.bf16.msra.mxu0 %v5436
        %5663 = vmatprep.subr.bf16.mxu0 0
        %5664 = vmatpush2.bf16.msra.mxu0 %v5435
        %5665 = vmatprep.subr.bf16.mxu0 0
        %5666 = vmatpush2.bf16.msra.mxu0 %v5434
        %5667 = vmatprep.mubr.bf16.mxu0 %v5157
        %5668 = vmatmul.mubr.bf16.gmra.mxu0 %v5156
        %v5669 = vpop.f32.mrf.mxu0
        %v5670 = vadd.f32 %v5509, %v5669
        %v5671 = vpop.f32.mrf.mxu0
        %v5672 = vpop.f32.mrf.mxu0
        %v5673 = vadd.f32 %v5512, %v5672
        %v5674 = vpop.f32.mrf.mxu0
        %5675 = vmatprep.mubr.bf16.mxu0 %v5161
        %5676 = vmatmul.mubr.bf16.gmra.mxu0 %v5160
        %v5677 = vpop.f32.mrf.mxu0
        %v5678 = vadd.f32 %v5517, %v5677
        %v5679 = vpop.f32.mrf.mxu0
        %v5680 = vpop.f32.mrf.mxu0
        %v5681 = vadd.f32 %v5520, %v5680
        %v5682 = vpop.f32.mrf.mxu0
        %5683 = vmatprep.mubr.bf16.mxu0 %v5165
        %5684 = vmatmul.mubr.bf16.gmra.mxu0 %v5164
        %v5685 = vpop.f32.mrf.mxu0
        %v5686 = vadd.f32 %v5525, %v5685
        %v5687 = vpop.f32.mrf.mxu0
        %v5688 = vpop.f32.mrf.mxu0
        %v5689 = vadd.f32 %v5528, %v5688
        %v5690 = vpop.f32.mrf.mxu0
        %5691 = vmatprep.mubr.bf16.mxu0 %v5169
        %5692 = vmatmul.mubr.bf16.gmra.mxu0 %v5168
        %v5693 = vpop.f32.mrf.mxu0
        %v5694 = vadd.f32 %v5533, %v5693
        %v5695 = vpop.f32.mrf.mxu0
        %v5696 = vpop.f32.mrf.mxu0
        %v5697 = vadd.f32 %v5536, %v5696
        %v5698 = vpop.f32.mrf.mxu0
        %5699 = vmatprep.mubr.bf16.mxu0 %v5173
        %5700 = vmatmul.mubr.bf16.gmra.mxu0 %v5172
        %v5701 = vpop.f32.mrf.mxu0
        %v5702 = vadd.f32 %v5541, %v5701
        %v5703 = vpop.f32.mrf.mxu0
        %v5704 = vpop.f32.mrf.mxu0
        %v5705 = vadd.f32 %v5544, %v5704
        %v5706 = vpop.f32.mrf.mxu0
        %5707 = vmatprep.mubr.bf16.mxu0 %v5177
        %5708 = vmatmul.mubr.bf16.gmra.mxu0 %v5176
        %v5709 = vpop.f32.mrf.mxu0
        %v5710 = vadd.f32 %v5549, %v5709
        %v5711 = vpop.f32.mrf.mxu0
        %v5712 = vpop.f32.mrf.mxu0
        %v5713 = vadd.f32 %v5552, %v5712
        %v5714 = vpop.f32.mrf.mxu0
        %5715 = vmatprep.mubr.bf16.mxu0 %v5181
        %5716 = vmatmul.mubr.bf16.gmra.mxu0 %v5180
        %v5717 = vpop.f32.mrf.mxu0
        %v5718 = vadd.f32 %v5557, %v5717
        %v5719 = vpop.f32.mrf.mxu0
        %v5720 = vpop.f32.mrf.mxu0
        %v5721 = vadd.f32 %v5560, %v5720
        %v5722 = vpop.f32.mrf.mxu0
        %5723 = vmatprep.mubr.bf16.mxu0 %v5185
        %5724 = vmatmul.mubr.bf16.gmra.mxu0 %v5184
        %v5725 = vpop.f32.mrf.mxu0
        %v5726 = vadd.f32 %v5565, %v5725
        %v5727 = vpop.f32.mrf.mxu0
        %v5728 = vpop.f32.mrf.mxu0
        %v5729 = vadd.f32 %v5568, %v5728
        %v5730 = vpop.f32.mrf.mxu0
        %5731 = vmatprep.mubr.bf16.mxu0 %v5189
        %5732 = vmatmul.mubr.bf16.gmra.mxu0 %v5188
        %v5733 = vpop.f32.mrf.mxu0
        %v5734 = vadd.f32 %v5573, %v5733
        %v5735 = vpop.f32.mrf.mxu0
        %v5736 = vpop.f32.mrf.mxu0
        %v5737 = vadd.f32 %v5576, %v5736
        %v5738 = vpop.f32.mrf.mxu0
        %5739 = vmatprep.mubr.bf16.mxu0 %v5193
        %5740 = vmatmul.mubr.bf16.gmra.mxu0 %v5192
        %v5741 = vpop.f32.mrf.mxu0
        %v5742 = vadd.f32 %v5581, %v5741
        %v5743 = vpop.f32.mrf.mxu0
        %v5744 = vpop.f32.mrf.mxu0
        %v5745 = vadd.f32 %v5584, %v5744
        %v5746 = vpop.f32.mrf.mxu0
        %5747 = vmatprep.mubr.bf16.mxu0 %v5197
        %5748 = vmatmul.mubr.bf16.gmra.mxu0 %v5196
        %v5749 = vpop.f32.mrf.mxu0
        %v5750 = vadd.f32 %v5589, %v5749
        %v5751 = vpop.f32.mrf.mxu0
        %v5752 = vpop.f32.mrf.mxu0
        %v5753 = vadd.f32 %v5592, %v5752
        %v5754 = vpop.f32.mrf.mxu0
        %5755 = vmatprep.mubr.bf16.mxu0 %v5201
        %5756 = vmatmul.mubr.bf16.gmra.mxu0 %v5200
        %v5757 = vpop.f32.mrf.mxu0
        %v5758 = vadd.f32 %v5597, %v5757
        %v5759 = vpop.f32.mrf.mxu0
        %v5760 = vpop.f32.mrf.mxu0
        %v5761 = vadd.f32 %v5600, %v5760
        %v5762 = vpop.f32.mrf.mxu0
        %5763 = vmatprep.mubr.bf16.mxu0 %v5205
        %5764 = vmatmul.mubr.bf16.gmra.mxu0 %v5204
        %v5765 = vpop.f32.mrf.mxu0
        %v5766 = vadd.f32 %v5605, %v5765
        %v5767 = vpop.f32.mrf.mxu0
        %v5768 = vpop.f32.mrf.mxu0
        %v5769 = vadd.f32 %v5608, %v5768
        %v5770 = vpop.f32.mrf.mxu0
        %5771 = vmatprep.mubr.bf16.mxu0 %v5209
        %5772 = vmatmul.mubr.bf16.gmra.mxu0 %v5208
        %v5773 = vpop.f32.mrf.mxu0
        %v5774 = vadd.f32 %v5613, %v5773
        %v5775 = vpop.f32.mrf.mxu0
        %v5776 = vpop.f32.mrf.mxu0
        %v5777 = vadd.f32 %v5616, %v5776
        %v5778 = vpop.f32.mrf.mxu0
        %5779 = vmatprep.mubr.bf16.mxu0 %v5213
        %5780 = vmatmul.mubr.bf16.gmra.mxu0 %v5212
        %v5781 = vpop.f32.mrf.mxu0
        %v5782 = vadd.f32 %v5621, %v5781
        %v5783 = vpop.f32.mrf.mxu0
        %v5784 = vpop.f32.mrf.mxu0
        %v5785 = vadd.f32 %v5624, %v5784
        %v5786 = vpop.f32.mrf.mxu0
        %5787 = vmatprep.mubr.bf16.mxu0 %v5217
        %5788 = vmatmul.mubr.bf16.gmra.mxu0 %v5216
        %v5789 = vpop.f32.mrf.mxu0
        %v5790 = vadd.f32 %v5629, %v5789
        %v5791 = vpop.f32.mrf.mxu0
        %v5792 = vpop.f32.mrf.mxu0
        %v5793 = vadd.f32 %v5632, %v5792
        %v5794 = vpop.f32.mrf.mxu0
        %5795 = vdwg.mxu0
        %v5860 = vunpack.c.l.b16 %v5090
        %v5861 = vunpack.c.l.b16 %v5091
        %v5862 = vunpack.c.l.b16 %v5092
        %v5863 = vunpack.c.l.b16 %v5093
        %v5864 = vunpack.c.l.b16 %v5094
        %v5865 = vunpack.c.l.b16 %v5095
        %v5866 = vunpack.c.l.b16 %v5096
        %v5867 = vunpack.c.l.b16 %v5097
        %v5868 = vunpack.c.l.b16 %v5098
        %v5869 = vunpack.c.l.b16 %v5099
        %v5870 = vunpack.c.l.b16 %v5100
        %v5871 = vunpack.c.l.b16 %v5101
        %v5872 = vunpack.c.l.b16 %v5102
        %v5873 = vunpack.c.l.b16 %v5103
        %v5874 = vunpack.c.l.b16 %v5104
        %v5875 = vunpack.c.l.b16 %v5105
        %v5876 = vunpack.c.l.b16 %v5106
        %v5877 = vunpack.c.l.b16 %v5107
        %v5878 = vunpack.c.l.b16 %v5108
        %v5879 = vunpack.c.l.b16 %v5109
        %v5880 = vunpack.c.l.b16 %v5110
        %v5881 = vunpack.c.l.b16 %v5111
        %v5882 = vunpack.c.l.b16 %v5112
        %v5883 = vunpack.c.l.b16 %v5113
        %v5884 = vunpack.c.l.b16 %v5114
        %v5885 = vunpack.c.l.b16 %v5115
        %v5886 = vunpack.c.l.b16 %v5116
        %v5887 = vunpack.c.l.b16 %v5117
        %v5888 = vunpack.c.l.b16 %v5118
        %v5889 = vunpack.c.l.b16 %v5119
        %v5890 = vunpack.c.l.b16 %v5120
        %v5891 = vunpack.c.l.b16 %v5121
        %v5892 = vunpack.c.l.b16 %v5122
        %v5893 = vunpack.c.l.b16 %v5123
        %v5894 = vunpack.c.l.b16 %v5124
        %v5895 = vunpack.c.l.b16 %v5125
        %v5896 = vunpack.c.l.b16 %v5126
        %v5897 = vunpack.c.l.b16 %v5127
        %v5898 = vunpack.c.l.b16 %v5128
        %v5899 = vunpack.c.l.b16 %v5129
        %v5900 = vunpack.c.l.b16 %v5130
        %v5901 = vunpack.c.l.b16 %v5131
        %v5902 = vunpack.c.l.b16 %v5132
        %v5903 = vunpack.c.l.b16 %v5133
        %v5904 = vunpack.c.l.b16 %v5134
        %v5905 = vunpack.c.l.b16 %v5135
        %v5906 = vunpack.c.l.b16 %v5136
        %v5907 = vunpack.c.l.b16 %v5137
        %v5908 = vunpack.c.l.b16 %v5138
        %v5909 = vunpack.c.l.b16 %v5139
        %v5910 = vunpack.c.l.b16 %v5140
        %v5911 = vunpack.c.l.b16 %v5141
        %v5912 = vunpack.c.l.b16 %v5142
        %v5913 = vunpack.c.l.b16 %v5143
        %v5914 = vunpack.c.l.b16 %v5144
        %v5915 = vunpack.c.l.b16 %v5145
        %v5916 = vunpack.c.l.b16 %v5146
        %v5917 = vunpack.c.l.b16 %v5147
        %v5918 = vunpack.c.l.b16 %v5148
        %v5919 = vunpack.c.l.b16 %v5149
        %v5920 = vunpack.c.l.b16 %v5150
        %v5921 = vunpack.c.l.b16 %v5151
        %v5922 = vunpack.c.l.b16 %v5152
        %v5923 = vunpack.c.l.b16 %v5153
        %v5924 = vpack.c.b16 %v5861, %v5860
        %v5925 = vpack.c.b16 %v5863, %v5862
        %v5926 = vpack.c.b16 %v5865, %v5864
        %v5927 = vpack.c.b16 %v5867, %v5866
        %v5928 = vpack.c.b16 %v5869, %v5868
        %v5929 = vpack.c.b16 %v5871, %v5870
        %v5930 = vpack.c.b16 %v5873, %v5872
        %v5931 = vpack.c.b16 %v5875, %v5874
        %v5932 = vpack.c.b16 %v5877, %v5876
        %v5933 = vpack.c.b16 %v5879, %v5878
        %v5934 = vpack.c.b16 %v5881, %v5880
        %v5935 = vpack.c.b16 %v5883, %v5882
        %v5936 = vpack.c.b16 %v5885, %v5884
        %v5937 = vpack.c.b16 %v5887, %v5886
        %v5938 = vpack.c.b16 %v5889, %v5888
        %v5939 = vpack.c.b16 %v5891, %v5890
        %v5940 = vpack.c.b16 %v5893, %v5892
        %v5941 = vpack.c.b16 %v5895, %v5894
        %v5942 = vpack.c.b16 %v5897, %v5896
        %v5943 = vpack.c.b16 %v5899, %v5898
        %v5944 = vpack.c.b16 %v5901, %v5900
        %v5945 = vpack.c.b16 %v5903, %v5902
        %v5946 = vpack.c.b16 %v5905, %v5904
        %v5947 = vpack.c.b16 %v5907, %v5906
        %v5948 = vpack.c.b16 %v5909, %v5908
        %v5949 = vpack.c.b16 %v5911, %v5910
        %v5950 = vpack.c.b16 %v5913, %v5912
        %v5951 = vpack.c.b16 %v5915, %v5914
        %v5952 = vpack.c.b16 %v5917, %v5916
        %v5953 = vpack.c.b16 %v5919, %v5918
        %v5954 = vpack.c.b16 %v5921, %v5920
        %v5955 = vpack.c.b16 %v5923, %v5922
        %5988 = vmatprep.subr.bf16.mxu0 0
        %5989 = vmatpush1.bf16.msra.mxu0 %v5931
        %5990 = vmatprep.subr.bf16.mxu0 0
        %5991 = vmatpush1.bf16.msra.mxu0 %v5930
        %5992 = vmatprep.subr.bf16.mxu0 0
        %5993 = vmatpush1.bf16.msra.mxu0 %v5929
        %5994 = vmatprep.subr.bf16.mxu0 0
        %5995 = vmatpush1.bf16.msra.mxu0 %v5928
        %5996 = vmatprep.subr.bf16.mxu0 0
        %5997 = vmatpush1.bf16.msra.mxu0 %v5927
        %5998 = vmatprep.subr.bf16.mxu0 0
        %5999 = vmatpush1.bf16.msra.mxu0 %v5926
        %6000 = vmatprep.subr.bf16.mxu0 0
        %6001 = vmatpush1.bf16.msra.mxu0 %v5925
        %6002 = vmatprep.subr.bf16.mxu0 0
        %6003 = vmatpush1.bf16.msra.mxu0 %v5924
        %6004 = vmatprep.subr.bf16.mxu0 0
        %6005 = vmatpush2.bf16.msra.mxu0 %v5939
        %6006 = vmatprep.subr.bf16.mxu0 0
        %6007 = vmatpush2.bf16.msra.mxu0 %v5938
        %6008 = vmatprep.subr.bf16.mxu0 0
        %6009 = vmatpush2.bf16.msra.mxu0 %v5937
        %6010 = vmatprep.subr.bf16.mxu0 0
        %6011 = vmatpush2.bf16.msra.mxu0 %v5936
        %6012 = vmatprep.subr.bf16.mxu0 0
        %6013 = vmatpush2.bf16.msra.mxu0 %v5935
        %6014 = vmatprep.subr.bf16.mxu0 0
        %6015 = vmatpush2.bf16.msra.mxu0 %v5934
        %6016 = vmatprep.subr.bf16.mxu0 0
        %6017 = vmatpush2.bf16.msra.mxu0 %v5933
        %6018 = vmatprep.subr.bf16.mxu0 0
        %6019 = vmatpush2.bf16.msra.mxu0 %v5932
        %6020 = vmatprep.mubr.bf16.mxu0 %v5027
        %6021 = vmatmul.mubr.bf16.gmra.mxu0 %v5026
        %v6022 = vpop.f32.mrf.mxu0
        %v6023 = vadd.f32 %v5670, %v6022
        %v6024 = vpop.f32.mrf.mxu0
        %v6025 = vpop.f32.mrf.mxu0
        %v6026 = vadd.f32 %v5673, %v6025
        %v6027 = vpop.f32.mrf.mxu0
        %6028 = vmatprep.mubr.bf16.mxu0 %v5031
        %6029 = vmatmul.mubr.bf16.gmra.mxu0 %v5030
        %v6030 = vpop.f32.mrf.mxu0
        %v6031 = vadd.f32 %v5678, %v6030
        %v6032 = vpop.f32.mrf.mxu0
        %v6033 = vpop.f32.mrf.mxu0
        %v6034 = vadd.f32 %v5681, %v6033
        %v6035 = vpop.f32.mrf.mxu0
        %6036 = vmatprep.mubr.bf16.mxu0 %v5035
        %6037 = vmatmul.mubr.bf16.gmra.mxu0 %v5034
        %v6038 = vpop.f32.mrf.mxu0
        %v6039 = vadd.f32 %v5686, %v6038
        %v6040 = vpop.f32.mrf.mxu0
        %v6041 = vpop.f32.mrf.mxu0
        %v6042 = vadd.f32 %v5689, %v6041
        %v6043 = vpop.f32.mrf.mxu0
        %6044 = vmatprep.mubr.bf16.mxu0 %v5039
        %6045 = vmatmul.mubr.bf16.gmra.mxu0 %v5038
        %v6046 = vpop.f32.mrf.mxu0
        %v6047 = vadd.f32 %v5694, %v6046
        %v6048 = vpop.f32.mrf.mxu0
        %v6049 = vpop.f32.mrf.mxu0
        %v6050 = vadd.f32 %v5697, %v6049
        %v6051 = vpop.f32.mrf.mxu0
        %6052 = vmatprep.mubr.bf16.mxu0 %v5043
        %6053 = vmatmul.mubr.bf16.gmra.mxu0 %v5042
        %v6054 = vpop.f32.mrf.mxu0
        %v6055 = vadd.f32 %v5702, %v6054
        %v6056 = vpop.f32.mrf.mxu0
        %v6057 = vpop.f32.mrf.mxu0
        %v6058 = vadd.f32 %v5705, %v6057
        %v6059 = vpop.f32.mrf.mxu0
        %6060 = vmatprep.mubr.bf16.mxu0 %v5047
        %6061 = vmatmul.mubr.bf16.gmra.mxu0 %v5046
        %v6062 = vpop.f32.mrf.mxu0
        %v6063 = vadd.f32 %v5710, %v6062
        %v6064 = vpop.f32.mrf.mxu0
        %v6065 = vpop.f32.mrf.mxu0
        %v6066 = vadd.f32 %v5713, %v6065
        %v6067 = vpop.f32.mrf.mxu0
        %6068 = vmatprep.mubr.bf16.mxu0 %v5051
        %6069 = vmatmul.mubr.bf16.gmra.mxu0 %v5050
        %v6070 = vpop.f32.mrf.mxu0
        %v6071 = vadd.f32 %v5718, %v6070
        %v6072 = vpop.f32.mrf.mxu0
        %v6073 = vpop.f32.mrf.mxu0
        %v6074 = vadd.f32 %v5721, %v6073
        %v6075 = vpop.f32.mrf.mxu0
        %6076 = vmatprep.mubr.bf16.mxu0 %v5055
        %6077 = vmatmul.mubr.bf16.gmra.mxu0 %v5054
        %v6078 = vpop.f32.mrf.mxu0
        %v6079 = vadd.f32 %v5726, %v6078
        %v6080 = vpop.f32.mrf.mxu0
        %v6081 = vpop.f32.mrf.mxu0
        %v6082 = vadd.f32 %v5729, %v6081
        %v6083 = vpop.f32.mrf.mxu0
        %6084 = vmatprep.mubr.bf16.mxu0 %v5059
        %6085 = vmatmul.mubr.bf16.gmra.mxu0 %v5058
        %v6086 = vpop.f32.mrf.mxu0
        %v6087 = vadd.f32 %v5734, %v6086
        %v6088 = vpop.f32.mrf.mxu0
        %v6089 = vpop.f32.mrf.mxu0
        %v6090 = vadd.f32 %v5737, %v6089
        %v6091 = vpop.f32.mrf.mxu0
        %6092 = vmatprep.mubr.bf16.mxu0 %v5063
        %6093 = vmatmul.mubr.bf16.gmra.mxu0 %v5062
        %v6094 = vpop.f32.mrf.mxu0
        %v6095 = vadd.f32 %v5742, %v6094
        %v6096 = vpop.f32.mrf.mxu0
        %v6097 = vpop.f32.mrf.mxu0
        %v6098 = vadd.f32 %v5745, %v6097
        %v6099 = vpop.f32.mrf.mxu0
        %6100 = vmatprep.mubr.bf16.mxu0 %v5067
        %6101 = vmatmul.mubr.bf16.gmra.mxu0 %v5066
        %v6102 = vpop.f32.mrf.mxu0
        %v6103 = vadd.f32 %v5750, %v6102
        %v6104 = vpop.f32.mrf.mxu0
        %v6105 = vpop.f32.mrf.mxu0
        %v6106 = vadd.f32 %v5753, %v6105
        %v6107 = vpop.f32.mrf.mxu0
        %6108 = vmatprep.mubr.bf16.mxu0 %v5071
        %6109 = vmatmul.mubr.bf16.gmra.mxu0 %v5070
        %v6110 = vpop.f32.mrf.mxu0
        %v6111 = vadd.f32 %v5758, %v6110
        %v6112 = vpop.f32.mrf.mxu0
        %v6113 = vpop.f32.mrf.mxu0
        %v6114 = vadd.f32 %v5761, %v6113
        %v6115 = vpop.f32.mrf.mxu0
        %6116 = vmatprep.mubr.bf16.mxu0 %v5075
        %6117 = vmatmul.mubr.bf16.gmra.mxu0 %v5074
        %v6118 = vpop.f32.mrf.mxu0
        %v6119 = vadd.f32 %v5766, %v6118
        %v6120 = vpop.f32.mrf.mxu0
        %v6121 = vpop.f32.mrf.mxu0
        %v6122 = vadd.f32 %v5769, %v6121
        %v6123 = vpop.f32.mrf.mxu0
        %6124 = vmatprep.mubr.bf16.mxu0 %v5079
        %6125 = vmatmul.mubr.bf16.gmra.mxu0 %v5078
        %v6126 = vpop.f32.mrf.mxu0
        %v6127 = vadd.f32 %v5774, %v6126
        %v6128 = vpop.f32.mrf.mxu0
        %v6129 = vpop.f32.mrf.mxu0
        %v6130 = vadd.f32 %v5777, %v6129
        %v6131 = vpop.f32.mrf.mxu0
        %6132 = vmatprep.mubr.bf16.mxu0 %v5083
        %6133 = vmatmul.mubr.bf16.gmra.mxu0 %v5082
        %v6134 = vpop.f32.mrf.mxu0
        %v6135 = vadd.f32 %v5782, %v6134
        %v6136 = vpop.f32.mrf.mxu0
        %v6137 = vpop.f32.mrf.mxu0
        %v6138 = vadd.f32 %v5785, %v6137
        %v6139 = vpop.f32.mrf.mxu0
        %6140 = vmatprep.mubr.bf16.mxu0 %v5087
        %6141 = vmatmul.mubr.bf16.gmra.mxu0 %v5086
        %v6142 = vpop.f32.mrf.mxu0
        %v6143 = vadd.f32 %v5790, %v6142
        %v6144 = vpop.f32.mrf.mxu0
        %v6145 = vpop.f32.mrf.mxu0
        %v6146 = vadd.f32 %v5793, %v6145
        %v6147 = vpop.f32.mrf.mxu0
        %6148 = vdwg.mxu0
        %6149 = vmatprep.subr.bf16.mxu0 0
        %6150 = vmatpush1.bf16.msra.mxu0 %v5947
        %6151 = vmatprep.subr.bf16.mxu0 0
        %6152 = vmatpush1.bf16.msra.mxu0 %v5946
        %6153 = vmatprep.subr.bf16.mxu0 0
        %6154 = vmatpush1.bf16.msra.mxu0 %v5945
        %6155 = vmatprep.subr.bf16.mxu0 0
        %6156 = vmatpush1.bf16.msra.mxu0 %v5944
        %6157 = vmatprep.subr.bf16.mxu0 0
        %6158 = vmatpush1.bf16.msra.mxu0 %v5943
        %6159 = vmatprep.subr.bf16.mxu0 0
        %6160 = vmatpush1.bf16.msra.mxu0 %v5942
        %6161 = vmatprep.subr.bf16.mxu0 0
        %6162 = vmatpush1.bf16.msra.mxu0 %v5941
        %6163 = vmatprep.subr.bf16.mxu0 0
        %6164 = vmatpush1.bf16.msra.mxu0 %v5940
        %6165 = vmatprep.subr.bf16.mxu0 0
        %6166 = vmatpush2.bf16.msra.mxu0 %v5955
        %6167 = vmatprep.subr.bf16.mxu0 0
        %6168 = vmatpush2.bf16.msra.mxu0 %v5954
        %6169 = vmatprep.subr.bf16.mxu0 0
        %6170 = vmatpush2.bf16.msra.mxu0 %v5953
        %6171 = vmatprep.subr.bf16.mxu0 0
        %6172 = vmatpush2.bf16.msra.mxu0 %v5952
        %6173 = vmatprep.subr.bf16.mxu0 0
        %6174 = vmatpush2.bf16.msra.mxu0 %v5951
        %6175 = vmatprep.subr.bf16.mxu0 0
        %6176 = vmatpush2.bf16.msra.mxu0 %v5950
        %6177 = vmatprep.subr.bf16.mxu0 0
        %6178 = vmatpush2.bf16.msra.mxu0 %v5949
        %6179 = vmatprep.subr.bf16.mxu0 0
        %6180 = vmatpush2.bf16.msra.mxu0 %v5948
        %6181 = vmatprep.mubr.bf16.mxu0 %v5029
        %6182 = vmatmul.mubr.bf16.gmra.mxu0 %v5028
        %v6183 = vpop.f32.mrf.mxu0
        %v6184 = vadd.f32 %v6023, %v6183
        %v6185 = vpop.f32.mrf.mxu0
        %v6186 = vpop.f32.mrf.mxu0
        %v6187 = vadd.f32 %v6026, %v6186
        %v6188 = vpop.f32.mrf.mxu0
        %6189 = vmatprep.mubr.bf16.mxu0 %v5033
        %6190 = vmatmul.mubr.bf16.gmra.mxu0 %v5032
        %v6191 = vpop.f32.mrf.mxu0
        %v6192 = vadd.f32 %v6031, %v6191
        %v6193 = vpop.f32.mrf.mxu0
        %v6194 = vpop.f32.mrf.mxu0
        %v6195 = vadd.f32 %v6034, %v6194
        %v6196 = vpop.f32.mrf.mxu0
        %6197 = vmatprep.mubr.bf16.mxu0 %v5037
        %6198 = vmatmul.mubr.bf16.gmra.mxu0 %v5036
        %v6199 = vpop.f32.mrf.mxu0
        %v6200 = vadd.f32 %v6039, %v6199
        %v6201 = vpop.f32.mrf.mxu0
        %v6202 = vpop.f32.mrf.mxu0
        %v6203 = vadd.f32 %v6042, %v6202
        %v6204 = vpop.f32.mrf.mxu0
        %6205 = vmatprep.mubr.bf16.mxu0 %v5041
        %6206 = vmatmul.mubr.bf16.gmra.mxu0 %v5040
        %v6207 = vpop.f32.mrf.mxu0
        %v6208 = vadd.f32 %v6047, %v6207
        %v6209 = vpop.f32.mrf.mxu0
        %v6210 = vpop.f32.mrf.mxu0
        %v6211 = vadd.f32 %v6050, %v6210
        %v6212 = vpop.f32.mrf.mxu0
        %6213 = vmatprep.mubr.bf16.mxu0 %v5045
        %6214 = vmatmul.mubr.bf16.gmra.mxu0 %v5044
        %v6215 = vpop.f32.mrf.mxu0
        %v6216 = vadd.f32 %v6055, %v6215
        %v6217 = vpop.f32.mrf.mxu0
        %v6218 = vpop.f32.mrf.mxu0
        %v6219 = vadd.f32 %v6058, %v6218
        %v6220 = vpop.f32.mrf.mxu0
        %6221 = vmatprep.mubr.bf16.mxu0 %v5049
        %6222 = vmatmul.mubr.bf16.gmra.mxu0 %v5048
        %v6223 = vpop.f32.mrf.mxu0
        %v6224 = vadd.f32 %v6063, %v6223
        %v6225 = vpop.f32.mrf.mxu0
        %v6226 = vpop.f32.mrf.mxu0
        %v6227 = vadd.f32 %v6066, %v6226
        %v6228 = vpop.f32.mrf.mxu0
        %6229 = vmatprep.mubr.bf16.mxu0 %v5053
        %6230 = vmatmul.mubr.bf16.gmra.mxu0 %v5052
        %v6231 = vpop.f32.mrf.mxu0
        %v6232 = vadd.f32 %v6071, %v6231
        %v6233 = vpop.f32.mrf.mxu0
        %v6234 = vpop.f32.mrf.mxu0
        %v6235 = vadd.f32 %v6074, %v6234
        %v6236 = vpop.f32.mrf.mxu0
        %6237 = vmatprep.mubr.bf16.mxu0 %v5057
        %6238 = vmatmul.mubr.bf16.gmra.mxu0 %v5056
        %v6239 = vpop.f32.mrf.mxu0
        %v6240 = vadd.f32 %v6079, %v6239
        %v6241 = vpop.f32.mrf.mxu0
        %v6242 = vpop.f32.mrf.mxu0
        %v6243 = vadd.f32 %v6082, %v6242
        %v6244 = vpop.f32.mrf.mxu0
        %6245 = vmatprep.mubr.bf16.mxu0 %v5061
        %6246 = vmatmul.mubr.bf16.gmra.mxu0 %v5060
        %v6247 = vpop.f32.mrf.mxu0
        %v6248 = vadd.f32 %v6087, %v6247
        %v6249 = vpop.f32.mrf.mxu0
        %v6250 = vpop.f32.mrf.mxu0
        %v6251 = vadd.f32 %v6090, %v6250
        %v6252 = vpop.f32.mrf.mxu0
        %6253 = vmatprep.mubr.bf16.mxu0 %v5065
        %6254 = vmatmul.mubr.bf16.gmra.mxu0 %v5064
        %v6255 = vpop.f32.mrf.mxu0
        %v6256 = vadd.f32 %v6095, %v6255
        %v6257 = vpop.f32.mrf.mxu0
        %v6258 = vpop.f32.mrf.mxu0
        %v6259 = vadd.f32 %v6098, %v6258
        %v6260 = vpop.f32.mrf.mxu0
        %6261 = vmatprep.mubr.bf16.mxu0 %v5069
        %6262 = vmatmul.mubr.bf16.gmra.mxu0 %v5068
        %v6263 = vpop.f32.mrf.mxu0
        %v6264 = vadd.f32 %v6103, %v6263
        %v6265 = vpop.f32.mrf.mxu0
        %v6266 = vpop.f32.mrf.mxu0
        %v6267 = vadd.f32 %v6106, %v6266
        %v6268 = vpop.f32.mrf.mxu0
        %6269 = vmatprep.mubr.bf16.mxu0 %v5073
        %6270 = vmatmul.mubr.bf16.gmra.mxu0 %v5072
        %v6271 = vpop.f32.mrf.mxu0
        %v6272 = vadd.f32 %v6111, %v6271
        %v6273 = vpop.f32.mrf.mxu0
        %v6274 = vpop.f32.mrf.mxu0
        %v6275 = vadd.f32 %v6114, %v6274
        %v6276 = vpop.f32.mrf.mxu0
        %6277 = vmatprep.mubr.bf16.mxu0 %v5077
        %6278 = vmatmul.mubr.bf16.gmra.mxu0 %v5076
        %v6279 = vpop.f32.mrf.mxu0
        %v6280 = vadd.f32 %v6119, %v6279
        %v6281 = vpop.f32.mrf.mxu0
        %v6282 = vpop.f32.mrf.mxu0
        %v6283 = vadd.f32 %v6122, %v6282
        %v6284 = vpop.f32.mrf.mxu0
        %6285 = vmatprep.mubr.bf16.mxu0 %v5081
        %6286 = vmatmul.mubr.bf16.gmra.mxu0 %v5080
        %v6287 = vpop.f32.mrf.mxu0
        %v6288 = vadd.f32 %v6127, %v6287
        %v6289 = vpop.f32.mrf.mxu0
        %v6290 = vpop.f32.mrf.mxu0
        %v6291 = vadd.f32 %v6130, %v6290
        %v6292 = vpop.f32.mrf.mxu0
        %6293 = vmatprep.mubr.bf16.mxu0 %v5085
        %6294 = vmatmul.mubr.bf16.gmra.mxu0 %v5084
        %v6295 = vpop.f32.mrf.mxu0
        %v6296 = vadd.f32 %v6135, %v6295
        %v6297 = vpop.f32.mrf.mxu0
        %v6298 = vpop.f32.mrf.mxu0
        %v6299 = vadd.f32 %v6138, %v6298
        %v6300 = vpop.f32.mrf.mxu0
        %6301 = vmatprep.mubr.bf16.mxu0 %v5089
        %6302 = vmatmul.mubr.bf16.gmra.mxu0 %v5088
        %v6303 = vpop.f32.mrf.mxu0
        %v6304 = vadd.f32 %v6143, %v6303
        %v6305 = vpop.f32.mrf.mxu0
        %v6306 = vpop.f32.mrf.mxu0
        %v6307 = vadd.f32 %v6146, %v6306
        %v6308 = vpop.f32.mrf.mxu0
        %6309 = vdwg.mxu0
        %v6310 = vadd.f32 %v6184, %v353
        %v6311 = vadd.f32 %v6187, %v353
        %v6312 = vadd.f32 %v6192, %v353
        %v6313 = vadd.f32 %v6195, %v353
        %v6314 = vadd.f32 %v6200, %v353
        %v6315 = vadd.f32 %v6203, %v353
        %v6316 = vadd.f32 %v6208, %v353
        %v6317 = vadd.f32 %v6211, %v353
        %v6318 = vadd.f32 %v6216, %v353
        %v6319 = vadd.f32 %v6219, %v353
        %v6320 = vadd.f32 %v6224, %v353
        %v6321 = vadd.f32 %v6227, %v353
        %v6322 = vadd.f32 %v6232, %v353
        %v6323 = vadd.f32 %v6235, %v353
        %v6324 = vadd.f32 %v6240, %v353
        %v6325 = vadd.f32 %v6243, %v353
        %v6326 = vadd.f32 %v6248, %v353
        %v6327 = vadd.f32 %v6251, %v353
        %v6328 = vadd.f32 %v6256, %v353
        %v6329 = vadd.f32 %v6259, %v353
        %v6330 = vadd.f32 %v6264, %v353
        %v6331 = vadd.f32 %v6267, %v353
        %v6332 = vadd.f32 %v6272, %v353
        %v6333 = vadd.f32 %v6275, %v353
        %v6334 = vadd.f32 %v6280, %v353
        %v6335 = vadd.f32 %v6283, %v353
        %v6336 = vadd.f32 %v6288, %v353
        %v6337 = vadd.f32 %v6291, %v353
        %v6338 = vadd.f32 %v6296, %v353
        %v6339 = vadd.f32 %v6299, %v353
        %v6340 = vadd.f32 %v6304, %v353
        %v6341 = vadd.f32 %v6307, %v353
        %v6342 = vlaneseq
        %v6343 = vand.u32 %v6342, 127
        %vm6344 = vcmp.lt.s32.totalorder %v6343, 4
        %v6345 = vxor.u32 %v6310, 2147483648
        %v6346 = vxor.u32 %v6311, 2147483648
        %v6347 = vxor.u32 %v6312, 2147483648
        %v6348 = vxor.u32 %v6313, 2147483648
        %v6349 = vxor.u32 %v6314, 2147483648
        %v6350 = vxor.u32 %v6315, 2147483648
        %v6351 = vxor.u32 %v6316, 2147483648
        %v6352 = vxor.u32 %v6317, 2147483648
        %v6353 = vxor.u32 %v6318, 2147483648
        %v6354 = vxor.u32 %v6319, 2147483648
        %v6355 = vxor.u32 %v6320, 2147483648
        %v6356 = vxor.u32 %v6321, 2147483648
        %v6357 = vxor.u32 %v6322, 2147483648
        %v6358 = vxor.u32 %v6323, 2147483648
        %v6359 = vxor.u32 %v6324, 2147483648
        %v6360 = vxor.u32 %v6325, 2147483648
        %v6361 = vxor.u32 %v6326, 2147483648
        %v6362 = vxor.u32 %v6327, 2147483648
        %v6363 = vxor.u32 %v6328, 2147483648
        %v6364 = vxor.u32 %v6329, 2147483648
        %v6365 = vxor.u32 %v6330, 2147483648
        %v6366 = vxor.u32 %v6331, 2147483648
        %v6367 = vxor.u32 %v6332, 2147483648
        %v6368 = vxor.u32 %v6333, 2147483648
        %v6369 = vxor.u32 %v6334, 2147483648
        %v6370 = vxor.u32 %v6335, 2147483648
        %v6371 = vxor.u32 %v6336, 2147483648
        %v6372 = vxor.u32 %v6337, 2147483648
        %v6373 = vxor.u32 %v6338, 2147483648
        %v6374 = vxor.u32 %v6339, 2147483648
        %v6375 = vxor.u32 %v6340, 2147483648
        %v6376 = vxor.u32 %v6341, 2147483648
        %v6377 = vmul.f32 %v6345, 1.442695
        %v6378 = vpow.pop %v6377
        %v6379 = vmul.f32 %v6346, 1.442695
        %v6380 = vpow.pop %v6379
        %v6381 = vmul.f32 %v6347, 1.442695
        %v6382 = vpow.pop %v6381
        %v6383 = vmul.f32 %v6348, 1.442695
        %v6384 = vpow.pop %v6383
        %v6385 = vmul.f32 %v6349, 1.442695
        %v6386 = vpow.pop %v6385
        %v6387 = vmul.f32 %v6350, 1.442695
        %v6388 = vpow.pop %v6387
        %v6389 = vmul.f32 %v6351, 1.442695
        %v6390 = vpow.pop %v6389
        %v6391 = vmul.f32 %v6352, 1.442695
        %v6392 = vpow.pop %v6391
        %v6393 = vmul.f32 %v6353, 1.442695
        %v6394 = vpow.pop %v6393
        %v6395 = vmul.f32 %v6354, 1.442695
        %v6396 = vpow.pop %v6395
        %v6397 = vmul.f32 %v6355, 1.442695
        %v6398 = vpow.pop %v6397
        %v6399 = vmul.f32 %v6356, 1.442695
        %v6400 = vpow.pop %v6399
        %v6401 = vmul.f32 %v6357, 1.442695
        %v6402 = vpow.pop %v6401
        %v6403 = vmul.f32 %v6358, 1.442695
        %v6404 = vpow.pop %v6403
        %v6405 = vmul.f32 %v6359, 1.442695
        %v6406 = vpow.pop %v6405
        %v6407 = vmul.f32 %v6360, 1.442695
        %v6408 = vpow.pop %v6407
        %v6409 = vmul.f32 %v6361, 1.442695
        %v6410 = vpow.pop %v6409
        %v6411 = vmul.f32 %v6362, 1.442695
        %v6412 = vpow.pop %v6411
        %v6413 = vmul.f32 %v6363, 1.442695
        %v6414 = vpow.pop %v6413
        %v6415 = vmul.f32 %v6364, 1.442695
        %v6416 = vpow.pop %v6415
        %v6417 = vmul.f32 %v6365, 1.442695
        %v6418 = vpow.pop %v6417
        %v6419 = vmul.f32 %v6366, 1.442695
        %v6420 = vpow.pop %v6419
        %v6421 = vmul.f32 %v6367, 1.442695
        %v6422 = vpow.pop %v6421
        %v6423 = vmul.f32 %v6368, 1.442695
        %v6424 = vpow.pop %v6423
        %v6425 = vmul.f32 %v6369, 1.442695
        %v6426 = vpow.pop %v6425
        %v6427 = vmul.f32 %v6370, 1.442695
        %v6428 = vpow.pop %v6427
        %v6429 = vmul.f32 %v6371, 1.442695
        %v6430 = vpow.pop %v6429
        %v6431 = vmul.f32 %v6372, 1.442695
        %v6432 = vpow.pop %v6431
        %v6433 = vmul.f32 %v6373, 1.442695
        %v6434 = vpow.pop %v6433
        %v6435 = vmul.f32 %v6374, 1.442695
        %v6436 = vpow.pop %v6435
        %v6437 = vmul.f32 %v6375, 1.442695
        %v6438 = vpow.pop %v6437
        %v6439 = vmul.f32 %v6376, 1.442695
        %v6440 = vpow.pop %v6439
        %v6441 = vadd.f32 %v6378, 1.0
        %v6442 = vadd.f32 %v6380, 1.0
        %v6443 = vadd.f32 %v6382, 1.0
        %v6444 = vadd.f32 %v6384, 1.0
        %v6445 = vadd.f32 %v6386, 1.0
        %v6446 = vadd.f32 %v6388, 1.0
        %v6447 = vadd.f32 %v6390, 1.0
        %v6448 = vadd.f32 %v6392, 1.0
        %v6449 = vadd.f32 %v6394, 1.0
        %v6450 = vadd.f32 %v6396, 1.0
        %v6451 = vadd.f32 %v6398, 1.0
        %v6452 = vadd.f32 %v6400, 1.0
        %v6453 = vadd.f32 %v6402, 1.0
        %v6454 = vadd.f32 %v6404, 1.0
        %v6455 = vadd.f32 %v6406, 1.0
        %v6456 = vadd.f32 %v6408, 1.0
        %v6457 = vadd.f32 %v6410, 1.0
        %v6458 = vadd.f32 %v6412, 1.0
        %v6459 = vadd.f32 %v6414, 1.0
        %v6460 = vadd.f32 %v6416, 1.0
        %v6461 = vadd.f32 %v6418, 1.0
        %v6462 = vadd.f32 %v6420, 1.0
        %v6463 = vadd.f32 %v6422, 1.0
        %v6464 = vadd.f32 %v6424, 1.0
        %v6465 = vadd.f32 %v6426, 1.0
        %v6466 = vadd.f32 %v6428, 1.0
        %v6467 = vadd.f32 %v6430, 1.0
        %v6468 = vadd.f32 %v6432, 1.0
        %v6469 = vadd.f32 %v6434, 1.0
        %v6470 = vadd.f32 %v6436, 1.0
        %v6471 = vadd.f32 %v6438, 1.0
        %v6472 = vadd.f32 %v6440, 1.0
        %v6473 = vrcp.pop %v6441
        %v6474 = vmul.f32 1.0, %v6473
        %v6475 = vrcp.pop %v6442
        %v6476 = vmul.f32 1.0, %v6475
        %v6477 = vrcp.pop %v6443
        %v6478 = vmul.f32 1.0, %v6477
        %v6479 = vrcp.pop %v6444
        %v6480 = vmul.f32 1.0, %v6479
        %v6481 = vrcp.pop %v6445
        %v6482 = vmul.f32 1.0, %v6481
        %v6483 = vrcp.pop %v6446
        %v6484 = vmul.f32 1.0, %v6483
        %v6485 = vrcp.pop %v6447
        %v6486 = vmul.f32 1.0, %v6485
        %v6487 = vrcp.pop %v6448
        %v6488 = vmul.f32 1.0, %v6487
        %v6489 = vrcp.pop %v6449
        %v6490 = vmul.f32 1.0, %v6489
        %v6491 = vrcp.pop %v6450
        %v6492 = vmul.f32 1.0, %v6491
        %v6493 = vrcp.pop %v6451
        %v6494 = vmul.f32 1.0, %v6493
        %v6495 = vrcp.pop %v6452
        %v6496 = vmul.f32 1.0, %v6495
        %v6497 = vrcp.pop %v6453
        %v6498 = vmul.f32 1.0, %v6497
        %v6499 = vrcp.pop %v6454
        %v6500 = vmul.f32 1.0, %v6499
        %v6501 = vrcp.pop %v6455
        %v6502 = vmul.f32 1.0, %v6501
        %v6503 = vrcp.pop %v6456
        %v6504 = vmul.f32 1.0, %v6503
        %v6505 = vrcp.pop %v6457
        %v6506 = vmul.f32 1.0, %v6505
        %v6507 = vrcp.pop %v6458
        %v6508 = vmul.f32 1.0, %v6507
        %v6509 = vrcp.pop %v6459
        %v6510 = vmul.f32 1.0, %v6509
        %v6511 = vrcp.pop %v6460
        %v6512 = vmul.f32 1.0, %v6511
        %v6513 = vrcp.pop %v6461
        %v6514 = vmul.f32 1.0, %v6513
        %v6515 = vrcp.pop %v6462
        %v6516 = vmul.f32 1.0, %v6515
        %v6517 = vrcp.pop %v6463
        %v6518 = vmul.f32 1.0, %v6517
        %v6519 = vrcp.pop %v6464
        %v6520 = vmul.f32 1.0, %v6519
        %v6521 = vrcp.pop %v6465
        %v6522 = vmul.f32 1.0, %v6521
        %v6523 = vrcp.pop %v6466
        %v6524 = vmul.f32 1.0, %v6523
        %v6525 = vrcp.pop %v6467
        %v6526 = vmul.f32 1.0, %v6525
        %v6527 = vrcp.pop %v6468
        %v6528 = vmul.f32 1.0, %v6527
        %v6529 = vrcp.pop %v6469
        %v6530 = vmul.f32 1.0, %v6529
        %v6531 = vrcp.pop %v6470
        %v6532 = vmul.f32 1.0, %v6531
        %v6533 = vrcp.pop %v6471
        %v6534 = vmul.f32 1.0, %v6533
        %v6535 = vrcp.pop %v6472
        %v6536 = vmul.f32 1.0, %v6535
        %v6537 = vsel %vm6344, %v6474, %v6310
        %v6538 = vsel %vm6344, %v6476, %v6311
        %v6539 = vsel %vm6344, %v6478, %v6312
        %v6540 = vsel %vm6344, %v6480, %v6313
        %v6541 = vsel %vm6344, %v6482, %v6314
        %v6542 = vsel %vm6344, %v6484, %v6315
        %v6543 = vsel %vm6344, %v6486, %v6316
        %v6544 = vsel %vm6344, %v6488, %v6317
        %v6545 = vsel %vm6344, %v6490, %v6318
        %v6546 = vsel %vm6344, %v6492, %v6319
        %v6547 = vsel %vm6344, %v6494, %v6320
        %v6548 = vsel %vm6344, %v6496, %v6321
        %v6549 = vsel %vm6344, %v6498, %v6322
        %v6550 = vsel %vm6344, %v6500, %v6323
        %v6551 = vsel %vm6344, %v6502, %v6324
        %v6552 = vsel %vm6344, %v6504, %v6325
        %v6553 = vsel %vm6344, %v6506, %v6326
        %v6554 = vsel %vm6344, %v6508, %v6327
        %v6555 = vsel %vm6344, %v6510, %v6328
        %v6556 = vsel %vm6344, %v6512, %v6329
        %v6557 = vsel %vm6344, %v6514, %v6330
        %v6558 = vsel %vm6344, %v6516, %v6331
        %v6559 = vsel %vm6344, %v6518, %v6332
        %v6560 = vsel %vm6344, %v6520, %v6333
        %v6561 = vsel %vm6344, %v6522, %v6334
        %v6562 = vsel %vm6344, %v6524, %v6335
        %v6563 = vsel %vm6344, %v6526, %v6336
        %v6564 = vsel %vm6344, %v6528, %v6337
        %v6565 = vsel %vm6344, %v6530, %v6338
        %v6566 = vsel %vm6344, %v6532, %v6339
        %v6567 = vsel %vm6344, %v6534, %v6340
        %v6568 = vsel %vm6344, %v6536, %v6341
        %6569 = vst [vmem:[%s295] sm:$0xff] %v6537
        %6570 = vst [vmem:[%s295 + $0x8] sm:$0xff] %v6538
        %6571 = vst [vmem:[%s295 + $0x10] sm:$0xff] %v6539
        %6572 = vst [vmem:[%s295 + $0x18] sm:$0xff] %v6540
        %6573 = vst [vmem:[%s295 + $0x20] sm:$0xff] %v6541
        %6574 = vst [vmem:[%s295 + $0x28] sm:$0xff] %v6542
        %6575 = vst [vmem:[%s295 + $0x30] sm:$0xff] %v6543
        %6576 = vst [vmem:[%s295 + $0x38] sm:$0xff] %v6544
        %6577 = vst [vmem:[%s295 + $0x40] sm:$0xff] %v6545
        %6578 = vst [vmem:[%s295 + $0x48] sm:$0xff] %v6546
        %6579 = vst [vmem:[%s295 + $0x50] sm:$0xff] %v6547
        %6580 = vst [vmem:[%s295 + $0x58] sm:$0xff] %v6548
        %6581 = vst [vmem:[%s295 + $0x60] sm:$0xff] %v6549
        %6582 = vst [vmem:[%s295 + $0x68] sm:$0xff] %v6550
        %6583 = vst [vmem:[%s295 + $0x70] sm:$0xff] %v6551
        %6584 = vst [vmem:[%s295 + $0x78] sm:$0xff] %v6552
        %6585 = vst [vmem:[%s295 + $0x80] sm:$0xff] %v6553
        %6586 = vst [vmem:[%s295 + $0x88] sm:$0xff] %v6554
        %6587 = vst [vmem:[%s295 + $0x90] sm:$0xff] %v6555
        %6588 = vst [vmem:[%s295 + $0x98] sm:$0xff] %v6556
        %6589 = vst [vmem:[%s295 + $0xa0] sm:$0xff] %v6557
        %6590 = vst [vmem:[%s295 + $0xa8] sm:$0xff] %v6558
        %6591 = vst [vmem:[%s295 + $0xb0] sm:$0xff] %v6559
        %6592 = vst [vmem:[%s295 + $0xb8] sm:$0xff] %v6560
        %6593 = vst [vmem:[%s295 + $0xc0] sm:$0xff] %v6561
        %6594 = vst [vmem:[%s295 + $0xc8] sm:$0xff] %v6562
        %6595 = vst [vmem:[%s295 + $0xd0] sm:$0xff] %v6563
        %6596 = vst [vmem:[%s295 + $0xd8] sm:$0xff] %v6564
        %6597 = vst [vmem:[%s295 + $0xe0] sm:$0xff] %v6565
        %6598 = vst [vmem:[%s295 + $0xe8] sm:$0xff] %v6566
        %6599 = vst [vmem:[%s295 + $0xf0] sm:$0xff] %v6567
        %6600 = vst [vmem:[%s295 + $0xf8] sm:$0xff] %v6568
        %s6601 = smul.u32 32, %s19
        %p6602 = scmp.lt.s32.totalorder %s6601, 63
        %s6603 = scalar_select %p6602, %s6601, 63
        %s6604 = smul.addr %s6603, 8
        %s6605 = scalar_lea.vmem %s6, %s6604
        // Predicated region
        $region57: #{ppo_rocket_agent_forward.1} parent=43 // pred_check
          %p6606 = pneg %p168
        $region58: #{ppo_rocket_agent_forward.1} parent=43 // pred_check_branch
          %6608 = sbr.rel (%p6606) target = $region60
        $region59: #{ppo_rocket_agent_forward.1} parent=43 // pred_region
          %s6609 = smul.u32 32, %s19
        $region60: #{ppo_rocket_agent_forward.1} parent=43 // pred_fallthru
          _
      $region44: #{ppo_rocket_agent_forward.1} parent=5 // pred_fallthru
        _
      %p6610 = scmp.le.s32.totalorder 2, %s14
      // Predicated region
      $region61: #{ppo_rocket_agent_forward.1} parent=5 // pred_check
        %p6611 = pneg %p6610
      $region62: #{ppo_rocket_agent_forward.1} parent=5 // pred_check_branch
        %6613 = sbr.rel (%p6611) target = $region64
      $region63: #{ppo_rocket_agent_forward.1} parent=5 // pred_region
        %s6614 = ssub.s32 %s14, 2
        // Predicated region
        $region65: #{ppo_rocket_agent_forward.1} parent=63 // pred_check
          %p6615 = pneg %p174
        $region66: #{ppo_rocket_agent_forward.1} parent=63 // pred_check_branch
          %6617 = sbr.rel (%p6615) target = $region68
        $region67: #{ppo_rocket_agent_forward.1} parent=63 // pred_region
          %s6618 = smul.u32 32, %s20
          %p6619 = scmp.lt.s32.totalorder %s6618, 63
          %s6620 = scalar_select %p6619, %s6618, 63
          %s6621 = smul.addr %s6620, 8
          %s6622 = scalar_lea.vmem %s6, %s6621
        $region68: #{ppo_rocket_agent_forward.1} parent=63 // pred_fallthru
          _
      $region64: #{ppo_rocket_agent_forward.1} parent=5 // pred_fallthru
        _
    $region6: #{ppo_rocket_agent_forward.1} parent=1 // loop_footer
      %s18 = sadd.s32 1, %s14
    $region7: #{ppo_rocket_agent_forward.1} parent=1 // loop_footer_branch
      %13 = sbr.rel target = $region3
    $region8: #{ppo_rocket_agent_forward.1} parent=1 // loop_exit
      _
    %6623 = vsyncpa [#allocation3], 1
    %s6624 = scalar_lea.sflag [#allocation3], 1
    %6625 = vsyncpa %s6624, 1
    %6626 = vsyncpa [#allocation5], 1

</llo_original>
